<compile_context>
chip_gen: v6e
topology: v6e:2x2x1
jax: 0.10.0
libtpu: 0.0.40
codegen_flags: <defaults>
</compile_context>

<pallas_src>
import functools

import jax
import jax.numpy as jnp
from jax.experimental import pallas as pl
from jax.experimental.pallas import tpu as pltpu


# ----------------------------------------------------------------------------
# Fused Pallas kernel
# ----------------------------------------------------------------------------

def _build_sentiment_kernel(T, B, H, n_layers, num_dirs, fuse_dirs):
    """Build the fused forward kernel (shapes static, time loop unrolled)."""
    D = num_dirs
    GW = D * H                      # gate width in the fused (gate-major) layout

    def kernel(*refs):
        # ---------------- unpack refs: inputs..., output ----------------
        idx = 0
        ids_ref = refs[idx]; idx += 1
        emb_ref = refs[idx]; idx += 1
        layers = []
        for _L in range(n_layers):
            if fuse_dirs:
                wih = [refs[idx + d] for d in range(D)]
                idx += D
                layers.append((wih, refs[idx], refs[idx + 1]))     # whh_bd, bias
                idx += 2
            else:
                dirs = []
                for _d in range(D):
                    dirs.append((refs[idx], refs[idx + 1], refs[idx + 2]))
                    idx += 3
                layers.append(dirs)
        wfc_ref, bfc_ref = refs[idx], refs[idx + 1]
        out_ref = refs[idx + 2]

        # ---------- embedding lookup: gather-free one-hot MXU matmul ----------
        V = emb_ref.shape[0]
        ids = ids_ref[...]                                          # (T*B, 1) i32
        vocab_iota = jax.lax.broadcasted_iota(jnp.int32, (T * B, V), 1)
        onehot = (vocab_iota == ids).astype(jnp.float32)            # (T*B, V)
        x_seq = jnp.dot(onehot, emb_ref[...],
                        preferred_element_type=jnp.float32)         # (T*B, E)
        # dropout(embedded): eval mode -> identity.

        if fuse_dirs:
            # ---- fused fwd/bwd path (v6e / v7x): block-diag N=256 matmul ----
            lane4 = jax.lax.broadcasted_iota(jnp.int32, (B, 4 * GW), 1)
            g_cols = (lane4 >= 2 * GW) & (lane4 < 3 * GW)
            if D > 1:
                fwd_lanes = jax.lax.broadcasted_iota(jnp.int32, (B, GW), 1) < H

            final_h = None
            for L in range(n_layers):
                wih_refs, whh_ref, bias_ref = layers[L]
                # Hoisted input projection for the whole sequence, per direction
                # (columns already placed at the fused gate positions).
                xp = [jnp.dot(x_seq, wih_refs[d][...],
                              preferred_element_type=jnp.float32)
                      for d in range(D)]                            # (T*B, 4*GW)
                xp[0] = xp[0] + bias_ref[...]
                whh = whh_ref[...]                                  # (GW, 4*GW)

                h_cat = jnp.zeros((B, GW), jnp.float32)             # [h_f | h_b]
                c_cat = jnp.zeros((B, GW), jnp.float32)
                h_steps = [None] * T
                for t in range(T):
                    pre = jnp.dot(h_cat, whh,
                                  preferred_element_type=jnp.float32)
                    for d in range(D):
                        tt = t if d == 0 else T - 1 - t             # bwd reversed
                        pre = pre + xp[d][tt * B:(tt + 1) * B, :]
                    # g-gate x2 folded into weights; one sigmoid pass for all gates
                    a = jax.nn.sigmoid(pre)
                    a = jnp.where(g_cols, 2.0 * a - 1.0, a)         # tanh(g)
                    i_g = a[:, 0:GW]
                    f_g = a[:, GW:2 * GW]
                    g_g = a[:, 2 * GW:3 * GW]
                    o_g = a[:, 3 * GW:4 * GW]
                    c_cat = f_g * c_cat + i_g * g_g
                    h_cat = o_g * jnp.tanh(c_cat)                   # one EUP push
                    h_steps[t] = h_cat
                # inter-layer dropout: eval mode -> identity.
                if L + 1 < n_layers:
                    rows = []
                    for s in range(T):
                        if D == 1:
                            rows.append(h_steps[s])
                        else:
                            # time-aligned [h_fwd(s) | h_bwd(s)]: fwd lanes from
                            # step s, bwd lanes from step T-1-s.
                            rows.append(jnp.where(fwd_lanes, h_steps[s],
                                                  h_steps[T - 1 - s]))
                    x_seq = jnp.concatenate(rows, axis=0)           # (T*B, GW)
                else:
                    # last step already holds [h_fwd(T-1) | h_bwd(0)] = torch's
                    # cat((hidden[-2], hidden[-1]), dim=1)
                    final_h = h_steps[T - 1]

            out_ref[...] = (jnp.dot(final_h, wfc_ref[...],
                                    preferred_element_type=jnp.float32)
                            + bfc_ref[...])
        else:
            # ---- split path (v5e): independent fwd/bwd N=128 chains ----
            lane1 = jax.lax.broadcasted_iota(jnp.int32, (B, 4 * H), 1)
            g_cols = (lane1 >= 2 * H) & (lane1 < 3 * H)

            h = [jnp.zeros((B, H), jnp.float32) for _ in range(D)]
            for L in range(n_layers):
                xp, whh = [], []
                for d in range(D):
                    wih_ref, whh_ref, bias_ref = layers[L][d]
                    xp.append(jnp.dot(x_seq, wih_ref[...],
                                      preferred_element_type=jnp.float32)
                              + bias_ref[...])                      # (T*B, 4H)
                    whh.append(whh_ref[...])                        # (H, 4H)

                h = [jnp.zeros((B, H), jnp.float32) for _ in range(D)]
                c = [jnp.zeros((B, H), jnp.float32) for _ in range(D)]
                h_seq = [[None] * T for _ in range(D)]
                for t in range(T):
                    for d in range(D):                              # interleaved
                        tt = t if d == 0 else T - 1 - t
                        pre = xp[d][tt * B:(tt + 1) * B, :] + jnp.dot(
                            h[d], whh[d], preferred_element_type=jnp.float32)
                        a = jax.nn.sigmoid(pre)                     # x2 folded in
                        a = jnp.where(g_cols, 2.0 * a - 1.0, a)
                        i_g = a[:, 0:H]
                        f_g = a[:, H:2 * H]
                        g_g = a[:, 2 * H:3 * H]
                        o_g = a[:, 3 * H:4 * H]
                        c[d] = f_g * c[d] + i_g * g_g
                        h[d] = o_g * jnp.tanh(c[d])
                        h_seq[d][tt] = h[d]
                # inter-layer dropout: eval mode -> identity.
                if L + 1 < n_layers:
                    rows = []
                    for s in range(T):
                        if D == 1:
                            rows.append(h_seq[0][s])
                        else:
                            rows.append(jnp.concatenate(
                                [h_seq[d][s] for d in range(D)], axis=1))
                    x_seq = jnp.concatenate(rows, axis=0)           # (T*B, D*H)

            # FC head with split weights (avoids a lane concat of final states).
            wfc = wfc_ref[...]                                      # (D*H, O)
            out = bfc_ref[...]
            for d in range(D):
                out = out + jnp.dot(h[d], wfc[d * H:(d + 1) * H],
                                    preferred_element_type=jnp.float32)
            out_ref[...] = out

    return kernel


def sentiment_forward(params, input_ids, attention_mask, *,
                      n_layers, bidirectional, fuse_dirs):
    """Fused Pallas forward. input_ids: (B, T) int32 -> logits (B, O)."""
    del attention_mask                       # unused, matching the torch forward
    B, T = input_ids.shape
    num_dirs = 2 if bidirectional else 1
    H = params["fc_w_t"].shape[0] // num_dirs
    O = params["fc_w_t"].shape[1]

    # Time-major flattened ids: row index = t*B + b.
    ids_tm = jnp.transpose(input_ids).reshape(T * B, 1).astype(jnp.int32)

    inputs = [ids_tm, params["embedding"]]
    for L in range(n_layers):
        lk = params["lstm_kernel"][L]
        if fuse_dirs:
            inputs += list(lk["wih_pad"]) + [lk["whh_bd"], lk["bias"]]
        else:
            for d in range(num_dirs):
                inputs += [lk[d]["w_ih_t"], lk[d]["w_hh_t"], lk[d]["bias"]]
    inputs += [params["fc_w_t"], params["fc_b"]]

    kernel = _build_sentiment_kernel(T, B, H, n_layers, num_dirs, fuse_dirs)

    return pl.pallas_call(
        kernel,
        out_shape=jax.ShapeDtypeStruct((B, O), jnp.float32),
        in_specs=[pl.BlockSpec(memory_space=pltpu.MemorySpace.VMEM)] * len(inputs),
        out_specs=pl.BlockSpec(memory_space=pltpu.MemorySpace.VMEM),
    )(*inputs)


# ----------------------------------------------------------------------------
# Parameter construction (kernel-form weights built ONCE here, per review)
# ----------------------------------------------------------------------------

def init_params(key, vocab_size, embed_dim, hidden_dim, output_dim,
                n_layers, bidirectional, fuse_dirs):
    D = 2 if bidirectional else 1
    H = hidden_dim
    GW = D * H
    scale = float(hidden_dim) ** -0.5

    def uni(k, shape):
        return jax.random.uniform(k, shape, jnp.float32, -scale, scale)

    keys = list(jax.random.split(key, 1 + n_layers * D * 4 + 2))
    ki = iter(keys)

    params = {
        "embedding": jax.random.normal(next(ki), (vocab_size, embed_dim),
                                       jnp.float32) * 0.1,
        "lstm_ref": [],       # standard layout, for the pure-JAX reference
        "lstm_kernel": [],    # kernel layout (g-gate x2 folded, optional fusion)
    }

    for layer in range(n_layers):
        in_dim = embed_dim if layer == 0 else H * D
        ref_dirs, raw_dirs = [], []
        for _d in range(D):
            w_ih = uni(next(ki), (4 * H, in_dim))      # torch layout (i,f,g,o)
            w_hh = uni(next(ki), (4 * H, H))
            b_ih = uni(next(ki), (4 * H,))
            b_hh = uni(next(ki), (4 * H,))
            ref_dirs.append({"w_ih_t": w_ih.T, "w_hh_t": w_hh.T,
                             "bias": (b_ih + b_hh)[None, :]})
            raw_dirs.append((w_ih.T, w_hh.T, (b_ih + b_hh)[None, :]))
        params["lstm_ref"].append(ref_dirs)

        if fuse_dirs:
            # Gate-major fused layout: column block [g*GW + d*H : g*GW + (d+1)*H]
            # holds gate g of direction d.  g-gate (g==2) columns pre-scaled x2.
            wih_pad = []
            whh_bd = jnp.zeros((GW, 4 * GW), jnp.float32)
            bias_f = jnp.zeros((1, 4 * GW), jnp.float32)
            for d in range(D):
                wih_t, whh_t, bias = raw_dirs[d]
                pad = jnp.zeros((in_dim, 4 * GW), jnp.float32)
                for g in range(4):
                    s = 2.0 if g == 2 else 1.0
                    col = g * GW + d * H
                    pad = pad.at[:, col:col + H].set(
                        s * wih_t[:, g * H:(g + 1) * H])
                    whh_bd = whh_bd.at[d * H:(d + 1) * H, col:col + H].set(
                        s * whh_t[:, g * H:(g + 1) * H])
                    bias_f = bias_f.at[:, col:col + H].set(
                        s * bias[:, g * H:(g + 1) * H])
                wih_pad.append(pad)
            params["lstm_kernel"].append(
                {"wih_pad": wih_pad, "whh_bd": whh_bd, "bias": bias_f})
        else:
            gsc = jnp.ones((1, 4 * H), jnp.float32).at[:, 2 * H:3 * H].set(2.0)
            dirs = []
            for d in range(D):
                wih_t, whh_t, bias = raw_dirs[d]
                dirs.append({"w_ih_t": wih_t * gsc, "w_hh_t": whh_t * gsc,
                             "bias": bias * gsc})
            params["lstm_kernel"].append(dirs)

    fc_in = H * D
    params["fc_w_t"] = uni(next(ki), (output_dim, fc_in)).T    # (fc_in, O)
    params["fc_b"] = uni(next(ki), (output_dim,))[None, :]     # (1, O)
    return params


def _mxu_is_256_wide():
    """Block-diag fwd/bwd fusion on 256-wide MXUs (v6e/v7x); split on v5e/older."""
    try:
        kind = jax.devices()[0].device_kind.lower()
    except Exception:
        return True
    return not any(tag in kind for tag in ("v2", "v3", "v4", "v5"))


# ----------------------------------------------------------------------------
# Pure-JAX reference (correctness check)
# ----------------------------------------------------------------------------

def _ref_lstm_dir(x_seq, w_ih_t, w_hh_t, bias):
    T, B, _ = x_seq.shape
    H = w_hh_t.shape[0]

    def step(carry, x_t):
        h, c = carry
        gates = x_t @ w_ih_t + h @ w_hh_t + bias
        i = jax.nn.sigmoid(gates[:, 0:H])
        f = jax.nn.sigmoid(gates[:, H:2 * H])
        g = jnp.tanh(gates[:, 2 * H:3 * H])
        o = jax.nn.sigmoid(gates[:, 3 * H:4 * H])
        c = f * c + i * g
        h = o * jnp.tanh(c)
        return (h, c), h

    init = (jnp.zeros((B, H), jnp.float32), jnp.zeros((B, H), jnp.float32))
    _, h_seq = jax.lax.scan(step, init, x_seq)
    return h_seq


def reference_forward(params, input_ids, attention_mask, *,
                      n_layers, bidirectional):
    del attention_mask
    emb = params["embedding"][input_ids]
    layer_in = jnp.transpose(emb, (1, 0, 2))
    h_fwd = h_bwd_rev = None
    for layer in range(n_layers):
        dirs = params["lstm_ref"][layer]
        h_fwd = _ref_lstm_dir(layer_in, dirs[0]["w_ih_t"],
                              dirs[0]["w_hh_t"], dirs[0]["bias"])
        if bidirectional:
            h_bwd_rev = _ref_lstm_dir(layer_in[::-1], dirs[1]["w_ih_t"],
                                      dirs[1]["w_hh_t"], dirs[1]["bias"])
            layer_in = jnp.concatenate([h_fwd, h_bwd_rev[::-1]], axis=-1)
        else:
            layer_in = h_fwd
    hidden = (jnp.concatenate([h_fwd[-1], h_bwd_rev[-1]], axis=1)
              if bidirectional else h_fwd[-1])
    return hidden @ params["fc_w_t"] + params["fc_b"]


# ----------------------------------------------------------------------------
# Main
# ----------------------------------------------------------------------------

if __name__ == "__main__":
    VOCAB_SIZE = 50
    EMBED_DIM = 32
    HIDDEN_DIM = 32
    OUTPUT_DIM = 4
    N_LAYERS = 2
    BIDIRECTIONAL = True
    BATCH = 2
    SEQ = 8

    fuse_dirs = _mxu_is_256_wide()

    key = jax.random.PRNGKey(0)
    k_param, k_ids = jax.random.split(key)

    params = init_params(k_param, VOCAB_SIZE, EMBED_DIM, HIDDEN_DIM,
                         OUTPUT_DIM, N_LAYERS, BIDIRECTIONAL, fuse_dirs)

    input_ids = jax.random.randint(k_ids, (BATCH, SEQ), 0, VOCAB_SIZE,
                                   dtype=jnp.int32)
    attention_mask = jnp.ones((BATCH, SEQ), jnp.int32)

    fwd = functools.partial(sentiment_forward, n_layers=N_LAYERS,
                            bidirectional=BIDIRECTIONAL, fuse_dirs=fuse_dirs)
    out = jax.block_until_ready(jax.jit(fwd)(params, input_ids, attention_mask))

    with jax.default_matmul_precision("highest"):
        ref = reference_forward(params, input_ids, attention_mask,
                                n_layers=N_LAYERS, bidirectional=BIDIRECTIONAL)
    ref = jax.block_until_ready(ref)

    assert out.shape == (BATCH, OUTPUT_DIM)
    assert jnp.allclose(out, ref, rtol=5e-3, atol=5e-3), (
        f"mismatch: max abs diff {jnp.max(jnp.abs(out - ref))}")

    print("KERNEL_OK")
</pallas_src>

<mosaic_0001>
module attributes {stable_mosaic.version = 11 : i64} {
  func.func @kernel(%arg0: memref<16x1xi32, #tpu.memory_space<vmem>>, %arg1: memref<50x32xf32, #tpu.memory_space<vmem>>, %arg2: memref<32x256xf32, #tpu.memory_space<vmem>>, %arg3: memref<32x256xf32, #tpu.memory_space<vmem>>, %arg4: memref<64x256xf32, #tpu.memory_space<vmem>>, %arg5: memref<1x256xf32, #tpu.memory_space<vmem>>, %arg6: memref<64x256xf32, #tpu.memory_space<vmem>>, %arg7: memref<64x256xf32, #tpu.memory_space<vmem>>, %arg8: memref<64x256xf32, #tpu.memory_space<vmem>>, %arg9: memref<1x256xf32, #tpu.memory_space<vmem>>, %arg10: memref<64x4xf32, #tpu.memory_space<vmem>>, %arg11: memref<1x4xf32, #tpu.memory_space<vmem>>, %arg12: memref<2x4xf32, #tpu.memory_space<vmem>>) attributes {dimension_semantics = [], scalar_prefetch = 0 : i64, scratch_operands = 0 : i64, tpu.core_type = #tpu.core_type<tc>} {
    %c0 = arith.constant 0 : index
    %c0_0 = arith.constant 0 : index
    %0 = vector.load %arg0[%c0, %c0_0] : memref<16x1xi32, #tpu.memory_space<vmem>>, vector<16x1xi32>
    %1 = tpu.iota {dimensions = array<i32: 1>} : vector<16x50xi32>
    %2 = vector.broadcast %0 : vector<16x1xi32> to vector<16x50xi32>
    %3 = arith.cmpi eq, %1, %2 : vector<16x50xi32>
    %4 = arith.extui %3 : vector<16x50xi1> to vector<16x50xi32>
    %5 = arith.sitofp %4 : vector<16x50xi32> to vector<16x50xf32>
    %c0_1 = arith.constant 0 : index
    %c0_2 = arith.constant 0 : index
    %6 = vector.load %arg1[%c0_1, %c0_2] : memref<50x32xf32, #tpu.memory_space<vmem>>, vector<50x32xf32>
    %cst = arith.constant dense<0.000000e+00> : vector<16x32xf32>
    %7 = tpu.matmul %5, %6, %cst {dimension_numbers = #tpu.dot_dimension_numbers<[1], [0], [0], [1], [0, 0, 1, 1], [], []>} : vector<16x50xf32>, vector<50x32xf32>, vector<16x32xf32> -> vector<16x32xf32>
    %8 = tpu.iota {dimensions = array<i32: 1>} : vector<2x256xi32>
    %c128_i32 = arith.constant 128 : i32
    %9 = vector.broadcast %c128_i32 : i32 to vector<2x256xi32>
    %10 = arith.cmpi sge, %8, %9 : vector<2x256xi32>
    %c192_i32 = arith.constant 192 : i32
    %11 = vector.broadcast %c192_i32 : i32 to vector<2x256xi32>
    %12 = arith.cmpi slt, %8, %11 : vector<2x256xi32>
    %13 = arith.andi %10, %12 : vector<2x256xi1>
    %14 = tpu.iota {dimensions = array<i32: 1>} : vector<2x64xi32>
    %c32_i32 = arith.constant 32 : i32
    %15 = vector.broadcast %c32_i32 : i32 to vector<2x64xi32>
    %16 = arith.cmpi slt, %14, %15 : vector<2x64xi32>
    %c0_3 = arith.constant 0 : index
    %c0_4 = arith.constant 0 : index
    %17 = vector.load %arg2[%c0_3, %c0_4] : memref<32x256xf32, #tpu.memory_space<vmem>>, vector<32x256xf32>
    %cst_5 = arith.constant dense<0.000000e+00> : vector<16x256xf32>
    %18 = tpu.matmul %7, %17, %cst_5 {dimension_numbers = #tpu.dot_dimension_numbers<[1], [0], [0], [1], [0, 0, 1, 1], [], []>} : vector<16x32xf32>, vector<32x256xf32>, vector<16x256xf32> -> vector<16x256xf32>
    %c0_6 = arith.constant 0 : index
    %c0_7 = arith.constant 0 : index
    %19 = vector.load %arg3[%c0_6, %c0_7] : memref<32x256xf32, #tpu.memory_space<vmem>>, vector<32x256xf32>
    %cst_8 = arith.constant dense<0.000000e+00> : vector<16x256xf32>
    %20 = tpu.matmul %7, %19, %cst_8 {dimension_numbers = #tpu.dot_dimension_numbers<[1], [0], [0], [1], [0, 0, 1, 1], [], []>} : vector<16x32xf32>, vector<32x256xf32>, vector<16x256xf32> -> vector<16x256xf32>
    %c0_9 = arith.constant 0 : index
    %c0_10 = arith.constant 0 : index
    %21 = vector.load %arg5[%c0_9, %c0_10] : memref<1x256xf32, #tpu.memory_space<vmem>>, vector<1x256xf32>
    %22 = vector.broadcast %21 : vector<1x256xf32> to vector<16x256xf32>
    %23 = arith.addf %18, %22 : vector<16x256xf32>
    %c0_11 = arith.constant 0 : index
    %c0_12 = arith.constant 0 : index
    %24 = vector.load %arg4[%c0_11, %c0_12] : memref<64x256xf32, #tpu.memory_space<vmem>>, vector<64x256xf32>
    %cst_13 = arith.constant 0.000000e+00 : f32
    %25 = vector.broadcast %cst_13 : f32 to vector<2x64xf32>
    %cst_14 = arith.constant 0.000000e+00 : f32
    %26 = vector.broadcast %cst_14 : f32 to vector<2x64xf32>
    %cst_15 = arith.constant dense<0.000000e+00> : vector<2x256xf32>
    %27 = tpu.matmul %25, %24, %cst_15 {dimension_numbers = #tpu.dot_dimension_numbers<[1], [0], [0], [1], [0, 0, 1, 1], [], []>} : vector<2x64xf32>, vector<64x256xf32>, vector<2x256xf32> -> vector<2x256xf32>
    %28 = vector.extract_strided_slice %23 {offsets = [0, 0], sizes = [2, 256], strides = [1, 1]} : vector<16x256xf32> to vector<2x256xf32>
    %29 = arith.addf %27, %28 : vector<2x256xf32>
    %30 = vector.extract_strided_slice %20 {offsets = [14, 0], sizes = [2, 256], strides = [1, 1]} : vector<16x256xf32> to vector<2x256xf32>
    %31 = arith.addf %29, %30 : vector<2x256xf32>
    %32 = arith.negf %31 : vector<2x256xf32>
    %33 = math.exp %32 : vector<2x256xf32>
    %cst_16 = arith.constant 1.000000e+00 : f32
    %34 = vector.broadcast %cst_16 : f32 to vector<2x256xf32>
    %35 = arith.addf %34, %33 : vector<2x256xf32>
    %36 = arith.divf %34, %35 : vector<2x256xf32>
    %cst_17 = arith.constant 2.000000e+00 : f32
    %37 = vector.broadcast %cst_17 : f32 to vector<2x256xf32>
    %38 = arith.mulf %37, %36 : vector<2x256xf32>
    %cst_18 = arith.constant 1.000000e+00 : f32
    %39 = vector.broadcast %cst_18 : f32 to vector<2x256xf32>
    %40 = arith.subf %38, %39 : vector<2x256xf32>
    %41 = arith.select %13, %40, %36 : vector<2x256xi1>, vector<2x256xf32>
    %42 = vector.extract_strided_slice %41 {offsets = [0, 0], sizes = [2, 64], strides = [1, 1]} : vector<2x256xf32> to vector<2x64xf32>
    %43 = vector.extract_strided_slice %41 {offsets = [0, 64], sizes = [2, 64], strides = [1, 1]} : vector<2x256xf32> to vector<2x64xf32>
    %44 = vector.extract_strided_slice %41 {offsets = [0, 128], sizes = [2, 64], strides = [1, 1]} : vector<2x256xf32> to vector<2x64xf32>
    %45 = vector.extract_strided_slice %41 {offsets = [0, 192], sizes = [2, 64], strides = [1, 1]} : vector<2x256xf32> to vector<2x64xf32>
    %46 = arith.mulf %43, %26 : vector<2x64xf32>
    %47 = arith.mulf %42, %44 : vector<2x64xf32>
    %48 = arith.addf %46, %47 : vector<2x64xf32>
    %49 = math.tanh %48 : vector<2x64xf32>
    %50 = arith.mulf %45, %49 : vector<2x64xf32>
    %cst_19 = arith.constant dense<0.000000e+00> : vector<2x256xf32>
    %51 = tpu.matmul %50, %24, %cst_19 {dimension_numbers = #tpu.dot_dimension_numbers<[1], [0], [0], [1], [0, 0, 1, 1], [], []>} : vector<2x64xf32>, vector<64x256xf32>, vector<2x256xf32> -> vector<2x256xf32>
    %52 = vector.extract_strided_slice %23 {offsets = [2, 0], sizes = [2, 256], strides = [1, 1]} : vector<16x256xf32> to vector<2x256xf32>
    %53 = arith.addf %51, %52 : vector<2x256xf32>
    %54 = vector.extract_strided_slice %20 {offsets = [12, 0], sizes = [2, 256], strides = [1, 1]} : vector<16x256xf32> to vector<2x256xf32>
    %55 = arith.addf %53, %54 : vector<2x256xf32>
    %56 = arith.negf %55 : vector<2x256xf32>
    %57 = math.exp %56 : vector<2x256xf32>
    %cst_20 = arith.constant 1.000000e+00 : f32
    %58 = vector.broadcast %cst_20 : f32 to vector<2x256xf32>
    %59 = arith.addf %58, %57 : vector<2x256xf32>
    %60 = arith.divf %58, %59 : vector<2x256xf32>
    %cst_21 = arith.constant 2.000000e+00 : f32
    %61 = vector.broadcast %cst_21 : f32 to vector<2x256xf32>
    %62 = arith.mulf %61, %60 : vector<2x256xf32>
    %cst_22 = arith.constant 1.000000e+00 : f32
    %63 = vector.broadcast %cst_22 : f32 to vector<2x256xf32>
    %64 = arith.subf %62, %63 : vector<2x256xf32>
    %65 = arith.select %13, %64, %60 : vector<2x256xi1>, vector<2x256xf32>
    %66 = vector.extract_strided_slice %65 {offsets = [0, 0], sizes = [2, 64], strides = [1, 1]} : vector<2x256xf32> to vector<2x64xf32>
    %67 = vector.extract_strided_slice %65 {offsets = [0, 64], sizes = [2, 64], strides = [1, 1]} : vector<2x256xf32> to vector<2x64xf32>
    %68 = vector.extract_strided_slice %65 {offsets = [0, 128], sizes = [2, 64], strides = [1, 1]} : vector<2x256xf32> to vector<2x64xf32>
    %69 = vector.extract_strided_slice %65 {offsets = [0, 192], sizes = [2, 64], strides = [1, 1]} : vector<2x256xf32> to vector<2x64xf32>
    %70 = arith.mulf %67, %48 : vector<2x64xf32>
    %71 = arith.mulf %66, %68 : vector<2x64xf32>
    %72 = arith.addf %70, %71 : vector<2x64xf32>
    %73 = math.tanh %72 : vector<2x64xf32>
    %74 = arith.mulf %69, %73 : vector<2x64xf32>
    %cst_23 = arith.constant dense<0.000000e+00> : vector<2x256xf32>
    %75 = tpu.matmul %74, %24, %cst_23 {dimension_numbers = #tpu.dot_dimension_numbers<[1], [0], [0], [1], [0, 0, 1, 1], [], []>} : vector<2x64xf32>, vector<64x256xf32>, vector<2x256xf32> -> vector<2x256xf32>
    %76 = vector.extract_strided_slice %23 {offsets = [4, 0], sizes = [2, 256], strides = [1, 1]} : vector<16x256xf32> to vector<2x256xf32>
    %77 = arith.addf %75, %76 : vector<2x256xf32>
    %78 = vector.extract_strided_slice %20 {offsets = [10, 0], sizes = [2, 256], strides = [1, 1]} : vector<16x256xf32> to vector<2x256xf32>
    %79 = arith.addf %77, %78 : vector<2x256xf32>
    %80 = arith.negf %79 : vector<2x256xf32>
    %81 = math.exp %80 : vector<2x256xf32>
    %cst_24 = arith.constant 1.000000e+00 : f32
    %82 = vector.broadcast %cst_24 : f32 to vector<2x256xf32>
    %83 = arith.addf %82, %81 : vector<2x256xf32>
    %84 = arith.divf %82, %83 : vector<2x256xf32>
    %cst_25 = arith.constant 2.000000e+00 : f32
    %85 = vector.broadcast %cst_25 : f32 to vector<2x256xf32>
    %86 = arith.mulf %85, %84 : vector<2x256xf32>
    %cst_26 = arith.constant 1.000000e+00 : f32
    %87 = vector.broadcast %cst_26 : f32 to vector<2x256xf32>
    %88 = arith.subf %86, %87 : vector<2x256xf32>
    %89 = arith.select %13, %88, %84 : vector<2x256xi1>, vector<2x256xf32>
    %90 = vector.extract_strided_slice %89 {offsets = [0, 0], sizes = [2, 64], strides = [1, 1]} : vector<2x256xf32> to vector<2x64xf32>
    %91 = vector.extract_strided_slice %89 {offsets = [0, 64], sizes = [2, 64], strides = [1, 1]} : vector<2x256xf32> to vector<2x64xf32>
    %92 = vector.extract_strided_slice %89 {offsets = [0, 128], sizes = [2, 64], strides = [1, 1]} : vector<2x256xf32> to vector<2x64xf32>
    %93 = vector.extract_strided_slice %89 {offsets = [0, 192], sizes = [2, 64], strides = [1, 1]} : vector<2x256xf32> to vector<2x64xf32>
    %94 = arith.mulf %91, %72 : vector<2x64xf32>
    %95 = arith.mulf %90, %92 : vector<2x64xf32>
    %96 = arith.addf %94, %95 : vector<2x64xf32>
    %97 = math.tanh %96 : vector<2x64xf32>
    %98 = arith.mulf %93, %97 : vector<2x64xf32>
    %cst_27 = arith.constant dense<0.000000e+00> : vector<2x256xf32>
    %99 = tpu.matmul %98, %24, %cst_27 {dimension_numbers = #tpu.dot_dimension_numbers<[1], [0], [0], [1], [0, 0, 1, 1], [], []>} : vector<2x64xf32>, vector<64x256xf32>, vector<2x256xf32> -> vector<2x256xf32>
    %100 = vector.extract_strided_slice %23 {offsets = [6, 0], sizes = [2, 256], strides = [1, 1]} : vector<16x256xf32> to vector<2x256xf32>
    %101 = arith.addf %99, %100 : vector<2x256xf32>
    %102 = vector.extract_strided_slice %20 {offsets = [8, 0], sizes = [2, 256], strides = [1, 1]} : vector<16x256xf32> to vector<2x256xf32>
    %103 = arith.addf %101, %102 : vector<2x256xf32>
    %104 = arith.negf %103 : vector<2x256xf32>
    %105 = math.exp %104 : vector<2x256xf32>
    %cst_28 = arith.constant 1.000000e+00 : f32
    %106 = vector.broadcast %cst_28 : f32 to vector<2x256xf32>
    %107 = arith.addf %106, %105 : vector<2x256xf32>
    %108 = arith.divf %106, %107 : vector<2x256xf32>
    %cst_29 = arith.constant 2.000000e+00 : f32
    %109 = vector.broadcast %cst_29 : f32 to vector<2x256xf32>
    %110 = arith.mulf %109, %108 : vector<2x256xf32>
    %cst_30 = arith.constant 1.000000e+00 : f32
    %111 = vector.broadcast %cst_30 : f32 to vector<2x256xf32>
    %112 = arith.subf %110, %111 : vector<2x256xf32>
    %113 = arith.select %13, %112, %108 : vector<2x256xi1>, vector<2x256xf32>
    %114 = vector.extract_strided_slice %113 {offsets = [0, 0], sizes = [2, 64], strides = [1, 1]} : vector<2x256xf32> to vector<2x64xf32>
    %115 = vector.extract_strided_slice %113 {offsets = [0, 64], sizes = [2, 64], strides = [1, 1]} : vector<2x256xf32> to vector<2x64xf32>
    %116 = vector.extract_strided_slice %113 {offsets = [0, 128], sizes = [2, 64], strides = [1, 1]} : vector<2x256xf32> to vector<2x64xf32>
    %117 = vector.extract_strided_slice %113 {offsets = [0, 192], sizes = [2, 64], strides = [1, 1]} : vector<2x256xf32> to vector<2x64xf32>
    %118 = arith.mulf %115, %96 : vector<2x64xf32>
    %119 = arith.mulf %114, %116 : vector<2x64xf32>
    %120 = arith.addf %118, %119 : vector<2x64xf32>
    %121 = math.tanh %120 : vector<2x64xf32>
    %122 = arith.mulf %117, %121 : vector<2x64xf32>
    %cst_31 = arith.constant dense<0.000000e+00> : vector<2x256xf32>
    %123 = tpu.matmul %122, %24, %cst_31 {dimension_numbers = #tpu.dot_dimension_numbers<[1], [0], [0], [1], [0, 0, 1, 1], [], []>} : vector<2x64xf32>, vector<64x256xf32>, vector<2x256xf32> -> vector<2x256xf32>
    %124 = vector.extract_strided_slice %23 {offsets = [8, 0], sizes = [2, 256], strides = [1, 1]} : vector<16x256xf32> to vector<2x256xf32>
    %125 = arith.addf %123, %124 : vector<2x256xf32>
    %126 = vector.extract_strided_slice %20 {offsets = [6, 0], sizes = [2, 256], strides = [1, 1]} : vector<16x256xf32> to vector<2x256xf32>
    %127 = arith.addf %125, %126 : vector<2x256xf32>
    %128 = arith.negf %127 : vector<2x256xf32>
    %129 = math.exp %128 : vector<2x256xf32>
    %cst_32 = arith.constant 1.000000e+00 : f32
    %130 = vector.broadcast %cst_32 : f32 to vector<2x256xf32>
    %131 = arith.addf %130, %129 : vector<2x256xf32>
    %132 = arith.divf %130, %131 : vector<2x256xf32>
    %cst_33 = arith.constant 2.000000e+00 : f32
    %133 = vector.broadcast %cst_33 : f32 to vector<2x256xf32>
    %134 = arith.mulf %133, %132 : vector<2x256xf32>
    %cst_34 = arith.constant 1.000000e+00 : f32
    %135 = vector.broadcast %cst_34 : f32 to vector<2x256xf32>
    %136 = arith.subf %134, %135 : vector<2x256xf32>
    %137 = arith.select %13, %136, %132 : vector<2x256xi1>, vector<2x256xf32>
    %138 = vector.extract_strided_slice %137 {offsets = [0, 0], sizes = [2, 64], strides = [1, 1]} : vector<2x256xf32> to vector<2x64xf32>
    %139 = vector.extract_strided_slice %137 {offsets = [0, 64], sizes = [2, 64], strides = [1, 1]} : vector<2x256xf32> to vector<2x64xf32>
    %140 = vector.extract_strided_slice %137 {offsets = [0, 128], sizes = [2, 64], strides = [1, 1]} : vector<2x256xf32> to vector<2x64xf32>
    %141 = vector.extract_strided_slice %137 {offsets = [0, 192], sizes = [2, 64], strides = [1, 1]} : vector<2x256xf32> to vector<2x64xf32>
    %142 = arith.mulf %139, %120 : vector<2x64xf32>
    %143 = arith.mulf %138, %140 : vector<2x64xf32>
    %144 = arith.addf %142, %143 : vector<2x64xf32>
    %145 = math.tanh %144 : vector<2x64xf32>
    %146 = arith.mulf %141, %145 : vector<2x64xf32>
    %cst_35 = arith.constant dense<0.000000e+00> : vector<2x256xf32>
    %147 = tpu.matmul %146, %24, %cst_35 {dimension_numbers = #tpu.dot_dimension_numbers<[1], [0], [0], [1], [0, 0, 1, 1], [], []>} : vector<2x64xf32>, vector<64x256xf32>, vector<2x256xf32> -> vector<2x256xf32>
    %148 = vector.extract_strided_slice %23 {offsets = [10, 0], sizes = [2, 256], strides = [1, 1]} : vector<16x256xf32> to vector<2x256xf32>
    %149 = arith.addf %147, %148 : vector<2x256xf32>
    %150 = vector.extract_strided_slice %20 {offsets = [4, 0], sizes = [2, 256], strides = [1, 1]} : vector<16x256xf32> to vector<2x256xf32>
    %151 = arith.addf %149, %150 : vector<2x256xf32>
    %152 = arith.negf %151 : vector<2x256xf32>
    %153 = math.exp %152 : vector<2x256xf32>
    %cst_36 = arith.constant 1.000000e+00 : f32
    %154 = vector.broadcast %cst_36 : f32 to vector<2x256xf32>
    %155 = arith.addf %154, %153 : vector<2x256xf32>
    %156 = arith.divf %154, %155 : vector<2x256xf32>
    %cst_37 = arith.constant 2.000000e+00 : f32
    %157 = vector.broadcast %cst_37 : f32 to vector<2x256xf32>
    %158 = arith.mulf %157, %156 : vector<2x256xf32>
    %cst_38 = arith.constant 1.000000e+00 : f32
    %159 = vector.broadcast %cst_38 : f32 to vector<2x256xf32>
    %160 = arith.subf %158, %159 : vector<2x256xf32>
    %161 = arith.select %13, %160, %156 : vector<2x256xi1>, vector<2x256xf32>
    %162 = vector.extract_strided_slice %161 {offsets = [0, 0], sizes = [2, 64], strides = [1, 1]} : vector<2x256xf32> to vector<2x64xf32>
    %163 = vector.extract_strided_slice %161 {offsets = [0, 64], sizes = [2, 64], strides = [1, 1]} : vector<2x256xf32> to vector<2x64xf32>
    %164 = vector.extract_strided_slice %161 {offsets = [0, 128], sizes = [2, 64], strides = [1, 1]} : vector<2x256xf32> to vector<2x64xf32>
    %165 = vector.extract_strided_slice %161 {offsets = [0, 192], sizes = [2, 64], strides = [1, 1]} : vector<2x256xf32> to vector<2x64xf32>
    %166 = arith.mulf %163, %144 : vector<2x64xf32>
    %167 = arith.mulf %162, %164 : vector<2x64xf32>
    %168 = arith.addf %166, %167 : vector<2x64xf32>
    %169 = math.tanh %168 : vector<2x64xf32>
    %170 = arith.mulf %165, %169 : vector<2x64xf32>
    %cst_39 = arith.constant dense<0.000000e+00> : vector<2x256xf32>
    %171 = tpu.matmul %170, %24, %cst_39 {dimension_numbers = #tpu.dot_dimension_numbers<[1], [0], [0], [1], [0, 0, 1, 1], [], []>} : vector<2x64xf32>, vector<64x256xf32>, vector<2x256xf32> -> vector<2x256xf32>
    %172 = vector.extract_strided_slice %23 {offsets = [12, 0], sizes = [2, 256], strides = [1, 1]} : vector<16x256xf32> to vector<2x256xf32>
    %173 = arith.addf %171, %172 : vector<2x256xf32>
    %174 = vector.extract_strided_slice %20 {offsets = [2, 0], sizes = [2, 256], strides = [1, 1]} : vector<16x256xf32> to vector<2x256xf32>
    %175 = arith.addf %173, %174 : vector<2x256xf32>
    %176 = arith.negf %175 : vector<2x256xf32>
    %177 = math.exp %176 : vector<2x256xf32>
    %cst_40 = arith.constant 1.000000e+00 : f32
    %178 = vector.broadcast %cst_40 : f32 to vector<2x256xf32>
    %179 = arith.addf %178, %177 : vector<2x256xf32>
    %180 = arith.divf %178, %179 : vector<2x256xf32>
    %cst_41 = arith.constant 2.000000e+00 : f32
    %181 = vector.broadcast %cst_41 : f32 to vector<2x256xf32>
    %182 = arith.mulf %181, %180 : vector<2x256xf32>
    %cst_42 = arith.constant 1.000000e+00 : f32
    %183 = vector.broadcast %cst_42 : f32 to vector<2x256xf32>
    %184 = arith.subf %182, %183 : vector<2x256xf32>
    %185 = arith.select %13, %184, %180 : vector<2x256xi1>, vector<2x256xf32>
    %186 = vector.extract_strided_slice %185 {offsets = [0, 0], sizes = [2, 64], strides = [1, 1]} : vector<2x256xf32> to vector<2x64xf32>
    %187 = vector.extract_strided_slice %185 {offsets = [0, 64], sizes = [2, 64], strides = [1, 1]} : vector<2x256xf32> to vector<2x64xf32>
    %188 = vector.extract_strided_slice %185 {offsets = [0, 128], sizes = [2, 64], strides = [1, 1]} : vector<2x256xf32> to vector<2x64xf32>
    %189 = vector.extract_strided_slice %185 {offsets = [0, 192], sizes = [2, 64], strides = [1, 1]} : vector<2x256xf32> to vector<2x64xf32>
    %190 = arith.mulf %187, %168 : vector<2x64xf32>
    %191 = arith.mulf %186, %188 : vector<2x64xf32>
    %192 = arith.addf %190, %191 : vector<2x64xf32>
    %193 = math.tanh %192 : vector<2x64xf32>
    %194 = arith.mulf %189, %193 : vector<2x64xf32>
    %cst_43 = arith.constant dense<0.000000e+00> : vector<2x256xf32>
    %195 = tpu.matmul %194, %24, %cst_43 {dimension_numbers = #tpu.dot_dimension_numbers<[1], [0], [0], [1], [0, 0, 1, 1], [], []>} : vector<2x64xf32>, vector<64x256xf32>, vector<2x256xf32> -> vector<2x256xf32>
    %196 = vector.extract_strided_slice %23 {offsets = [14, 0], sizes = [2, 256], strides = [1, 1]} : vector<16x256xf32> to vector<2x256xf32>
    %197 = arith.addf %195, %196 : vector<2x256xf32>
    %198 = vector.extract_strided_slice %20 {offsets = [0, 0], sizes = [2, 256], strides = [1, 1]} : vector<16x256xf32> to vector<2x256xf32>
    %199 = arith.addf %197, %198 : vector<2x256xf32>
    %200 = arith.negf %199 : vector<2x256xf32>
    %201 = math.exp %200 : vector<2x256xf32>
    %cst_44 = arith.constant 1.000000e+00 : f32
    %202 = vector.broadcast %cst_44 : f32 to vector<2x256xf32>
    %203 = arith.addf %202, %201 : vector<2x256xf32>
    %204 = arith.divf %202, %203 : vector<2x256xf32>
    %cst_45 = arith.constant 2.000000e+00 : f32
    %205 = vector.broadcast %cst_45 : f32 to vector<2x256xf32>
    %206 = arith.mulf %205, %204 : vector<2x256xf32>
    %cst_46 = arith.constant 1.000000e+00 : f32
    %207 = vector.broadcast %cst_46 : f32 to vector<2x256xf32>
    %208 = arith.subf %206, %207 : vector<2x256xf32>
    %209 = arith.select %13, %208, %204 : vector<2x256xi1>, vector<2x256xf32>
    %210 = vector.extract_strided_slice %209 {offsets = [0, 0], sizes = [2, 64], strides = [1, 1]} : vector<2x256xf32> to vector<2x64xf32>
    %211 = vector.extract_strided_slice %209 {offsets = [0, 64], sizes = [2, 64], strides = [1, 1]} : vector<2x256xf32> to vector<2x64xf32>
    %212 = vector.extract_strided_slice %209 {offsets = [0, 128], sizes = [2, 64], strides = [1, 1]} : vector<2x256xf32> to vector<2x64xf32>
    %213 = vector.extract_strided_slice %209 {offsets = [0, 192], sizes = [2, 64], strides = [1, 1]} : vector<2x256xf32> to vector<2x64xf32>
    %214 = arith.mulf %211, %192 : vector<2x64xf32>
    %215 = arith.mulf %210, %212 : vector<2x64xf32>
    %216 = arith.addf %214, %215 : vector<2x64xf32>
    %217 = math.tanh %216 : vector<2x64xf32>
    %218 = arith.mulf %213, %217 : vector<2x64xf32>
    %219 = arith.select %16, %50, %218 : vector<2x64xi1>, vector<2x64xf32>
    %220 = arith.select %16, %74, %194 : vector<2x64xi1>, vector<2x64xf32>
    %221 = arith.select %16, %98, %170 : vector<2x64xi1>, vector<2x64xf32>
    %222 = arith.select %16, %122, %146 : vector<2x64xi1>, vector<2x64xf32>
    %223 = arith.select %16, %146, %122 : vector<2x64xi1>, vector<2x64xf32>
    %224 = arith.select %16, %170, %98 : vector<2x64xi1>, vector<2x64xf32>
    %225 = arith.select %16, %194, %74 : vector<2x64xi1>, vector<2x64xf32>
    %226 = arith.select %16, %218, %50 : vector<2x64xi1>, vector<2x64xf32>
    %227 = tpu.concatenate %219, %220, %221, %222, %223, %224, %225, %226 in 0 : vector<2x64xf32>, vector<2x64xf32>, vector<2x64xf32>, vector<2x64xf32>, vector<2x64xf32>, vector<2x64xf32>, vector<2x64xf32>, vector<2x64xf32> -> vector<16x64xf32>
    %c0_47 = arith.constant 0 : index
    %c0_48 = arith.constant 0 : index
    %228 = vector.load %arg6[%c0_47, %c0_48] : memref<64x256xf32, #tpu.memory_space<vmem>>, vector<64x256xf32>
    %cst_49 = arith.constant dense<0.000000e+00> : vector<16x256xf32>
    %229 = tpu.matmul %227, %228, %cst_49 {dimension_numbers = #tpu.dot_dimension_numbers<[1], [0], [0], [1], [0, 0, 1, 1], [], []>} : vector<16x64xf32>, vector<64x256xf32>, vector<16x256xf32> -> vector<16x256xf32>
    %c0_50 = arith.constant 0 : index
    %c0_51 = arith.constant 0 : index
    %230 = vector.load %arg7[%c0_50, %c0_51] : memref<64x256xf32, #tpu.memory_space<vmem>>, vector<64x256xf32>
    %cst_52 = arith.constant dense<0.000000e+00> : vector<16x256xf32>
    %231 = tpu.matmul %227, %230, %cst_52 {dimension_numbers = #tpu.dot_dimension_numbers<[1], [0], [0], [1], [0, 0, 1, 1], [], []>} : vector<16x64xf32>, vector<64x256xf32>, vector<16x256xf32> -> vector<16x256xf32>
    %c0_53 = arith.constant 0 : index
    %c0_54 = arith.constant 0 : index
    %232 = vector.load %arg9[%c0_53, %c0_54] : memref<1x256xf32, #tpu.memory_space<vmem>>, vector<1x256xf32>
    %233 = vector.broadcast %232 : vector<1x256xf32> to vector<16x256xf32>
    %234 = arith.addf %229, %233 : vector<16x256xf32>
    %c0_55 = arith.constant 0 : index
    %c0_56 = arith.constant 0 : index
    %235 = vector.load %arg8[%c0_55, %c0_56] : memref<64x256xf32, #tpu.memory_space<vmem>>, vector<64x256xf32>
    %cst_57 = arith.constant 0.000000e+00 : f32
    %236 = vector.broadcast %cst_57 : f32 to vector<2x64xf32>
    %cst_58 = arith.constant 0.000000e+00 : f32
    %237 = vector.broadcast %cst_58 : f32 to vector<2x64xf32>
    %cst_59 = arith.constant dense<0.000000e+00> : vector<2x256xf32>
    %238 = tpu.matmul %236, %235, %cst_59 {dimension_numbers = #tpu.dot_dimension_numbers<[1], [0], [0], [1], [0, 0, 1, 1], [], []>} : vector<2x64xf32>, vector<64x256xf32>, vector<2x256xf32> -> vector<2x256xf32>
    %239 = vector.extract_strided_slice %234 {offsets = [0, 0], sizes = [2, 256], strides = [1, 1]} : vector<16x256xf32> to vector<2x256xf32>
    %240 = arith.addf %238, %239 : vector<2x256xf32>
    %241 = vector.extract_strided_slice %231 {offsets = [14, 0], sizes = [2, 256], strides = [1, 1]} : vector<16x256xf32> to vector<2x256xf32>
    %242 = arith.addf %240, %241 : vector<2x256xf32>
    %243 = arith.negf %242 : vector<2x256xf32>
    %244 = math.exp %243 : vector<2x256xf32>
    %cst_60 = arith.constant 1.000000e+00 : f32
    %245 = vector.broadcast %cst_60 : f32 to vector<2x256xf32>
    %246 = arith.addf %245, %244 : vector<2x256xf32>
    %247 = arith.divf %245, %246 : vector<2x256xf32>
    %cst_61 = arith.constant 2.000000e+00 : f32
    %248 = vector.broadcast %cst_61 : f32 to vector<2x256xf32>
    %249 = arith.mulf %248, %247 : vector<2x256xf32>
    %cst_62 = arith.constant 1.000000e+00 : f32
    %250 = vector.broadcast %cst_62 : f32 to vector<2x256xf32>
    %251 = arith.subf %249, %250 : vector<2x256xf32>
    %252 = arith.select %13, %251, %247 : vector<2x256xi1>, vector<2x256xf32>
    %253 = vector.extract_strided_slice %252 {offsets = [0, 0], sizes = [2, 64], strides = [1, 1]} : vector<2x256xf32> to vector<2x64xf32>
    %254 = vector.extract_strided_slice %252 {offsets = [0, 64], sizes = [2, 64], strides = [1, 1]} : vector<2x256xf32> to vector<2x64xf32>
    %255 = vector.extract_strided_slice %252 {offsets = [0, 128], sizes = [2, 64], strides = [1, 1]} : vector<2x256xf32> to vector<2x64xf32>
    %256 = vector.extract_strided_slice %252 {offsets = [0, 192], sizes = [2, 64], strides = [1, 1]} : vector<2x256xf32> to vector<2x64xf32>
    %257 = arith.mulf %254, %237 : vector<2x64xf32>
    %258 = arith.mulf %253, %255 : vector<2x64xf32>
    %259 = arith.addf %257, %258 : vector<2x64xf32>
    %260 = math.tanh %259 : vector<2x64xf32>
    %261 = arith.mulf %256, %260 : vector<2x64xf32>
    %cst_63 = arith.constant dense<0.000000e+00> : vector<2x256xf32>
    %262 = tpu.matmul %261, %235, %cst_63 {dimension_numbers = #tpu.dot_dimension_numbers<[1], [0], [0], [1], [0, 0, 1, 1], [], []>} : vector<2x64xf32>, vector<64x256xf32>, vector<2x256xf32> -> vector<2x256xf32>
    %263 = vector.extract_strided_slice %234 {offsets = [2, 0], sizes = [2, 256], strides = [1, 1]} : vector<16x256xf32> to vector<2x256xf32>
    %264 = arith.addf %262, %263 : vector<2x256xf32>
    %265 = vector.extract_strided_slice %231 {offsets = [12, 0], sizes = [2, 256], strides = [1, 1]} : vector<16x256xf32> to vector<2x256xf32>
    %266 = arith.addf %264, %265 : vector<2x256xf32>
    %267 = arith.negf %266 : vector<2x256xf32>
    %268 = math.exp %267 : vector<2x256xf32>
    %cst_64 = arith.constant 1.000000e+00 : f32
    %269 = vector.broadcast %cst_64 : f32 to vector<2x256xf32>
    %270 = arith.addf %269, %268 : vector<2x256xf32>
    %271 = arith.divf %269, %270 : vector<2x256xf32>
    %cst_65 = arith.constant 2.000000e+00 : f32
    %272 = vector.broadcast %cst_65 : f32 to vector<2x256xf32>
    %273 = arith.mulf %272, %271 : vector<2x256xf32>
    %cst_66 = arith.constant 1.000000e+00 : f32
    %274 = vector.broadcast %cst_66 : f32 to vector<2x256xf32>
    %275 = arith.subf %273, %274 : vector<2x256xf32>
    %276 = arith.select %13, %275, %271 : vector<2x256xi1>, vector<2x256xf32>
    %277 = vector.extract_strided_slice %276 {offsets = [0, 0], sizes = [2, 64], strides = [1, 1]} : vector<2x256xf32> to vector<2x64xf32>
    %278 = vector.extract_strided_slice %276 {offsets = [0, 64], sizes = [2, 64], strides = [1, 1]} : vector<2x256xf32> to vector<2x64xf32>
    %279 = vector.extract_strided_slice %276 {offsets = [0, 128], sizes = [2, 64], strides = [1, 1]} : vector<2x256xf32> to vector<2x64xf32>
    %280 = vector.extract_strided_slice %276 {offsets = [0, 192], sizes = [2, 64], strides = [1, 1]} : vector<2x256xf32> to vector<2x64xf32>
    %281 = arith.mulf %278, %259 : vector<2x64xf32>
    %282 = arith.mulf %277, %279 : vector<2x64xf32>
    %283 = arith.addf %281, %282 : vector<2x64xf32>
    %284 = math.tanh %283 : vector<2x64xf32>
    %285 = arith.mulf %280, %284 : vector<2x64xf32>
    %cst_67 = arith.constant dense<0.000000e+00> : vector<2x256xf32>
    %286 = tpu.matmul %285, %235, %cst_67 {dimension_numbers = #tpu.dot_dimension_numbers<[1], [0], [0], [1], [0, 0, 1, 1], [], []>} : vector<2x64xf32>, vector<64x256xf32>, vector<2x256xf32> -> vector<2x256xf32>
    %287 = vector.extract_strided_slice %234 {offsets = [4, 0], sizes = [2, 256], strides = [1, 1]} : vector<16x256xf32> to vector<2x256xf32>
    %288 = arith.addf %286, %287 : vector<2x256xf32>
    %289 = vector.extract_strided_slice %231 {offsets = [10, 0], sizes = [2, 256], strides = [1, 1]} : vector<16x256xf32> to vector<2x256xf32>
    %290 = arith.addf %288, %289 : vector<2x256xf32>
    %291 = arith.negf %290 : vector<2x256xf32>
    %292 = math.exp %291 : vector<2x256xf32>
    %cst_68 = arith.constant 1.000000e+00 : f32
    %293 = vector.broadcast %cst_68 : f32 to vector<2x256xf32>
    %294 = arith.addf %293, %292 : vector<2x256xf32>
    %295 = arith.divf %293, %294 : vector<2x256xf32>
    %cst_69 = arith.constant 2.000000e+00 : f32
    %296 = vector.broadcast %cst_69 : f32 to vector<2x256xf32>
    %297 = arith.mulf %296, %295 : vector<2x256xf32>
    %cst_70 = arith.constant 1.000000e+00 : f32
    %298 = vector.broadcast %cst_70 : f32 to vector<2x256xf32>
    %299 = arith.subf %297, %298 : vector<2x256xf32>
    %300 = arith.select %13, %299, %295 : vector<2x256xi1>, vector<2x256xf32>
    %301 = vector.extract_strided_slice %300 {offsets = [0, 0], sizes = [2, 64], strides = [1, 1]} : vector<2x256xf32> to vector<2x64xf32>
    %302 = vector.extract_strided_slice %300 {offsets = [0, 64], sizes = [2, 64], strides = [1, 1]} : vector<2x256xf32> to vector<2x64xf32>
    %303 = vector.extract_strided_slice %300 {offsets = [0, 128], sizes = [2, 64], strides = [1, 1]} : vector<2x256xf32> to vector<2x64xf32>
    %304 = vector.extract_strided_slice %300 {offsets = [0, 192], sizes = [2, 64], strides = [1, 1]} : vector<2x256xf32> to vector<2x64xf32>
    %305 = arith.mulf %302, %283 : vector<2x64xf32>
    %306 = arith.mulf %301, %303 : vector<2x64xf32>
    %307 = arith.addf %305, %306 : vector<2x64xf32>
    %308 = math.tanh %307 : vector<2x64xf32>
    %309 = arith.mulf %304, %308 : vector<2x64xf32>
    %cst_71 = arith.constant dense<0.000000e+00> : vector<2x256xf32>
    %310 = tpu.matmul %309, %235, %cst_71 {dimension_numbers = #tpu.dot_dimension_numbers<[1], [0], [0], [1], [0, 0, 1, 1], [], []>} : vector<2x64xf32>, vector<64x256xf32>, vector<2x256xf32> -> vector<2x256xf32>
    %311 = vector.extract_strided_slice %234 {offsets = [6, 0], sizes = [2, 256], strides = [1, 1]} : vector<16x256xf32> to vector<2x256xf32>
    %312 = arith.addf %310, %311 : vector<2x256xf32>
    %313 = vector.extract_strided_slice %231 {offsets = [8, 0], sizes = [2, 256], strides = [1, 1]} : vector<16x256xf32> to vector<2x256xf32>
    %314 = arith.addf %312, %313 : vector<2x256xf32>
    %315 = arith.negf %314 : vector<2x256xf32>
    %316 = math.exp %315 : vector<2x256xf32>
    %cst_72 = arith.constant 1.000000e+00 : f32
    %317 = vector.broadcast %cst_72 : f32 to vector<2x256xf32>
    %318 = arith.addf %317, %316 : vector<2x256xf32>
    %319 = arith.divf %317, %318 : vector<2x256xf32>
    %cst_73 = arith.constant 2.000000e+00 : f32
    %320 = vector.broadcast %cst_73 : f32 to vector<2x256xf32>
    %321 = arith.mulf %320, %319 : vector<2x256xf32>
    %cst_74 = arith.constant 1.000000e+00 : f32
    %322 = vector.broadcast %cst_74 : f32 to vector<2x256xf32>
    %323 = arith.subf %321, %322 : vector<2x256xf32>
    %324 = arith.select %13, %323, %319 : vector<2x256xi1>, vector<2x256xf32>
    %325 = vector.extract_strided_slice %324 {offsets = [0, 0], sizes = [2, 64], strides = [1, 1]} : vector<2x256xf32> to vector<2x64xf32>
    %326 = vector.extract_strided_slice %324 {offsets = [0, 64], sizes = [2, 64], strides = [1, 1]} : vector<2x256xf32> to vector<2x64xf32>
    %327 = vector.extract_strided_slice %324 {offsets = [0, 128], sizes = [2, 64], strides = [1, 1]} : vector<2x256xf32> to vector<2x64xf32>
    %328 = vector.extract_strided_slice %324 {offsets = [0, 192], sizes = [2, 64], strides = [1, 1]} : vector<2x256xf32> to vector<2x64xf32>
    %329 = arith.mulf %326, %307 : vector<2x64xf32>
    %330 = arith.mulf %325, %327 : vector<2x64xf32>
    %331 = arith.addf %329, %330 : vector<2x64xf32>
    %332 = math.tanh %331 : vector<2x64xf32>
    %333 = arith.mulf %328, %332 : vector<2x64xf32>
    %cst_75 = arith.constant dense<0.000000e+00> : vector<2x256xf32>
    %334 = tpu.matmul %333, %235, %cst_75 {dimension_numbers = #tpu.dot_dimension_numbers<[1], [0], [0], [1], [0, 0, 1, 1], [], []>} : vector<2x64xf32>, vector<64x256xf32>, vector<2x256xf32> -> vector<2x256xf32>
    %335 = vector.extract_strided_slice %234 {offsets = [8, 0], sizes = [2, 256], strides = [1, 1]} : vector<16x256xf32> to vector<2x256xf32>
    %336 = arith.addf %334, %335 : vector<2x256xf32>
    %337 = vector.extract_strided_slice %231 {offsets = [6, 0], sizes = [2, 256], strides = [1, 1]} : vector<16x256xf32> to vector<2x256xf32>
    %338 = arith.addf %336, %337 : vector<2x256xf32>
    %339 = arith.negf %338 : vector<2x256xf32>
    %340 = math.exp %339 : vector<2x256xf32>
    %cst_76 = arith.constant 1.000000e+00 : f32
    %341 = vector.broadcast %cst_76 : f32 to vector<2x256xf32>
    %342 = arith.addf %341, %340 : vector<2x256xf32>
    %343 = arith.divf %341, %342 : vector<2x256xf32>
    %cst_77 = arith.constant 2.000000e+00 : f32
    %344 = vector.broadcast %cst_77 : f32 to vector<2x256xf32>
    %345 = arith.mulf %344, %343 : vector<2x256xf32>
    %cst_78 = arith.constant 1.000000e+00 : f32
    %346 = vector.broadcast %cst_78 : f32 to vector<2x256xf32>
    %347 = arith.subf %345, %346 : vector<2x256xf32>
    %348 = arith.select %13, %347, %343 : vector<2x256xi1>, vector<2x256xf32>
    %349 = vector.extract_strided_slice %348 {offsets = [0, 0], sizes = [2, 64], strides = [1, 1]} : vector<2x256xf32> to vector<2x64xf32>
    %350 = vector.extract_strided_slice %348 {offsets = [0, 64], sizes = [2, 64], strides = [1, 1]} : vector<2x256xf32> to vector<2x64xf32>
    %351 = vector.extract_strided_slice %348 {offsets = [0, 128], sizes = [2, 64], strides = [1, 1]} : vector<2x256xf32> to vector<2x64xf32>
    %352 = vector.extract_strided_slice %348 {offsets = [0, 192], sizes = [2, 64], strides = [1, 1]} : vector<2x256xf32> to vector<2x64xf32>
    %353 = arith.mulf %350, %331 : vector<2x64xf32>
    %354 = arith.mulf %349, %351 : vector<2x64xf32>
    %355 = arith.addf %353, %354 : vector<2x64xf32>
    %356 = math.tanh %355 : vector<2x64xf32>
    %357 = arith.mulf %352, %356 : vector<2x64xf32>
    %cst_79 = arith.constant dense<0.000000e+00> : vector<2x256xf32>
    %358 = tpu.matmul %357, %235, %cst_79 {dimension_numbers = #tpu.dot_dimension_numbers<[1], [0], [0], [1], [0, 0, 1, 1], [], []>} : vector<2x64xf32>, vector<64x256xf32>, vector<2x256xf32> -> vector<2x256xf32>
    %359 = vector.extract_strided_slice %234 {offsets = [10, 0], sizes = [2, 256], strides = [1, 1]} : vector<16x256xf32> to vector<2x256xf32>
    %360 = arith.addf %358, %359 : vector<2x256xf32>
    %361 = vector.extract_strided_slice %231 {offsets = [4, 0], sizes = [2, 256], strides = [1, 1]} : vector<16x256xf32> to vector<2x256xf32>
    %362 = arith.addf %360, %361 : vector<2x256xf32>
    %363 = arith.negf %362 : vector<2x256xf32>
    %364 = math.exp %363 : vector<2x256xf32>
    %cst_80 = arith.constant 1.000000e+00 : f32
    %365 = vector.broadcast %cst_80 : f32 to vector<2x256xf32>
    %366 = arith.addf %365, %364 : vector<2x256xf32>
    %367 = arith.divf %365, %366 : vector<2x256xf32>
    %cst_81 = arith.constant 2.000000e+00 : f32
    %368 = vector.broadcast %cst_81 : f32 to vector<2x256xf32>
    %369 = arith.mulf %368, %367 : vector<2x256xf32>
    %cst_82 = arith.constant 1.000000e+00 : f32
    %370 = vector.broadcast %cst_82 : f32 to vector<2x256xf32>
    %371 = arith.subf %369, %370 : vector<2x256xf32>
    %372 = arith.select %13, %371, %367 : vector<2x256xi1>, vector<2x256xf32>
    %373 = vector.extract_strided_slice %372 {offsets = [0, 0], sizes = [2, 64], strides = [1, 1]} : vector<2x256xf32> to vector<2x64xf32>
    %374 = vector.extract_strided_slice %372 {offsets = [0, 64], sizes = [2, 64], strides = [1, 1]} : vector<2x256xf32> to vector<2x64xf32>
    %375 = vector.extract_strided_slice %372 {offsets = [0, 128], sizes = [2, 64], strides = [1, 1]} : vector<2x256xf32> to vector<2x64xf32>
    %376 = vector.extract_strided_slice %372 {offsets = [0, 192], sizes = [2, 64], strides = [1, 1]} : vector<2x256xf32> to vector<2x64xf32>
    %377 = arith.mulf %374, %355 : vector<2x64xf32>
    %378 = arith.mulf %373, %375 : vector<2x64xf32>
    %379 = arith.addf %377, %378 : vector<2x64xf32>
    %380 = math.tanh %379 : vector<2x64xf32>
    %381 = arith.mulf %376, %380 : vector<2x64xf32>
    %cst_83 = arith.constant dense<0.000000e+00> : vector<2x256xf32>
    %382 = tpu.matmul %381, %235, %cst_83 {dimension_numbers = #tpu.dot_dimension_numbers<[1], [0], [0], [1], [0, 0, 1, 1], [], []>} : vector<2x64xf32>, vector<64x256xf32>, vector<2x256xf32> -> vector<2x256xf32>
    %383 = vector.extract_strided_slice %234 {offsets = [12, 0], sizes = [2, 256], strides = [1, 1]} : vector<16x256xf32> to vector<2x256xf32>
    %384 = arith.addf %382, %383 : vector<2x256xf32>
    %385 = vector.extract_strided_slice %231 {offsets = [2, 0], sizes = [2, 256], strides = [1, 1]} : vector<16x256xf32> to vector<2x256xf32>
    %386 = arith.addf %384, %385 : vector<2x256xf32>
    %387 = arith.negf %386 : vector<2x256xf32>
    %388 = math.exp %387 : vector<2x256xf32>
    %cst_84 = arith.constant 1.000000e+00 : f32
    %389 = vector.broadcast %cst_84 : f32 to vector<2x256xf32>
    %390 = arith.addf %389, %388 : vector<2x256xf32>
    %391 = arith.divf %389, %390 : vector<2x256xf32>
    %cst_85 = arith.constant 2.000000e+00 : f32
    %392 = vector.broadcast %cst_85 : f32 to vector<2x256xf32>
    %393 = arith.mulf %392, %391 : vector<2x256xf32>
    %cst_86 = arith.constant 1.000000e+00 : f32
    %394 = vector.broadcast %cst_86 : f32 to vector<2x256xf32>
    %395 = arith.subf %393, %394 : vector<2x256xf32>
    %396 = arith.select %13, %395, %391 : vector<2x256xi1>, vector<2x256xf32>
    %397 = vector.extract_strided_slice %396 {offsets = [0, 0], sizes = [2, 64], strides = [1, 1]} : vector<2x256xf32> to vector<2x64xf32>
    %398 = vector.extract_strided_slice %396 {offsets = [0, 64], sizes = [2, 64], strides = [1, 1]} : vector<2x256xf32> to vector<2x64xf32>
    %399 = vector.extract_strided_slice %396 {offsets = [0, 128], sizes = [2, 64], strides = [1, 1]} : vector<2x256xf32> to vector<2x64xf32>
    %400 = vector.extract_strided_slice %396 {offsets = [0, 192], sizes = [2, 64], strides = [1, 1]} : vector<2x256xf32> to vector<2x64xf32>
    %401 = arith.mulf %398, %379 : vector<2x64xf32>
    %402 = arith.mulf %397, %399 : vector<2x64xf32>
    %403 = arith.addf %401, %402 : vector<2x64xf32>
    %404 = math.tanh %403 : vector<2x64xf32>
    %405 = arith.mulf %400, %404 : vector<2x64xf32>
    %cst_87 = arith.constant dense<0.000000e+00> : vector<2x256xf32>
    %406 = tpu.matmul %405, %235, %cst_87 {dimension_numbers = #tpu.dot_dimension_numbers<[1], [0], [0], [1], [0, 0, 1, 1], [], []>} : vector<2x64xf32>, vector<64x256xf32>, vector<2x256xf32> -> vector<2x256xf32>
    %407 = vector.extract_strided_slice %234 {offsets = [14, 0], sizes = [2, 256], strides = [1, 1]} : vector<16x256xf32> to vector<2x256xf32>
    %408 = arith.addf %406, %407 : vector<2x256xf32>
    %409 = vector.extract_strided_slice %231 {offsets = [0, 0], sizes = [2, 256], strides = [1, 1]} : vector<16x256xf32> to vector<2x256xf32>
    %410 = arith.addf %408, %409 : vector<2x256xf32>
    %411 = arith.negf %410 : vector<2x256xf32>
    %412 = math.exp %411 : vector<2x256xf32>
    %cst_88 = arith.constant 1.000000e+00 : f32
    %413 = vector.broadcast %cst_88 : f32 to vector<2x256xf32>
    %414 = arith.addf %413, %412 : vector<2x256xf32>
    %415 = arith.divf %413, %414 : vector<2x256xf32>
    %cst_89 = arith.constant 2.000000e+00 : f32
    %416 = vector.broadcast %cst_89 : f32 to vector<2x256xf32>
    %417 = arith.mulf %416, %415 : vector<2x256xf32>
    %cst_90 = arith.constant 1.000000e+00 : f32
    %418 = vector.broadcast %cst_90 : f32 to vector<2x256xf32>
    %419 = arith.subf %417, %418 : vector<2x256xf32>
    %420 = arith.select %13, %419, %415 : vector<2x256xi1>, vector<2x256xf32>
    %421 = vector.extract_strided_slice %420 {offsets = [0, 0], sizes = [2, 64], strides = [1, 1]} : vector<2x256xf32> to vector<2x64xf32>
    %422 = vector.extract_strided_slice %420 {offsets = [0, 64], sizes = [2, 64], strides = [1, 1]} : vector<2x256xf32> to vector<2x64xf32>
    %423 = vector.extract_strided_slice %420 {offsets = [0, 128], sizes = [2, 64], strides = [1, 1]} : vector<2x256xf32> to vector<2x64xf32>
    %424 = vector.extract_strided_slice %420 {offsets = [0, 192], sizes = [2, 64], strides = [1, 1]} : vector<2x256xf32> to vector<2x64xf32>
    %425 = arith.mulf %422, %403 : vector<2x64xf32>
    %426 = arith.mulf %421, %423 : vector<2x64xf32>
    %427 = arith.addf %425, %426 : vector<2x64xf32>
    %428 = math.tanh %427 : vector<2x64xf32>
    %429 = arith.mulf %424, %428 : vector<2x64xf32>
    %c0_91 = arith.constant 0 : index
    %c0_92 = arith.constant 0 : index
    %430 = vector.load %arg10[%c0_91, %c0_92] : memref<64x4xf32, #tpu.memory_space<vmem>>, vector<64x4xf32>
    %cst_93 = arith.constant dense<0.000000e+00> : vector<2x4xf32>
    %431 = tpu.matmul %429, %430, %cst_93 {dimension_numbers = #tpu.dot_dimension_numbers<[1], [0], [0], [1], [0, 0, 1, 1], [], []>} : vector<2x64xf32>, vector<64x4xf32>, vector<2x4xf32> -> vector<2x4xf32>
    %c0_94 = arith.constant 0 : index
    %c0_95 = arith.constant 0 : index
    %432 = vector.load %arg11[%c0_94, %c0_95] : memref<1x4xf32, #tpu.memory_space<vmem>>, vector<1x4xf32>
    %433 = vector.broadcast %432 : vector<1x4xf32> to vector<2x4xf32>
    %434 = arith.addf %431, %433 : vector<2x4xf32>
    %c0_96 = arith.constant 0 : index
    %c0_97 = arith.constant 0 : index
    %435 = vector.load %arg12[%c0_96, %c0_97] : memref<2x4xf32, #tpu.memory_space<vmem>>, vector<2x4xf32>
    tpu.vector_store %arg12[%c0_96, %c0_97], %434 {strides = array<i32>} : memref<2x4xf32, #tpu.memory_space<vmem>>, vector<2x4xf32>,
    return
  }
}

</mosaic_0001>

<llo_original>
// kernel: sentiment_forward.1
$region0: #{sentiment_forward.1}
  #allocation0 [shape = 'u32[]', space=smem, size = 0x4, offset = 0x4, fixed_abs, tag = 'smem constant byte address 0x4 - core index']
  #allocation1 [shape = 'u32[144,128]{1,0:T(1,128)}', space=vmem, size = 0x12000, scoped, tag = 'internal scratch']
  %s0 = inlined_call_operand.vmem [shape: s32[16,1], index: 0, kind: input, shape index: {}]
  %s1 = inlined_call_operand.vmem [shape: f32[50,32], index: 1, kind: input, shape index: {}]
  %s2 = inlined_call_operand.vmem [shape: f32[32,256], index: 2, kind: input, shape index: {}]
  %s3 = inlined_call_operand.hbm [shape: f32[32,256], index: 3, kind: input, shape index: {}]
  %s4 = inlined_call_operand.vmem [shape: f32[64,256], index: 4, kind: input, shape index: {}]
  %s5 = inlined_call_operand.vmem [shape: f32[1,256], index: 5, kind: input, shape index: {}]
  %s6 = inlined_call_operand.hbm [shape: f32[64,256], index: 6, kind: input, shape index: {}]
  %s7 = inlined_call_operand.hbm [shape: f32[64,256], index: 7, kind: input, shape index: {}]
  %s8 = inlined_call_operand.hbm [shape: f32[64,256], index: 8, kind: input, shape index: {}]
  %s9 = inlined_call_operand.vmem [shape: f32[1,256], index: 9, kind: input, shape index: {}]
  %s10 = inlined_call_operand.vmem [shape: f32[64,4], index: 10, kind: input, shape index: {}]
  %s11 = inlined_call_operand.vmem [shape: f32[1,4], index: 11, kind: input, shape index: {}]
  %s12 = inlined_call_operand.hbm [shape: f32[2,4], index: 12, kind: output, shape index: {}]
  %s13 = sld [smem:[#allocation0]]
  $region74: #{sentiment_forward.1} parent=0
    _
  %s15 = ssub.s32 1, %s13
  %s16 = scalar_select 0, %s15, %s13
  $region1: #{sentiment_forward.1} parent=0
    #allocation2 [shape = 'u8[32768]{0}', space=vmem, size = 0x8000, scoped, tag = 'input window, operand 3, single buffered']
    #allocation3 [shape = 's32[1]{0}', space=sflag, size = 0x4, scoped, tag = 'scoped memory for sentiment_forward.1']
    #allocation4 [shape = 's32[1]{0}', space=sflag, size = 0x4, scoped, tag = 'scoped memory for sentiment_forward.1']
    #allocation5 [shape = 'u8[65536]{0}', space=vmem, size = 0x10000, scoped, tag = 'input window, operand 6, single buffered']
    #allocation6 [shape = 's32[1]{0}', space=sflag, size = 0x4, scoped, tag = 'scoped memory for sentiment_forward.1']
    #allocation7 [shape = 'u8[65536]{0}', space=vmem, size = 0x10000, scoped, tag = 'input window, operand 7, single buffered']
    #allocation8 [shape = 'u8[65536]{0}', space=vmem, size = 0x10000, scoped, tag = 'input window, operand 8, single buffered']
    #allocation9 [shape = 's32[1]{0}', space=sflag, size = 0x4, scoped, tag = 'scoped memory for sentiment_forward.1']
    #allocation10 [shape = 'u8[1024]{0}', space=vmem, size = 0x400, scoped, tag = 'output window, operand 0, single buffered']
    %17 = vsyncpa [#allocation3], 0
    %18 = vsyncpa [#allocation6], 0
    %19 = vsyncpa [#allocation9], 0
    %20 = vsyncpa [#allocation4], 0
    // Predicated region
    $region2: #{sentiment_forward.1} parent=1 // pred_check
      _
    $region3: #{sentiment_forward.1} parent=1 // pred_check_branch
      %22 = sbr.rel (0) target = $region5
    $region4: #{sentiment_forward.1} parent=1 // pred_region
      _
    $region5: #{sentiment_forward.1} parent=1 // pred_fallthru
      _
    // Predicated region
    $region6: #{sentiment_forward.1} parent=1 // pred_check
      _
    $region7: #{sentiment_forward.1} parent=1 // pred_check_branch
      %24 = sbr.rel (0) target = $region9
    $region8: #{sentiment_forward.1} parent=1 // pred_region
      _
    $region9: #{sentiment_forward.1} parent=1 // pred_fallthru
      _
    // Predicated region
    $region10: #{sentiment_forward.1} parent=1 // pred_check
      _
    $region11: #{sentiment_forward.1} parent=1 // pred_check_branch
      %26 = sbr.rel (0) target = $region13
    $region12: #{sentiment_forward.1} parent=1 // pred_region
      _
    $region13: #{sentiment_forward.1} parent=1 // pred_fallthru
      _
    // Predicated region
    $region14: #{sentiment_forward.1} parent=1 // pred_check
      _
    $region15: #{sentiment_forward.1} parent=1 // pred_check_branch
      %28 = sbr.rel (0) target = $region17
    $region16: #{sentiment_forward.1} parent=1 // pred_region
      %s30 = ssub.s32 1024, 1024
      %31 = vsyncadd [#allocation3], %s30
      %s32 = sshll.u32 [#allocation2], 4
      %s33 = int_to_ptr.vmem [resolvable:$true] %s32
      %38 = dma.hbm_to_vmem [thread:$0]  %s3, 1024, %s33, [#allocation3], 256, 256, 16
    $region17: #{sentiment_forward.1} parent=1 // pred_fallthru
      _
    // Predicated region
    $region18: #{sentiment_forward.1} parent=1 // pred_check
      _
    $region19: #{sentiment_forward.1} parent=1 // pred_check_branch
      %40 = sbr.rel (0) target = $region21
    $region20: #{sentiment_forward.1} parent=1 // pred_region
      _
    $region21: #{sentiment_forward.1} parent=1 // pred_fallthru
      _
    // Predicated region
    $region22: #{sentiment_forward.1} parent=1 // pred_check
      _
    $region23: #{sentiment_forward.1} parent=1 // pred_check_branch
      %42 = sbr.rel (0) target = $region25
    $region24: #{sentiment_forward.1} parent=1 // pred_region
      _
    $region25: #{sentiment_forward.1} parent=1 // pred_fallthru
      _
    // Predicated region
    $region26: #{sentiment_forward.1} parent=1 // pred_check
      _
    $region27: #{sentiment_forward.1} parent=1 // pred_check_branch
      %44 = sbr.rel (0) target = $region29
    $region28: #{sentiment_forward.1} parent=1 // pred_region
      %s46 = ssub.s32 2048, 2048
      %47 = vsyncadd [#allocation6], %s46
      %s48 = sshll.u32 [#allocation5], 4
      %s49 = int_to_ptr.vmem [resolvable:$true] %s48
      %54 = dma.hbm_to_vmem [thread:$0]  %s6, 2048, %s49, [#allocation6], 256, 256, 16
    $region29: #{sentiment_forward.1} parent=1 // pred_fallthru
      _
    // Predicated region
    $region30: #{sentiment_forward.1} parent=1 // pred_check
      _
    $region31: #{sentiment_forward.1} parent=1 // pred_check_branch
      %56 = sbr.rel (0) target = $region33
    $region32: #{sentiment_forward.1} parent=1 // pred_region
      %s58 = ssub.s32 2048, 2048
      %59 = vsyncadd [#allocation6], %s58
      %s60 = sshll.u32 [#allocation7], 4
      %s61 = int_to_ptr.vmem [resolvable:$true] %s60
      %66 = dma.hbm_to_vmem [thread:$0]  %s7, 2048, %s61, [#allocation6], 256, 256, 16
    $region33: #{sentiment_forward.1} parent=1 // pred_fallthru
      _
    // Predicated region
    $region34: #{sentiment_forward.1} parent=1 // pred_check
      _
    $region35: #{sentiment_forward.1} parent=1 // pred_check_branch
      %68 = sbr.rel (0) target = $region37
    $region36: #{sentiment_forward.1} parent=1 // pred_region
      %s70 = ssub.s32 2048, 2048
      %71 = vsyncadd [#allocation9], %s70
      %s72 = sshll.u32 [#allocation8], 4
      %s73 = int_to_ptr.vmem [resolvable:$true] %s72
      %78 = dma.hbm_to_vmem [thread:$0]  %s8, 2048, %s73, [#allocation9], 256, 256, 16
    $region37: #{sentiment_forward.1} parent=1 // pred_fallthru
      _
    // Predicated region
    $region38: #{sentiment_forward.1} parent=1 // pred_check
      _
    $region39: #{sentiment_forward.1} parent=1 // pred_check_branch
      %80 = sbr.rel (0) target = $region41
    $region40: #{sentiment_forward.1} parent=1 // pred_region
      _
    $region41: #{sentiment_forward.1} parent=1 // pred_fallthru
      _
    // Predicated region
    $region42: #{sentiment_forward.1} parent=1 // pred_check
      _
    $region43: #{sentiment_forward.1} parent=1 // pred_check_branch
      %82 = sbr.rel (0) target = $region45
    $region44: #{sentiment_forward.1} parent=1 // pred_region
      _
    $region45: #{sentiment_forward.1} parent=1 // pred_fallthru
      _
    // Predicated region
    $region46: #{sentiment_forward.1} parent=1 // pred_check
      _
    $region47: #{sentiment_forward.1} parent=1 // pred_check_branch
      %84 = sbr.rel (0) target = $region49
    $region48: #{sentiment_forward.1} parent=1 // pred_region
      _
    $region49: #{sentiment_forward.1} parent=1 // pred_fallthru
      _
    // Predicated region
    $region50: #{sentiment_forward.1} parent=1 // pred_check
      _
    $region51: #{sentiment_forward.1} parent=1 // pred_check_branch
      %86 = sbr.rel (0) target = $region53
    $region52: #{sentiment_forward.1} parent=1 // pred_region
      %87 = dma.done [#allocation3], 1024
    $region53: #{sentiment_forward.1} parent=1 // pred_fallthru
      _
    // Predicated region
    $region54: #{sentiment_forward.1} parent=1 // pred_check
      _
    $region55: #{sentiment_forward.1} parent=1 // pred_check_branch
      %89 = sbr.rel (0) target = $region57
    $region56: #{sentiment_forward.1} parent=1 // pred_region
      %90 = dma.done [#allocation6], 2048
    $region57: #{sentiment_forward.1} parent=1 // pred_fallthru
      _
    // Predicated region
    $region58: #{sentiment_forward.1} parent=1 // pred_check
      _
    $region59: #{sentiment_forward.1} parent=1 // pred_check_branch
      %92 = sbr.rel (0) target = $region61
    $region60: #{sentiment_forward.1} parent=1 // pred_region
      %93 = dma.done [#allocation6], 2048
    $region61: #{sentiment_forward.1} parent=1 // pred_fallthru
      _
    // Predicated region
    $region62: #{sentiment_forward.1} parent=1 // pred_check
      _
    $region63: #{sentiment_forward.1} parent=1 // pred_check_branch
      %95 = sbr.rel (0) target = $region65
    $region64: #{sentiment_forward.1} parent=1 // pred_region
      %96 = dma.done [#allocation9], 2048
    $region65: #{sentiment_forward.1} parent=1 // pred_fallthru
      _
    %v97 = vld [vmem:[%s0] sm:$0xff]
    %v98 = vld [vmem:[%s0 + $0x8] sm:$0xff]
    %v99 = vlaneseq
    %v100 = vand.u32 %v99, 127
    %101 = vset.pattern.permute.xlu0 0
    %102 = vperm.xlu0 %101, %v97
    %v103 = vpop.permute.xlu0 %102
    %104 = vset.pattern.permute.xlu0 0
    %105 = vperm.xlu0 %104, %v98
    %v106 = vpop.permute.xlu0 %105
    %vm107 = vcmp.eq.s32.totalorder %v100, %v103
    %vm108 = vcmp.eq.s32.totalorder %v100, %v106
    %v109 = vsel %vm107, 1, 0
    %v110 = vsel %vm108, 1, 0
    %v111 = vcvt.s32.f32 %v109
    %v112 = vcvt.s32.f32 %v110
    %v113 = vld [vmem:[%s1] sm:$0xff]
    %v114 = vld [vmem:[%s1 + $0x8] sm:$0xff]
    %v115 = vld [vmem:[%s1 + $0x10] sm:$0xff]
    %v116 = vld [vmem:[%s1 + $0x18] sm:$0xff]
    %v117 = vld [vmem:[%s1 + $0x20] sm:$0xff]
    %v118 = vld [vmem:[%s1 + $0x28] sm:$0xff]
    %v119 = vld [vmem:[%s1 + $0x30] sm:$0x3]
    %vm120 = vcmask 408576
    %v122 = vsel %vm120, %v111, 0
    %v125 = vsel %vm120, %v112, 0
    %vm127 = vcmask 1041408
    %v129 = vsel %vm127, %v119, 0
    %131 = vmatprep.subr.mxu0 0.0
    %132 = vmatpush1.msra.mxu0 0.0
    %133 = vmatprep.subr.mxu0 0.0
    %134 = vmatpush1.msra.mxu0 0.0
    %135 = vmatprep.subr.mxu0 0.0
    %136 = vmatpush1.msra.mxu0 0.0
    %137 = vmatprep.subr.mxu0 0.0
    %138 = vmatpush1.msra.mxu0 0.0
    %139 = vmatprep.subr.mxu0 0.0
    %140 = vmatpush1.msra.mxu0 0.0
    %141 = vmatprep.subr.mxu0 0.0
    %142 = vmatpush1.msra.mxu0 0.0
    %143 = vmatprep.subr.mxu0 0.0
    %144 = vmatpush1.msra.mxu0 0.0
    %145 = vmatprep.subr.mxu0 0.0
    %146 = vmatpush1.msra.mxu0 0.0
    %147 = vmatprep.subr.mxu0 0.0
    %148 = vmatpush1.msra.mxu0 0.0
    %149 = vmatprep.subr.mxu0 0.0
    %150 = vmatpush1.msra.mxu0 %v129
    %151 = vmatprep.subr.mxu0 0.0
    %152 = vmatpush1.msra.mxu0 %v118
    %153 = vmatprep.subr.mxu0 0.0
    %154 = vmatpush1.msra.mxu0 %v117
    %155 = vmatprep.subr.mxu0 0.0
    %156 = vmatpush1.msra.mxu0 %v116
    %157 = vmatprep.subr.mxu0 0.0
    %158 = vmatpush1.msra.mxu0 %v115
    %159 = vmatprep.subr.mxu0 0.0
    %160 = vmatpush1.msra.mxu0 %v114
    %161 = vmatprep.subr.mxu0 0.0
    %162 = vmatpush1.msra.mxu0 %v113
    %163 = vmatprep.subr.mxu0 0.0
    %164 = vmatpush2.msra.mxu0 0.0
    %165 = vmatprep.subr.mxu0 0.0
    %166 = vmatpush2.msra.mxu0 0.0
    %167 = vmatprep.subr.mxu0 0.0
    %168 = vmatpush2.msra.mxu0 0.0
    %169 = vmatprep.subr.mxu0 0.0
    %170 = vmatpush2.msra.mxu0 0.0
    %171 = vmatprep.subr.mxu0 0.0
    %172 = vmatpush2.msra.mxu0 0.0
    %173 = vmatprep.subr.mxu0 0.0
    %174 = vmatpush2.msra.mxu0 0.0
    %175 = vmatprep.subr.mxu0 0.0
    %176 = vmatpush2.msra.mxu0 0.0
    %177 = vmatprep.subr.mxu0 0.0
    %178 = vmatpush2.msra.mxu0 0.0
    %179 = vmatprep.subr.mxu0 0.0
    %180 = vmatpush2.msra.mxu0 0.0
    %181 = vmatprep.subr.mxu0 0.0
    %182 = vmatpush2.msra.mxu0 0.0
    %183 = vmatprep.subr.mxu0 0.0
    %184 = vmatpush2.msra.mxu0 0.0
    %185 = vmatprep.subr.mxu0 0.0
    %186 = vmatpush2.msra.mxu0 0.0
    %187 = vmatprep.subr.mxu0 0.0
    %188 = vmatpush2.msra.mxu0 0.0
    %189 = vmatprep.subr.mxu0 0.0
    %190 = vmatpush2.msra.mxu0 0.0
    %191 = vmatprep.subr.mxu0 0.0
    %192 = vmatpush2.msra.mxu0 0.0
    %193 = vmatprep.subr.mxu0 0.0
    %194 = vmatpush2.msra.mxu0 0.0
    %195 = vmatprep.mubr.f32.mxu0 0.0
    %196 = vmatmul.mubr.f32.gmra.mxu0 %v122
    %v197 = vpop.f32.mrf.mxu0
    %v198 = vadd.f32 0.0, %v197
    %v199 = vpop.f32.mrf.mxu0
    %200 = vmatprep.mubr.f32.mxu0 0.0
    %201 = vmatmul.mubr.f32.gmra.mxu0 %v125
    %v202 = vpop.f32.mrf.mxu0
    %v203 = vadd.f32 0.0, %v202
    %v204 = vpop.f32.mrf.mxu0
    %205 = vdwg.mxu0
    %v206 = vadd.s32 %v100, 128
    %vm207 = vcmp.ge.s32.totalorder %v100, 128
    %vm208 = vcmp.ge.s32.totalorder %v206, 128
    %vm209 = vcmp.lt.s32.totalorder %v100, 192
    %vm210 = vcmp.lt.s32.totalorder %v206, 192
    %vm211 = vmand %vm207, %vm209
    %vm212 = vmand %vm208, %vm210
    %vm213 = vcmp.lt.s32.totalorder %v100, 32
    %v214 = vld [vmem:[%s2] sm:$0xff]
    %v215 = vld [vmem:[%s2 + $0x8] sm:$0xff]
    %v216 = vld [vmem:[%s2 + $0x10] sm:$0xff]
    %v217 = vld [vmem:[%s2 + $0x18] sm:$0xff]
    %v218 = vld [vmem:[%s2 + $0x20] sm:$0xff]
    %v219 = vld [vmem:[%s2 + $0x28] sm:$0xff]
    %v220 = vld [vmem:[%s2 + $0x30] sm:$0xff]
    %v221 = vld [vmem:[%s2 + $0x38] sm:$0xff]
    %v222 = vld [vmem:[#allocation2] sm:$0xff]
    %v223 = vld [vmem:[#allocation2 + $0x8] sm:$0xff]
    %v224 = vld [vmem:[#allocation2 + $0x10] sm:$0xff]
    %v225 = vld [vmem:[#allocation2 + $0x18] sm:$0xff]
    %v226 = vld [vmem:[#allocation2 + $0x20] sm:$0xff]
    %v227 = vld [vmem:[#allocation2 + $0x28] sm:$0xff]
    %v228 = vld [vmem:[#allocation2 + $0x30] sm:$0xff]
    %v229 = vld [vmem:[#allocation2 + $0x38] sm:$0xff]
    %vm230 = vcmask 261120
    %v232 = vsel %vm230, %v198, 0
    %v235 = vsel %vm230, %v203, 0
    %237 = vmatprep.subr.mxu0 0.0
    %238 = vmatpush1.msra.mxu0 0.0
    %239 = vmatprep.subr.mxu0 0.0
    %240 = vmatpush1.msra.mxu0 0.0
    %241 = vmatprep.subr.mxu0 0.0
    %242 = vmatpush1.msra.mxu0 0.0
    %243 = vmatprep.subr.mxu0 0.0
    %244 = vmatpush1.msra.mxu0 0.0
    %245 = vmatprep.subr.mxu0 0.0
    %246 = vmatpush1.msra.mxu0 0.0
    %247 = vmatprep.subr.mxu0 0.0
    %248 = vmatpush1.msra.mxu0 0.0
    %249 = vmatprep.subr.mxu0 0.0
    %250 = vmatpush1.msra.mxu0 0.0
    %251 = vmatprep.subr.mxu0 0.0
    %252 = vmatpush1.msra.mxu0 0.0
    %253 = vmatprep.subr.mxu0 0.0
    %254 = vmatpush1.msra.mxu0 0.0
    %255 = vmatprep.subr.mxu0 0.0
    %256 = vmatpush1.msra.mxu0 0.0
    %257 = vmatprep.subr.mxu0 0.0
    %258 = vmatpush1.msra.mxu0 0.0
    %259 = vmatprep.subr.mxu0 0.0
    %260 = vmatpush1.msra.mxu0 0.0
    %261 = vmatprep.subr.mxu0 %v229
    %262 = vmatpush1.msra.mxu0 %v228
    %263 = vmatprep.subr.mxu0 %v227
    %264 = vmatpush1.msra.mxu0 %v226
    %265 = vmatprep.subr.mxu0 %v225
    %266 = vmatpush1.msra.mxu0 %v224
    %267 = vmatprep.subr.mxu0 %v223
    %268 = vmatpush1.msra.mxu0 %v222
    %269 = vmatprep.subr.mxu0 0.0
    %270 = vmatpush2.msra.mxu0 0.0
    %271 = vmatprep.subr.mxu0 0.0
    %272 = vmatpush2.msra.mxu0 0.0
    %273 = vmatprep.subr.mxu0 0.0
    %274 = vmatpush2.msra.mxu0 0.0
    %275 = vmatprep.subr.mxu0 0.0
    %276 = vmatpush2.msra.mxu0 0.0
    %277 = vmatprep.subr.mxu0 0.0
    %278 = vmatpush2.msra.mxu0 0.0
    %279 = vmatprep.subr.mxu0 0.0
    %280 = vmatpush2.msra.mxu0 0.0
    %281 = vmatprep.subr.mxu0 0.0
    %282 = vmatpush2.msra.mxu0 0.0
    %283 = vmatprep.subr.mxu0 0.0
    %284 = vmatpush2.msra.mxu0 0.0
    %285 = vmatprep.subr.mxu0 0.0
    %286 = vmatpush2.msra.mxu0 0.0
    %287 = vmatprep.subr.mxu0 0.0
    %288 = vmatpush2.msra.mxu0 0.0
    %289 = vmatprep.subr.mxu0 0.0
    %290 = vmatpush2.msra.mxu0 0.0
    %291 = vmatprep.subr.mxu0 0.0
    %292 = vmatpush2.msra.mxu0 0.0
    %293 = vmatprep.subr.mxu0 0.0
    %294 = vmatpush2.msra.mxu0 0.0
    %295 = vmatprep.subr.mxu0 0.0
    %296 = vmatpush2.msra.mxu0 0.0
    %297 = vmatprep.subr.mxu0 0.0
    %298 = vmatpush2.msra.mxu0 0.0
    %299 = vmatprep.subr.mxu0 0.0
    %300 = vmatpush2.msra.mxu0 0.0
    %301 = vmatprep.mubr.f32.mxu0 0.0
    %302 = vmatmul.mubr.f32.gmra.mxu0 %v232
    %v303 = vpop.f32.mrf.mxu0
    %v304 = vadd.f32 0.0, %v303
    %v305 = vpop.f32.mrf.mxu0
    %v306 = vadd.f32 0.0, %v305
    %307 = vmatprep.mubr.f32.mxu0 0.0
    %308 = vmatmul.mubr.f32.gmra.mxu0 %v235
    %v309 = vpop.f32.mrf.mxu0
    %v310 = vadd.f32 0.0, %v309
    %v311 = vpop.f32.mrf.mxu0
    %v312 = vadd.f32 0.0, %v311
    %313 = vdwg.mxu0
    %v314 = vld [vmem:[%s5] sm:$0x3]
    %v316 = vlaneseq
    %v317 = vshrl.u32 %v316, 7
    %v318 = vsub.s32 0, %v317
    %v319 = vrot.slane %v314, %v318
    %v320 = vlaneseq
    %v321 = vshrl.u32 %v320, 7
    %v322 = vsub.s32 1, %v321
    %v323 = vrot.slane %v314, %v322
    %326 = vmatprep.subr.mxu0 0.0
    %327 = vmatpush1.msra.mxu0 0.0
    %328 = vmatprep.subr.mxu0 0.0
    %329 = vmatpush1.msra.mxu0 0.0
    %330 = vmatprep.subr.mxu0 0.0
    %331 = vmatpush1.msra.mxu0 0.0
    %332 = vmatprep.subr.mxu0 0.0
    %333 = vmatpush1.msra.mxu0 0.0
    %334 = vmatprep.subr.mxu0 0.0
    %335 = vmatpush1.msra.mxu0 0.0
    %336 = vmatprep.subr.mxu0 0.0
    %337 = vmatpush1.msra.mxu0 0.0
    %338 = vmatprep.subr.mxu0 0.0
    %339 = vmatpush1.msra.mxu0 0.0
    %340 = vmatprep.subr.mxu0 0.0
    %341 = vmatpush1.msra.mxu0 0.0
    %342 = vmatprep.subr.mxu0 0.0
    %343 = vmatpush1.msra.mxu0 0.0
    %344 = vmatprep.subr.mxu0 0.0
    %345 = vmatpush1.msra.mxu0 0.0
    %346 = vmatprep.subr.mxu0 0.0
    %347 = vmatpush1.msra.mxu0 0.0
    %348 = vmatprep.subr.mxu0 0.0
    %349 = vmatpush1.msra.mxu0 0.0
    %350 = vmatprep.subr.mxu0 %v221
    %351 = vmatpush1.msra.mxu0 %v220
    %352 = vmatprep.subr.mxu0 %v219
    %353 = vmatpush1.msra.mxu0 %v218
    %354 = vmatprep.subr.mxu0 %v217
    %355 = vmatpush1.msra.mxu0 %v216
    %356 = vmatprep.subr.mxu0 %v215
    %357 = vmatpush1.msra.mxu0 %v214
    %358 = vmatprep.subr.mxu0 0.0
    %359 = vmatpush2.msra.mxu0 0.0
    %360 = vmatprep.subr.mxu0 0.0
    %361 = vmatpush2.msra.mxu0 0.0
    %362 = vmatprep.subr.mxu0 0.0
    %363 = vmatpush2.msra.mxu0 0.0
    %364 = vmatprep.subr.mxu0 0.0
    %365 = vmatpush2.msra.mxu0 0.0
    %366 = vmatprep.subr.mxu0 0.0
    %367 = vmatpush2.msra.mxu0 0.0
    %368 = vmatprep.subr.mxu0 0.0
    %369 = vmatpush2.msra.mxu0 0.0
    %370 = vmatprep.subr.mxu0 0.0
    %371 = vmatpush2.msra.mxu0 0.0
    %372 = vmatprep.subr.mxu0 0.0
    %373 = vmatpush2.msra.mxu0 0.0
    %374 = vmatprep.subr.mxu0 0.0
    %375 = vmatpush2.msra.mxu0 0.0
    %376 = vmatprep.subr.mxu0 0.0
    %377 = vmatpush2.msra.mxu0 0.0
    %378 = vmatprep.subr.mxu0 0.0
    %379 = vmatpush2.msra.mxu0 0.0
    %380 = vmatprep.subr.mxu0 0.0
    %381 = vmatpush2.msra.mxu0 0.0
    %382 = vmatprep.subr.mxu0 0.0
    %383 = vmatpush2.msra.mxu0 0.0
    %384 = vmatprep.subr.mxu0 0.0
    %385 = vmatpush2.msra.mxu0 0.0
    %386 = vmatprep.subr.mxu0 0.0
    %387 = vmatpush2.msra.mxu0 0.0
    %388 = vmatprep.subr.mxu0 0.0
    %389 = vmatpush2.msra.mxu0 0.0
    %390 = vmatprep.mubr.f32.mxu0 0.0
    %391 = vmatmul.mubr.f32.gmra.mxu0 %v232
    %v392 = vpop.f32.mrf.mxu0
    %v393 = vadd.f32 %v319, %v392
    %v394 = vpop.f32.mrf.mxu0
    %v395 = vadd.f32 %v323, %v394
    %396 = vmatprep.mubr.f32.mxu0 0.0
    %397 = vmatmul.mubr.f32.gmra.mxu0 %v235
    %v398 = vpop.f32.mrf.mxu0
    %v399 = vadd.f32 %v319, %v398
    %v400 = vpop.f32.mrf.mxu0
    %v401 = vadd.f32 %v323, %v400
    %402 = vdwg.mxu0
    %v403 = vld [vmem:[%s4] sm:$0xff]
    %v404 = vld [vmem:[%s4 + $0x8] sm:$0xff]
    %v405 = vld [vmem:[%s4 + $0x10] sm:$0xff]
    %v406 = vld [vmem:[%s4 + $0x18] sm:$0xff]
    %v407 = vld [vmem:[%s4 + $0x20] sm:$0xff]
    %v408 = vld [vmem:[%s4 + $0x28] sm:$0xff]
    %v409 = vld [vmem:[%s4 + $0x30] sm:$0xff]
    %v410 = vld [vmem:[%s4 + $0x38] sm:$0xff]
    %v411 = vld [vmem:[%s4 + $0x40] sm:$0xff]
    %v412 = vld [vmem:[%s4 + $0x48] sm:$0xff]
    %v413 = vld [vmem:[%s4 + $0x50] sm:$0xff]
    %v414 = vld [vmem:[%s4 + $0x58] sm:$0xff]
    %v415 = vld [vmem:[%s4 + $0x60] sm:$0xff]
    %v416 = vld [vmem:[%s4 + $0x68] sm:$0xff]
    %v417 = vld [vmem:[%s4 + $0x70] sm:$0xff]
    %v418 = vld [vmem:[%s4 + $0x78] sm:$0xff]
    %vm419 = vcmask 523264
    %v421 = vsel %vm419, 0.0, 0
    %423 = vmatprep.subr.mxu0 0.0
    %424 = vmatpush1.msra.mxu0 0.0
    %425 = vmatprep.subr.mxu0 0.0
    %426 = vmatpush1.msra.mxu0 0.0
    %427 = vmatprep.subr.mxu0 0.0
    %428 = vmatpush1.msra.mxu0 0.0
    %429 = vmatprep.subr.mxu0 0.0
    %430 = vmatpush1.msra.mxu0 0.0
    %431 = vmatprep.subr.mxu0 0.0
    %432 = vmatpush1.msra.mxu0 0.0
    %433 = vmatprep.subr.mxu0 0.0
    %434 = vmatpush1.msra.mxu0 0.0
    %435 = vmatprep.subr.mxu0 0.0
    %436 = vmatpush1.msra.mxu0 0.0
    %437 = vmatprep.subr.mxu0 0.0
    %438 = vmatpush1.msra.mxu0 0.0
    %439 = vmatprep.subr.mxu0 %v418
    %440 = vmatpush1.msra.mxu0 %v417
    %441 = vmatprep.subr.mxu0 %v416
    %442 = vmatpush1.msra.mxu0 %v415
    %443 = vmatprep.subr.mxu0 %v414
    %444 = vmatpush1.msra.mxu0 %v413
    %445 = vmatprep.subr.mxu0 %v412
    %446 = vmatpush1.msra.mxu0 %v411
    %447 = vmatprep.subr.mxu0 %v410
    %448 = vmatpush1.msra.mxu0 %v409
    %449 = vmatprep.subr.mxu0 %v408
    %450 = vmatpush1.msra.mxu0 %v407
    %451 = vmatprep.subr.mxu0 %v406
    %452 = vmatpush1.msra.mxu0 %v405
    %453 = vmatprep.subr.mxu0 %v404
    %454 = vmatpush1.msra.mxu0 %v403
    %455 = vmatprep.subr.mxu0 0.0
    %456 = vmatpush2.msra.mxu0 0.0
    %457 = vmatprep.subr.mxu0 0.0
    %458 = vmatpush2.msra.mxu0 0.0
    %459 = vmatprep.subr.mxu0 0.0
    %460 = vmatpush2.msra.mxu0 0.0
    %461 = vmatprep.subr.mxu0 0.0
    %462 = vmatpush2.msra.mxu0 0.0
    %463 = vmatprep.subr.mxu0 0.0
    %464 = vmatpush2.msra.mxu0 0.0
    %465 = vmatprep.subr.mxu0 0.0
    %466 = vmatpush2.msra.mxu0 0.0
    %467 = vmatprep.subr.mxu0 0.0
    %468 = vmatpush2.msra.mxu0 0.0
    %469 = vmatprep.subr.mxu0 0.0
    %470 = vmatpush2.msra.mxu0 0.0
    %471 = vmatprep.subr.mxu0 0.0
    %472 = vmatpush2.msra.mxu0 0.0
    %473 = vmatprep.subr.mxu0 0.0
    %474 = vmatpush2.msra.mxu0 0.0
    %475 = vmatprep.subr.mxu0 0.0
    %476 = vmatpush2.msra.mxu0 0.0
    %477 = vmatprep.subr.mxu0 0.0
    %478 = vmatpush2.msra.mxu0 0.0
    %479 = vmatprep.subr.mxu0 0.0
    %480 = vmatpush2.msra.mxu0 0.0
    %481 = vmatprep.subr.mxu0 0.0
    %482 = vmatpush2.msra.mxu0 0.0
    %483 = vmatprep.subr.mxu0 0.0
    %484 = vmatpush2.msra.mxu0 0.0
    %485 = vmatprep.subr.mxu0 0.0
    %486 = vmatpush2.msra.mxu0 0.0
    %487 = vmatprep.mubr.f32.mxu0 0.0
    %488 = vmatmul.mubr.f32.gmra.mxu0 %v421
    %v489 = vpop.f32.mrf.mxu0
    %v490 = vadd.f32 %v393, %v489
    %v491 = vpop.f32.mrf.mxu0
    %v492 = vadd.f32 %v395, %v491
    %493 = vdwg.mxu0
    %v496 = vrot.slane %v310, 6
    %v497 = vrot.slane %v312, 6
    %v500 = vadd.f32 %v490, %v496
    %v501 = vadd.f32 %v492, %v497
    %v502 = vxor.u32 %v500, 2147483648
    %v503 = vxor.u32 %v501, 2147483648
    %v504 = vmul.f32 %v502, 1.442695
    %v505 = vpow.pop %v504
    %v506 = vmul.f32 %v503, 1.442695
    %v507 = vpow.pop %v506
    %v508 = vadd.f32 %v505, 1.0
    %v509 = vadd.f32 %v507, 1.0
    %v510 = vrcp.pop %v508
    %v511 = vmul.f32 1.0, %v510
    %v512 = vrcp.pop %v509
    %v513 = vmul.f32 1.0, %v512
    %v514 = vmul.f32 %v511, 2.0
    %v515 = vmul.f32 %v513, 2.0
    %v516 = vsub.f32 %v514, 1.0
    %v517 = vsub.f32 %v515, 1.0
    %v518 = vsel %vm211, %v516, %v511
    %v519 = vsel %vm212, %v517, %v513
    %v520 = vmul.f32 %v518, 0.0
    %v521 = vmul.f32 %v518, %v519
    %523 = vrot.lane.b32.xlu0 %v521, 64
    %v524 = vpop.permute.xlu0 %523
    %v526 = vadd.f32 %v520, %v524
    %v527 = vtanh.pop %v526
    %v528 = vmul.f32 %v519, %v527
    %530 = vrot.lane.b32.xlu0 %v528, 64
    %v531 = vpop.permute.xlu0 %530
    %v534 = vrot.slane %v393, 2
    %v535 = vrot.slane %v395, 2
    %v538 = vsel %vm419, %v531, 0
    %540 = vmatprep.subr.mxu0 0.0
    %541 = vmatpush1.msra.mxu0 0.0
    %542 = vmatprep.subr.mxu0 0.0
    %543 = vmatpush1.msra.mxu0 0.0
    %544 = vmatprep.subr.mxu0 0.0
    %545 = vmatpush1.msra.mxu0 0.0
    %546 = vmatprep.subr.mxu0 0.0
    %547 = vmatpush1.msra.mxu0 0.0
    %548 = vmatprep.subr.mxu0 0.0
    %549 = vmatpush1.msra.mxu0 0.0
    %550 = vmatprep.subr.mxu0 0.0
    %551 = vmatpush1.msra.mxu0 0.0
    %552 = vmatprep.subr.mxu0 0.0
    %553 = vmatpush1.msra.mxu0 0.0
    %554 = vmatprep.subr.mxu0 0.0
    %555 = vmatpush1.msra.mxu0 0.0
    %556 = vmatprep.subr.mxu0 %v418
    %557 = vmatpush1.msra.mxu0 %v417
    %558 = vmatprep.subr.mxu0 %v416
    %559 = vmatpush1.msra.mxu0 %v415
    %560 = vmatprep.subr.mxu0 %v414
    %561 = vmatpush1.msra.mxu0 %v413
    %562 = vmatprep.subr.mxu0 %v412
    %563 = vmatpush1.msra.mxu0 %v411
    %564 = vmatprep.subr.mxu0 %v410
    %565 = vmatpush1.msra.mxu0 %v409
    %566 = vmatprep.subr.mxu0 %v408
    %567 = vmatpush1.msra.mxu0 %v407
    %568 = vmatprep.subr.mxu0 %v406
    %569 = vmatpush1.msra.mxu0 %v405
    %570 = vmatprep.subr.mxu0 %v404
    %571 = vmatpush1.msra.mxu0 %v403
    %572 = vmatprep.subr.mxu0 0.0
    %573 = vmatpush2.msra.mxu0 0.0
    %574 = vmatprep.subr.mxu0 0.0
    %575 = vmatpush2.msra.mxu0 0.0
    %576 = vmatprep.subr.mxu0 0.0
    %577 = vmatpush2.msra.mxu0 0.0
    %578 = vmatprep.subr.mxu0 0.0
    %579 = vmatpush2.msra.mxu0 0.0
    %580 = vmatprep.subr.mxu0 0.0
    %581 = vmatpush2.msra.mxu0 0.0
    %582 = vmatprep.subr.mxu0 0.0
    %583 = vmatpush2.msra.mxu0 0.0
    %584 = vmatprep.subr.mxu0 0.0
    %585 = vmatpush2.msra.mxu0 0.0
    %586 = vmatprep.subr.mxu0 0.0
    %587 = vmatpush2.msra.mxu0 0.0
    %588 = vmatprep.subr.mxu0 0.0
    %589 = vmatpush2.msra.mxu0 0.0
    %590 = vmatprep.subr.mxu0 0.0
    %591 = vmatpush2.msra.mxu0 0.0
    %592 = vmatprep.subr.mxu0 0.0
    %593 = vmatpush2.msra.mxu0 0.0
    %594 = vmatprep.subr.mxu0 0.0
    %595 = vmatpush2.msra.mxu0 0.0
    %596 = vmatprep.subr.mxu0 0.0
    %597 = vmatpush2.msra.mxu0 0.0
    %598 = vmatprep.subr.mxu0 0.0
    %599 = vmatpush2.msra.mxu0 0.0
    %600 = vmatprep.subr.mxu0 0.0
    %601 = vmatpush2.msra.mxu0 0.0
    %602 = vmatprep.subr.mxu0 0.0
    %603 = vmatpush2.msra.mxu0 0.0
    %604 = vmatprep.mubr.f32.mxu0 0.0
    %605 = vmatmul.mubr.f32.gmra.mxu0 %v538
    %v606 = vpop.f32.mrf.mxu0
    %v607 = vadd.f32 %v534, %v606
    %v608 = vpop.f32.mrf.mxu0
    %v609 = vadd.f32 %v535, %v608
    %610 = vdwg.mxu0
    %v611 = vrot.slane %v310, 4
    %v612 = vrot.slane %v312, 4
    %v615 = vadd.f32 %v607, %v611
    %v616 = vadd.f32 %v609, %v612
    %v617 = vxor.u32 %v615, 2147483648
    %v618 = vxor.u32 %v616, 2147483648
    %v619 = vmul.f32 %v617, 1.442695
    %v620 = vpow.pop %v619
    %v621 = vmul.f32 %v618, 1.442695
    %v622 = vpow.pop %v621
    %v623 = vadd.f32 %v620, 1.0
    %v624 = vadd.f32 %v622, 1.0
    %v625 = vrcp.pop %v623
    %v626 = vmul.f32 1.0, %v625
    %v627 = vrcp.pop %v624
    %v628 = vmul.f32 1.0, %v627
    %v629 = vmul.f32 %v626, 2.0
    %v630 = vmul.f32 %v628, 2.0
    %v631 = vsub.f32 %v629, 1.0
    %v632 = vsub.f32 %v630, 1.0
    %v633 = vsel %vm211, %v631, %v626
    %v634 = vsel %vm212, %v632, %v628
    %v635 = vmul.f32 %v633, %v526
    %v636 = vmul.f32 %v633, %v634
    %638 = vrot.lane.b32.xlu0 %v636, 64
    %v639 = vpop.permute.xlu0 %638
    %v641 = vadd.f32 %v635, %v639
    %v642 = vtanh.pop %v641
    %v643 = vmul.f32 %v634, %v642
    %645 = vrot.lane.b32.xlu0 %v643, 64
    %v646 = vpop.permute.xlu0 %645
    %v647 = vrot.slane %v393, 4
    %v648 = vrot.slane %v395, 4
    %v651 = vsel %vm419, %v646, 0
    %653 = vmatprep.subr.mxu0 0.0
    %654 = vmatpush1.msra.mxu0 0.0
    %655 = vmatprep.subr.mxu0 0.0
    %656 = vmatpush1.msra.mxu0 0.0
    %657 = vmatprep.subr.mxu0 0.0
    %658 = vmatpush1.msra.mxu0 0.0
    %659 = vmatprep.subr.mxu0 0.0
    %660 = vmatpush1.msra.mxu0 0.0
    %661 = vmatprep.subr.mxu0 0.0
    %662 = vmatpush1.msra.mxu0 0.0
    %663 = vmatprep.subr.mxu0 0.0
    %664 = vmatpush1.msra.mxu0 0.0
    %665 = vmatprep.subr.mxu0 0.0
    %666 = vmatpush1.msra.mxu0 0.0
    %667 = vmatprep.subr.mxu0 0.0
    %668 = vmatpush1.msra.mxu0 0.0
    %669 = vmatprep.subr.mxu0 %v418
    %670 = vmatpush1.msra.mxu0 %v417
    %671 = vmatprep.subr.mxu0 %v416
    %672 = vmatpush1.msra.mxu0 %v415
    %673 = vmatprep.subr.mxu0 %v414
    %674 = vmatpush1.msra.mxu0 %v413
    %675 = vmatprep.subr.mxu0 %v412
    %676 = vmatpush1.msra.mxu0 %v411
    %677 = vmatprep.subr.mxu0 %v410
    %678 = vmatpush1.msra.mxu0 %v409
    %679 = vmatprep.subr.mxu0 %v408
    %680 = vmatpush1.msra.mxu0 %v407
    %681 = vmatprep.subr.mxu0 %v406
    %682 = vmatpush1.msra.mxu0 %v405
    %683 = vmatprep.subr.mxu0 %v404
    %684 = vmatpush1.msra.mxu0 %v403
    %685 = vmatprep.subr.mxu0 0.0
    %686 = vmatpush2.msra.mxu0 0.0
    %687 = vmatprep.subr.mxu0 0.0
    %688 = vmatpush2.msra.mxu0 0.0
    %689 = vmatprep.subr.mxu0 0.0
    %690 = vmatpush2.msra.mxu0 0.0
    %691 = vmatprep.subr.mxu0 0.0
    %692 = vmatpush2.msra.mxu0 0.0
    %693 = vmatprep.subr.mxu0 0.0
    %694 = vmatpush2.msra.mxu0 0.0
    %695 = vmatprep.subr.mxu0 0.0
    %696 = vmatpush2.msra.mxu0 0.0
    %697 = vmatprep.subr.mxu0 0.0
    %698 = vmatpush2.msra.mxu0 0.0
    %699 = vmatprep.subr.mxu0 0.0
    %700 = vmatpush2.msra.mxu0 0.0
    %701 = vmatprep.subr.mxu0 0.0
    %702 = vmatpush2.msra.mxu0 0.0
    %703 = vmatprep.subr.mxu0 0.0
    %704 = vmatpush2.msra.mxu0 0.0
    %705 = vmatprep.subr.mxu0 0.0
    %706 = vmatpush2.msra.mxu0 0.0
    %707 = vmatprep.subr.mxu0 0.0
    %708 = vmatpush2.msra.mxu0 0.0
    %709 = vmatprep.subr.mxu0 0.0
    %710 = vmatpush2.msra.mxu0 0.0
    %711 = vmatprep.subr.mxu0 0.0
    %712 = vmatpush2.msra.mxu0 0.0
    %713 = vmatprep.subr.mxu0 0.0
    %714 = vmatpush2.msra.mxu0 0.0
    %715 = vmatprep.subr.mxu0 0.0
    %716 = vmatpush2.msra.mxu0 0.0
    %717 = vmatprep.mubr.f32.mxu0 0.0
    %718 = vmatmul.mubr.f32.gmra.mxu0 %v651
    %v719 = vpop.f32.mrf.mxu0
    %v720 = vadd.f32 %v647, %v719
    %v721 = vpop.f32.mrf.mxu0
    %v722 = vadd.f32 %v648, %v721
    %723 = vdwg.mxu0
    %v724 = vrot.slane %v310, 2
    %v725 = vrot.slane %v312, 2
    %v728 = vadd.f32 %v720, %v724
    %v729 = vadd.f32 %v722, %v725
    %v730 = vxor.u32 %v728, 2147483648
    %v731 = vxor.u32 %v729, 2147483648
    %v732 = vmul.f32 %v730, 1.442695
    %v733 = vpow.pop %v732
    %v734 = vmul.f32 %v731, 1.442695
    %v735 = vpow.pop %v734
    %v736 = vadd.f32 %v733, 1.0
    %v737 = vadd.f32 %v735, 1.0
    %v738 = vrcp.pop %v736
    %v739 = vmul.f32 1.0, %v738
    %v740 = vrcp.pop %v737
    %v741 = vmul.f32 1.0, %v740
    %v742 = vmul.f32 %v739, 2.0
    %v743 = vmul.f32 %v741, 2.0
    %v744 = vsub.f32 %v742, 1.0
    %v745 = vsub.f32 %v743, 1.0
    %v746 = vsel %vm211, %v744, %v739
    %v747 = vsel %vm212, %v745, %v741
    %v748 = vmul.f32 %v746, %v641
    %v749 = vmul.f32 %v746, %v747
    %751 = vrot.lane.b32.xlu0 %v749, 64
    %v752 = vpop.permute.xlu0 %751
    %v754 = vadd.f32 %v748, %v752
    %v755 = vtanh.pop %v754
    %v756 = vmul.f32 %v747, %v755
    %758 = vrot.lane.b32.xlu0 %v756, 64
    %v759 = vpop.permute.xlu0 %758
    %v760 = vrot.slane %v393, 6
    %v761 = vrot.slane %v395, 6
    %v764 = vsel %vm419, %v759, 0
    %766 = vmatprep.subr.mxu0 0.0
    %767 = vmatpush1.msra.mxu0 0.0
    %768 = vmatprep.subr.mxu0 0.0
    %769 = vmatpush1.msra.mxu0 0.0
    %770 = vmatprep.subr.mxu0 0.0
    %771 = vmatpush1.msra.mxu0 0.0
    %772 = vmatprep.subr.mxu0 0.0
    %773 = vmatpush1.msra.mxu0 0.0
    %774 = vmatprep.subr.mxu0 0.0
    %775 = vmatpush1.msra.mxu0 0.0
    %776 = vmatprep.subr.mxu0 0.0
    %777 = vmatpush1.msra.mxu0 0.0
    %778 = vmatprep.subr.mxu0 0.0
    %779 = vmatpush1.msra.mxu0 0.0
    %780 = vmatprep.subr.mxu0 0.0
    %781 = vmatpush1.msra.mxu0 0.0
    %782 = vmatprep.subr.mxu0 %v418
    %783 = vmatpush1.msra.mxu0 %v417
    %784 = vmatprep.subr.mxu0 %v416
    %785 = vmatpush1.msra.mxu0 %v415
    %786 = vmatprep.subr.mxu0 %v414
    %787 = vmatpush1.msra.mxu0 %v413
    %788 = vmatprep.subr.mxu0 %v412
    %789 = vmatpush1.msra.mxu0 %v411
    %790 = vmatprep.subr.mxu0 %v410
    %791 = vmatpush1.msra.mxu0 %v409
    %792 = vmatprep.subr.mxu0 %v408
    %793 = vmatpush1.msra.mxu0 %v407
    %794 = vmatprep.subr.mxu0 %v406
    %795 = vmatpush1.msra.mxu0 %v405
    %796 = vmatprep.subr.mxu0 %v404
    %797 = vmatpush1.msra.mxu0 %v403
    %798 = vmatprep.subr.mxu0 0.0
    %799 = vmatpush2.msra.mxu0 0.0
    %800 = vmatprep.subr.mxu0 0.0
    %801 = vmatpush2.msra.mxu0 0.0
    %802 = vmatprep.subr.mxu0 0.0
    %803 = vmatpush2.msra.mxu0 0.0
    %804 = vmatprep.subr.mxu0 0.0
    %805 = vmatpush2.msra.mxu0 0.0
    %806 = vmatprep.subr.mxu0 0.0
    %807 = vmatpush2.msra.mxu0 0.0
    %808 = vmatprep.subr.mxu0 0.0
    %809 = vmatpush2.msra.mxu0 0.0
    %810 = vmatprep.subr.mxu0 0.0
    %811 = vmatpush2.msra.mxu0 0.0
    %812 = vmatprep.subr.mxu0 0.0
    %813 = vmatpush2.msra.mxu0 0.0
    %814 = vmatprep.subr.mxu0 0.0
    %815 = vmatpush2.msra.mxu0 0.0
    %816 = vmatprep.subr.mxu0 0.0
    %817 = vmatpush2.msra.mxu0 0.0
    %818 = vmatprep.subr.mxu0 0.0
    %819 = vmatpush2.msra.mxu0 0.0
    %820 = vmatprep.subr.mxu0 0.0
    %821 = vmatpush2.msra.mxu0 0.0
    %822 = vmatprep.subr.mxu0 0.0
    %823 = vmatpush2.msra.mxu0 0.0
    %824 = vmatprep.subr.mxu0 0.0
    %825 = vmatpush2.msra.mxu0 0.0
    %826 = vmatprep.subr.mxu0 0.0
    %827 = vmatpush2.msra.mxu0 0.0
    %828 = vmatprep.subr.mxu0 0.0
    %829 = vmatpush2.msra.mxu0 0.0
    %830 = vmatprep.mubr.f32.mxu0 0.0
    %831 = vmatmul.mubr.f32.gmra.mxu0 %v764
    %v832 = vpop.f32.mrf.mxu0
    %v833 = vadd.f32 %v760, %v832
    %v834 = vpop.f32.mrf.mxu0
    %v835 = vadd.f32 %v761, %v834
    %836 = vdwg.mxu0
    %v837 = vadd.f32 %v833, %v310
    %v838 = vadd.f32 %v835, %v312
    %v839 = vxor.u32 %v837, 2147483648
    %v840 = vxor.u32 %v838, 2147483648
    %v841 = vmul.f32 %v839, 1.442695
    %v842 = vpow.pop %v841
    %v843 = vmul.f32 %v840, 1.442695
    %v844 = vpow.pop %v843
    %v845 = vadd.f32 %v842, 1.0
    %v846 = vadd.f32 %v844, 1.0
    %v847 = vrcp.pop %v845
    %v848 = vmul.f32 1.0, %v847
    %v849 = vrcp.pop %v846
    %v850 = vmul.f32 1.0, %v849
    %v851 = vmul.f32 %v848, 2.0
    %v852 = vmul.f32 %v850, 2.0
    %v853 = vsub.f32 %v851, 1.0
    %v854 = vsub.f32 %v852, 1.0
    %v855 = vsel %vm211, %v853, %v848
    %v856 = vsel %vm212, %v854, %v850
    %v857 = vmul.f32 %v855, %v754
    %v858 = vmul.f32 %v855, %v856
    %860 = vrot.lane.b32.xlu0 %v858, 64
    %v861 = vpop.permute.xlu0 %860
    %v863 = vadd.f32 %v857, %v861
    %v864 = vtanh.pop %v863
    %v865 = vmul.f32 %v856, %v864
    %867 = vrot.lane.b32.xlu0 %v865, 64
    %v868 = vpop.permute.xlu0 %867
    %v869 = vsel %vm419, %v868, 0
    %871 = vmatprep.subr.mxu0 0.0
    %872 = vmatpush1.msra.mxu0 0.0
    %873 = vmatprep.subr.mxu0 0.0
    %874 = vmatpush1.msra.mxu0 0.0
    %875 = vmatprep.subr.mxu0 0.0
    %876 = vmatpush1.msra.mxu0 0.0
    %877 = vmatprep.subr.mxu0 0.0
    %878 = vmatpush1.msra.mxu0 0.0
    %879 = vmatprep.subr.mxu0 0.0
    %880 = vmatpush1.msra.mxu0 0.0
    %881 = vmatprep.subr.mxu0 0.0
    %882 = vmatpush1.msra.mxu0 0.0
    %883 = vmatprep.subr.mxu0 0.0
    %884 = vmatpush1.msra.mxu0 0.0
    %885 = vmatprep.subr.mxu0 0.0
    %886 = vmatpush1.msra.mxu0 0.0
    %887 = vmatprep.subr.mxu0 %v418
    %888 = vmatpush1.msra.mxu0 %v417
    %889 = vmatprep.subr.mxu0 %v416
    %890 = vmatpush1.msra.mxu0 %v415
    %891 = vmatprep.subr.mxu0 %v414
    %892 = vmatpush1.msra.mxu0 %v413
    %893 = vmatprep.subr.mxu0 %v412
    %894 = vmatpush1.msra.mxu0 %v411
    %895 = vmatprep.subr.mxu0 %v410
    %896 = vmatpush1.msra.mxu0 %v409
    %897 = vmatprep.subr.mxu0 %v408
    %898 = vmatpush1.msra.mxu0 %v407
    %899 = vmatprep.subr.mxu0 %v406
    %900 = vmatpush1.msra.mxu0 %v405
    %901 = vmatprep.subr.mxu0 %v404
    %902 = vmatpush1.msra.mxu0 %v403
    %903 = vmatprep.subr.mxu0 0.0
    %904 = vmatpush2.msra.mxu0 0.0
    %905 = vmatprep.subr.mxu0 0.0
    %906 = vmatpush2.msra.mxu0 0.0
    %907 = vmatprep.subr.mxu0 0.0
    %908 = vmatpush2.msra.mxu0 0.0
    %909 = vmatprep.subr.mxu0 0.0
    %910 = vmatpush2.msra.mxu0 0.0
    %911 = vmatprep.subr.mxu0 0.0
    %912 = vmatpush2.msra.mxu0 0.0
    %913 = vmatprep.subr.mxu0 0.0
    %914 = vmatpush2.msra.mxu0 0.0
    %915 = vmatprep.subr.mxu0 0.0
    %916 = vmatpush2.msra.mxu0 0.0
    %917 = vmatprep.subr.mxu0 0.0
    %918 = vmatpush2.msra.mxu0 0.0
    %919 = vmatprep.subr.mxu0 0.0
    %920 = vmatpush2.msra.mxu0 0.0
    %921 = vmatprep.subr.mxu0 0.0
    %922 = vmatpush2.msra.mxu0 0.0
    %923 = vmatprep.subr.mxu0 0.0
    %924 = vmatpush2.msra.mxu0 0.0
    %925 = vmatprep.subr.mxu0 0.0
    %926 = vmatpush2.msra.mxu0 0.0
    %927 = vmatprep.subr.mxu0 0.0
    %928 = vmatpush2.msra.mxu0 0.0
    %929 = vmatprep.subr.mxu0 0.0
    %930 = vmatpush2.msra.mxu0 0.0
    %931 = vmatprep.subr.mxu0 0.0
    %932 = vmatpush2.msra.mxu0 0.0
    %933 = vmatprep.subr.mxu0 0.0
    %934 = vmatpush2.msra.mxu0 0.0
    %935 = vmatprep.mubr.f32.mxu0 0.0
    %936 = vmatmul.mubr.f32.gmra.mxu0 %v869
    %v937 = vpop.f32.mrf.mxu0
    %v938 = vadd.f32 %v399, %v937
    %v939 = vpop.f32.mrf.mxu0
    %v940 = vadd.f32 %v401, %v939
    %941 = vdwg.mxu0
    %v944 = vrot.slane %v304, 6
    %v945 = vrot.slane %v306, 6
    %v948 = vadd.f32 %v938, %v944
    %v949 = vadd.f32 %v940, %v945
    %v950 = vxor.u32 %v948, 2147483648
    %v951 = vxor.u32 %v949, 2147483648
    %v952 = vmul.f32 %v950, 1.442695
    %v953 = vpow.pop %v952
    %v954 = vmul.f32 %v951, 1.442695
    %v955 = vpow.pop %v954
    %v956 = vadd.f32 %v953, 1.0
    %v957 = vadd.f32 %v955, 1.0
    %v958 = vrcp.pop %v956
    %v959 = vmul.f32 1.0, %v958
    %v960 = vrcp.pop %v957
    %v961 = vmul.f32 1.0, %v960
    %v962 = vmul.f32 %v959, 2.0
    %v963 = vmul.f32 %v961, 2.0
    %v964 = vsub.f32 %v962, 1.0
    %v965 = vsub.f32 %v963, 1.0
    %v966 = vsel %vm211, %v964, %v959
    %v967 = vsel %vm212, %v965, %v961
    %v968 = vmul.f32 %v966, %v863
    %v969 = vmul.f32 %v966, %v967
    %971 = vrot.lane.b32.xlu0 %v969, 64
    %v972 = vpop.permute.xlu0 %971
    %v974 = vadd.f32 %v968, %v972
    %v975 = vtanh.pop %v974
    %v976 = vmul.f32 %v967, %v975
    %978 = vrot.lane.b32.xlu0 %v976, 64
    %v979 = vpop.permute.xlu0 %978
    %v982 = vrot.slane %v399, 2
    %v983 = vrot.slane %v401, 2
    %v986 = vsel %vm419, %v979, 0
    %988 = vmatprep.subr.mxu0 0.0
    %989 = vmatpush1.msra.mxu0 0.0
    %990 = vmatprep.subr.mxu0 0.0
    %991 = vmatpush1.msra.mxu0 0.0
    %992 = vmatprep.subr.mxu0 0.0
    %993 = vmatpush1.msra.mxu0 0.0
    %994 = vmatprep.subr.mxu0 0.0
    %995 = vmatpush1.msra.mxu0 0.0
    %996 = vmatprep.subr.mxu0 0.0
    %997 = vmatpush1.msra.mxu0 0.0
    %998 = vmatprep.subr.mxu0 0.0
    %999 = vmatpush1.msra.mxu0 0.0
    %1000 = vmatprep.subr.mxu0 0.0
    %1001 = vmatpush1.msra.mxu0 0.0
    %1002 = vmatprep.subr.mxu0 0.0
    %1003 = vmatpush1.msra.mxu0 0.0
    %1004 = vmatprep.subr.mxu0 %v418
    %1005 = vmatpush1.msra.mxu0 %v417
    %1006 = vmatprep.subr.mxu0 %v416
    %1007 = vmatpush1.msra.mxu0 %v415
    %1008 = vmatprep.subr.mxu0 %v414
    %1009 = vmatpush1.msra.mxu0 %v413
    %1010 = vmatprep.subr.mxu0 %v412
    %1011 = vmatpush1.msra.mxu0 %v411
    %1012 = vmatprep.subr.mxu0 %v410
    %1013 = vmatpush1.msra.mxu0 %v409
    %1014 = vmatprep.subr.mxu0 %v408
    %1015 = vmatpush1.msra.mxu0 %v407
    %1016 = vmatprep.subr.mxu0 %v406
    %1017 = vmatpush1.msra.mxu0 %v405
    %1018 = vmatprep.subr.mxu0 %v404
    %1019 = vmatpush1.msra.mxu0 %v403
    %1020 = vmatprep.subr.mxu0 0.0
    %1021 = vmatpush2.msra.mxu0 0.0
    %1022 = vmatprep.subr.mxu0 0.0
    %1023 = vmatpush2.msra.mxu0 0.0
    %1024 = vmatprep.subr.mxu0 0.0
    %1025 = vmatpush2.msra.mxu0 0.0
    %1026 = vmatprep.subr.mxu0 0.0
    %1027 = vmatpush2.msra.mxu0 0.0
    %1028 = vmatprep.subr.mxu0 0.0
    %1029 = vmatpush2.msra.mxu0 0.0
    %1030 = vmatprep.subr.mxu0 0.0
    %1031 = vmatpush2.msra.mxu0 0.0
    %1032 = vmatprep.subr.mxu0 0.0
    %1033 = vmatpush2.msra.mxu0 0.0
    %1034 = vmatprep.subr.mxu0 0.0
    %1035 = vmatpush2.msra.mxu0 0.0
    %1036 = vmatprep.subr.mxu0 0.0
    %1037 = vmatpush2.msra.mxu0 0.0
    %1038 = vmatprep.subr.mxu0 0.0
    %1039 = vmatpush2.msra.mxu0 0.0
    %1040 = vmatprep.subr.mxu0 0.0
    %1041 = vmatpush2.msra.mxu0 0.0
    %1042 = vmatprep.subr.mxu0 0.0
    %1043 = vmatpush2.msra.mxu0 0.0
    %1044 = vmatprep.subr.mxu0 0.0
    %1045 = vmatpush2.msra.mxu0 0.0
    %1046 = vmatprep.subr.mxu0 0.0
    %1047 = vmatpush2.msra.mxu0 0.0
    %1048 = vmatprep.subr.mxu0 0.0
    %1049 = vmatpush2.msra.mxu0 0.0
    %1050 = vmatprep.subr.mxu0 0.0
    %1051 = vmatpush2.msra.mxu0 0.0
    %1052 = vmatprep.mubr.f32.mxu0 0.0
    %1053 = vmatmul.mubr.f32.gmra.mxu0 %v986
    %v1054 = vpop.f32.mrf.mxu0
    %v1055 = vadd.f32 %v982, %v1054
    %v1056 = vpop.f32.mrf.mxu0
    %v1057 = vadd.f32 %v983, %v1056
    %1058 = vdwg.mxu0
    %v1059 = vrot.slane %v304, 4
    %v1060 = vrot.slane %v306, 4
    %v1063 = vadd.f32 %v1055, %v1059
    %v1064 = vadd.f32 %v1057, %v1060
    %v1065 = vxor.u32 %v1063, 2147483648
    %v1066 = vxor.u32 %v1064, 2147483648
    %v1067 = vmul.f32 %v1065, 1.442695
    %v1068 = vpow.pop %v1067
    %v1069 = vmul.f32 %v1066, 1.442695
    %v1070 = vpow.pop %v1069
    %v1071 = vadd.f32 %v1068, 1.0
    %v1072 = vadd.f32 %v1070, 1.0
    %v1073 = vrcp.pop %v1071
    %v1074 = vmul.f32 1.0, %v1073
    %v1075 = vrcp.pop %v1072
    %v1076 = vmul.f32 1.0, %v1075
    %v1077 = vmul.f32 %v1074, 2.0
    %v1078 = vmul.f32 %v1076, 2.0
    %v1079 = vsub.f32 %v1077, 1.0
    %v1080 = vsub.f32 %v1078, 1.0
    %v1081 = vsel %vm211, %v1079, %v1074
    %v1082 = vsel %vm212, %v1080, %v1076
    %v1083 = vmul.f32 %v1081, %v974
    %v1084 = vmul.f32 %v1081, %v1082
    %1086 = vrot.lane.b32.xlu0 %v1084, 64
    %v1087 = vpop.permute.xlu0 %1086
    %v1089 = vadd.f32 %v1083, %v1087
    %v1090 = vtanh.pop %v1089
    %v1091 = vmul.f32 %v1082, %v1090
    %1093 = vrot.lane.b32.xlu0 %v1091, 64
    %v1094 = vpop.permute.xlu0 %1093
    %v1095 = vrot.slane %v399, 4
    %v1096 = vrot.slane %v401, 4
    %v1099 = vsel %vm419, %v1094, 0
    %1101 = vmatprep.subr.mxu0 0.0
    %1102 = vmatpush1.msra.mxu0 0.0
    %1103 = vmatprep.subr.mxu0 0.0
    %1104 = vmatpush1.msra.mxu0 0.0
    %1105 = vmatprep.subr.mxu0 0.0
    %1106 = vmatpush1.msra.mxu0 0.0
    %1107 = vmatprep.subr.mxu0 0.0
    %1108 = vmatpush1.msra.mxu0 0.0
    %1109 = vmatprep.subr.mxu0 0.0
    %1110 = vmatpush1.msra.mxu0 0.0
    %1111 = vmatprep.subr.mxu0 0.0
    %1112 = vmatpush1.msra.mxu0 0.0
    %1113 = vmatprep.subr.mxu0 0.0
    %1114 = vmatpush1.msra.mxu0 0.0
    %1115 = vmatprep.subr.mxu0 0.0
    %1116 = vmatpush1.msra.mxu0 0.0
    %1117 = vmatprep.subr.mxu0 %v418
    %1118 = vmatpush1.msra.mxu0 %v417
    %1119 = vmatprep.subr.mxu0 %v416
    %1120 = vmatpush1.msra.mxu0 %v415
    %1121 = vmatprep.subr.mxu0 %v414
    %1122 = vmatpush1.msra.mxu0 %v413
    %1123 = vmatprep.subr.mxu0 %v412
    %1124 = vmatpush1.msra.mxu0 %v411
    %1125 = vmatprep.subr.mxu0 %v410
    %1126 = vmatpush1.msra.mxu0 %v409
    %1127 = vmatprep.subr.mxu0 %v408
    %1128 = vmatpush1.msra.mxu0 %v407
    %1129 = vmatprep.subr.mxu0 %v406
    %1130 = vmatpush1.msra.mxu0 %v405
    %1131 = vmatprep.subr.mxu0 %v404
    %1132 = vmatpush1.msra.mxu0 %v403
    %1133 = vmatprep.subr.mxu0 0.0
    %1134 = vmatpush2.msra.mxu0 0.0
    %1135 = vmatprep.subr.mxu0 0.0
    %1136 = vmatpush2.msra.mxu0 0.0
    %1137 = vmatprep.subr.mxu0 0.0
    %1138 = vmatpush2.msra.mxu0 0.0
    %1139 = vmatprep.subr.mxu0 0.0
    %1140 = vmatpush2.msra.mxu0 0.0
    %1141 = vmatprep.subr.mxu0 0.0
    %1142 = vmatpush2.msra.mxu0 0.0
    %1143 = vmatprep.subr.mxu0 0.0
    %1144 = vmatpush2.msra.mxu0 0.0
    %1145 = vmatprep.subr.mxu0 0.0
    %1146 = vmatpush2.msra.mxu0 0.0
    %1147 = vmatprep.subr.mxu0 0.0
    %1148 = vmatpush2.msra.mxu0 0.0
    %1149 = vmatprep.subr.mxu0 0.0
    %1150 = vmatpush2.msra.mxu0 0.0
    %1151 = vmatprep.subr.mxu0 0.0
    %1152 = vmatpush2.msra.mxu0 0.0
    %1153 = vmatprep.subr.mxu0 0.0
    %1154 = vmatpush2.msra.mxu0 0.0
    %1155 = vmatprep.subr.mxu0 0.0
    %1156 = vmatpush2.msra.mxu0 0.0
    %1157 = vmatprep.subr.mxu0 0.0
    %1158 = vmatpush2.msra.mxu0 0.0
    %1159 = vmatprep.subr.mxu0 0.0
    %1160 = vmatpush2.msra.mxu0 0.0
    %1161 = vmatprep.subr.mxu0 0.0
    %1162 = vmatpush2.msra.mxu0 0.0
    %1163 = vmatprep.subr.mxu0 0.0
    %1164 = vmatpush2.msra.mxu0 0.0
    %1165 = vmatprep.mubr.f32.mxu0 0.0
    %1166 = vmatmul.mubr.f32.gmra.mxu0 %v1099
    %v1167 = vpop.f32.mrf.mxu0
    %v1168 = vadd.f32 %v1095, %v1167
    %v1169 = vpop.f32.mrf.mxu0
    %v1170 = vadd.f32 %v1096, %v1169
    %1171 = vdwg.mxu0
    %v1172 = vrot.slane %v304, 2
    %v1173 = vrot.slane %v306, 2
    %v1176 = vadd.f32 %v1168, %v1172
    %v1177 = vadd.f32 %v1170, %v1173
    %v1178 = vxor.u32 %v1176, 2147483648
    %v1179 = vxor.u32 %v1177, 2147483648
    %v1180 = vmul.f32 %v1178, 1.442695
    %v1181 = vpow.pop %v1180
    %v1182 = vmul.f32 %v1179, 1.442695
    %v1183 = vpow.pop %v1182
    %v1184 = vadd.f32 %v1181, 1.0
    %v1185 = vadd.f32 %v1183, 1.0
    %v1186 = vrcp.pop %v1184
    %v1187 = vmul.f32 1.0, %v1186
    %v1188 = vrcp.pop %v1185
    %v1189 = vmul.f32 1.0, %v1188
    %v1190 = vmul.f32 %v1187, 2.0
    %v1191 = vmul.f32 %v1189, 2.0
    %v1192 = vsub.f32 %v1190, 1.0
    %v1193 = vsub.f32 %v1191, 1.0
    %v1194 = vsel %vm211, %v1192, %v1187
    %v1195 = vsel %vm212, %v1193, %v1189
    %v1196 = vmul.f32 %v1194, %v1089
    %v1197 = vmul.f32 %v1194, %v1195
    %1199 = vrot.lane.b32.xlu0 %v1197, 64
    %v1200 = vpop.permute.xlu0 %1199
    %v1202 = vadd.f32 %v1196, %v1200
    %v1203 = vtanh.pop %v1202
    %v1204 = vmul.f32 %v1195, %v1203
    %1206 = vrot.lane.b32.xlu0 %v1204, 64
    %v1207 = vpop.permute.xlu0 %1206
    %v1208 = vrot.slane %v399, 6
    %v1209 = vrot.slane %v401, 6
    %v1212 = vsel %vm419, %v1207, 0
    %1214 = vmatprep.subr.mxu0 0.0
    %1215 = vmatpush1.msra.mxu0 0.0
    %1216 = vmatprep.subr.mxu0 0.0
    %1217 = vmatpush1.msra.mxu0 0.0
    %1218 = vmatprep.subr.mxu0 0.0
    %1219 = vmatpush1.msra.mxu0 0.0
    %1220 = vmatprep.subr.mxu0 0.0
    %1221 = vmatpush1.msra.mxu0 0.0
    %1222 = vmatprep.subr.mxu0 0.0
    %1223 = vmatpush1.msra.mxu0 0.0
    %1224 = vmatprep.subr.mxu0 0.0
    %1225 = vmatpush1.msra.mxu0 0.0
    %1226 = vmatprep.subr.mxu0 0.0
    %1227 = vmatpush1.msra.mxu0 0.0
    %1228 = vmatprep.subr.mxu0 0.0
    %1229 = vmatpush1.msra.mxu0 0.0
    %1230 = vmatprep.subr.mxu0 %v418
    %1231 = vmatpush1.msra.mxu0 %v417
    %1232 = vmatprep.subr.mxu0 %v416
    %1233 = vmatpush1.msra.mxu0 %v415
    %1234 = vmatprep.subr.mxu0 %v414
    %1235 = vmatpush1.msra.mxu0 %v413
    %1236 = vmatprep.subr.mxu0 %v412
    %1237 = vmatpush1.msra.mxu0 %v411
    %1238 = vmatprep.subr.mxu0 %v410
    %1239 = vmatpush1.msra.mxu0 %v409
    %1240 = vmatprep.subr.mxu0 %v408
    %1241 = vmatpush1.msra.mxu0 %v407
    %1242 = vmatprep.subr.mxu0 %v406
    %1243 = vmatpush1.msra.mxu0 %v405
    %1244 = vmatprep.subr.mxu0 %v404
    %1245 = vmatpush1.msra.mxu0 %v403
    %1246 = vmatprep.subr.mxu0 0.0
    %1247 = vmatpush2.msra.mxu0 0.0
    %1248 = vmatprep.subr.mxu0 0.0
    %1249 = vmatpush2.msra.mxu0 0.0
    %1250 = vmatprep.subr.mxu0 0.0
    %1251 = vmatpush2.msra.mxu0 0.0
    %1252 = vmatprep.subr.mxu0 0.0
    %1253 = vmatpush2.msra.mxu0 0.0
    %1254 = vmatprep.subr.mxu0 0.0
    %1255 = vmatpush2.msra.mxu0 0.0
    %1256 = vmatprep.subr.mxu0 0.0
    %1257 = vmatpush2.msra.mxu0 0.0
    %1258 = vmatprep.subr.mxu0 0.0
    %1259 = vmatpush2.msra.mxu0 0.0
    %1260 = vmatprep.subr.mxu0 0.0
    %1261 = vmatpush2.msra.mxu0 0.0
    %1262 = vmatprep.subr.mxu0 0.0
    %1263 = vmatpush2.msra.mxu0 0.0
    %1264 = vmatprep.subr.mxu0 0.0
    %1265 = vmatpush2.msra.mxu0 0.0
    %1266 = vmatprep.subr.mxu0 0.0
    %1267 = vmatpush2.msra.mxu0 0.0
    %1268 = vmatprep.subr.mxu0 0.0
    %1269 = vmatpush2.msra.mxu0 0.0
    %1270 = vmatprep.subr.mxu0 0.0
    %1271 = vmatpush2.msra.mxu0 0.0
    %1272 = vmatprep.subr.mxu0 0.0
    %1273 = vmatpush2.msra.mxu0 0.0
    %1274 = vmatprep.subr.mxu0 0.0
    %1275 = vmatpush2.msra.mxu0 0.0
    %1276 = vmatprep.subr.mxu0 0.0
    %1277 = vmatpush2.msra.mxu0 0.0
    %1278 = vmatprep.mubr.f32.mxu0 0.0
    %1279 = vmatmul.mubr.f32.gmra.mxu0 %v1212
    %v1280 = vpop.f32.mrf.mxu0
    %v1281 = vadd.f32 %v1208, %v1280
    %v1282 = vpop.f32.mrf.mxu0
    %v1283 = vadd.f32 %v1209, %v1282
    %1284 = vdwg.mxu0
    %v1285 = vadd.f32 %v1281, %v304
    %v1286 = vadd.f32 %v1283, %v306
    %v1287 = vxor.u32 %v1285, 2147483648
    %v1288 = vxor.u32 %v1286, 2147483648
    %v1289 = vmul.f32 %v1287, 1.442695
    %v1290 = vpow.pop %v1289
    %v1291 = vmul.f32 %v1288, 1.442695
    %v1292 = vpow.pop %v1291
    %v1293 = vadd.f32 %v1290, 1.0
    %v1294 = vadd.f32 %v1292, 1.0
    %v1295 = vrcp.pop %v1293
    %v1296 = vmul.f32 1.0, %v1295
    %v1297 = vrcp.pop %v1294
    %v1298 = vmul.f32 1.0, %v1297
    %v1299 = vmul.f32 %v1296, 2.0
    %v1300 = vmul.f32 %v1298, 2.0
    %v1301 = vsub.f32 %v1299, 1.0
    %v1302 = vsub.f32 %v1300, 1.0
    %v1303 = vsel %vm211, %v1301, %v1296
    %v1304 = vsel %vm212, %v1302, %v1298
    %v1305 = vmul.f32 %v1303, %v1202
    %v1306 = vmul.f32 %v1303, %v1304
    %1308 = vrot.lane.b32.xlu0 %v1306, 64
    %v1309 = vpop.permute.xlu0 %1308
    %v1311 = vadd.f32 %v1305, %v1309
    %v1312 = vtanh.pop %v1311
    %v1313 = vmul.f32 %v1304, %v1312
    %1316 = vrot.lane.b32.xlu0 %v1313, 64
    %v1317 = vpop.permute.xlu0 %1316
    %v1319 = vsel %vm213, %v531, %v1317
    %v1322 = vsel %vm213, %v646, %v1207
    %v1325 = vsel %vm213, %v759, %v1094
    %v1328 = vsel %vm213, %v868, %v979
    %v1329 = vsel %vm213, %v979, %v868
    %v1330 = vsel %vm213, %v1094, %v759
    %v1331 = vsel %vm213, %v1207, %v646
    %v1332 = vsel %vm213, %v1317, %v531
    %v1334 = vrot.slane %v1322, 6
    %v1337 = vrot.slane %v1325, 4
    %v1340 = vrot.slane %v1328, 2
    %v1343 = vrot.slane %v1330, 6
    %v1346 = vrot.slane %v1331, 4
    %v1349 = vrot.slane %v1332, 2
    %v1351 = vsel %vm127, %v1319, %v1334
    %vm1352 = vcmask 1043456
    %v1353 = vsel %vm1352, %v1351, %v1337
    %vm1354 = vcmask 1045504
    %v1355 = vsel %vm1354, %v1353, %v1340
    %v1356 = vsel %vm127, %v1329, %v1343
    %v1357 = vsel %vm1352, %v1356, %v1346
    %v1358 = vsel %vm1354, %v1357, %v1349
    %v1359 = vld [vmem:[#allocation5] sm:$0xff]
    %v1360 = vld [vmem:[#allocation5 + $0x8] sm:$0xff]
    %v1361 = vld [vmem:[#allocation5 + $0x10] sm:$0xff]
    %v1362 = vld [vmem:[#allocation5 + $0x18] sm:$0xff]
    %v1363 = vld [vmem:[#allocation5 + $0x20] sm:$0xff]
    %v1364 = vld [vmem:[#allocation5 + $0x28] sm:$0xff]
    %v1365 = vld [vmem:[#allocation5 + $0x30] sm:$0xff]
    %v1366 = vld [vmem:[#allocation5 + $0x38] sm:$0xff]
    %v1367 = vld [vmem:[#allocation5 + $0x40] sm:$0xff]
    %v1368 = vld [vmem:[#allocation5 + $0x48] sm:$0xff]
    %v1369 = vld [vmem:[#allocation5 + $0x50] sm:$0xff]
    %v1370 = vld [vmem:[#allocation5 + $0x58] sm:$0xff]
    %v1371 = vld [vmem:[#allocation5 + $0x60] sm:$0xff]
    %v1372 = vld [vmem:[#allocation5 + $0x68] sm:$0xff]
    %v1373 = vld [vmem:[#allocation5 + $0x70] sm:$0xff]
    %v1374 = vld [vmem:[#allocation5 + $0x78] sm:$0xff]
    %v1375 = vld [vmem:[#allocation7] sm:$0xff]
    %v1376 = vld [vmem:[#allocation7 + $0x8] sm:$0xff]
    %v1377 = vld [vmem:[#allocation7 + $0x10] sm:$0xff]
    %v1378 = vld [vmem:[#allocation7 + $0x18] sm:$0xff]
    %v1379 = vld [vmem:[#allocation7 + $0x20] sm:$0xff]
    %v1380 = vld [vmem:[#allocation7 + $0x28] sm:$0xff]
    %v1381 = vld [vmem:[#allocation7 + $0x30] sm:$0xff]
    %v1382 = vld [vmem:[#allocation7 + $0x38] sm:$0xff]
    %v1383 = vld [vmem:[#allocation7 + $0x40] sm:$0xff]
    %v1384 = vld [vmem:[#allocation7 + $0x48] sm:$0xff]
    %v1385 = vld [vmem:[#allocation7 + $0x50] sm:$0xff]
    %v1386 = vld [vmem:[#allocation7 + $0x58] sm:$0xff]
    %v1387 = vld [vmem:[#allocation7 + $0x60] sm:$0xff]
    %v1388 = vld [vmem:[#allocation7 + $0x68] sm:$0xff]
    %v1389 = vld [vmem:[#allocation7 + $0x70] sm:$0xff]
    %v1390 = vld [vmem:[#allocation7 + $0x78] sm:$0xff]
    %v1392 = vsel %vm419, %v1355, 0
    %v1395 = vsel %vm419, %v1358, 0
    %1397 = vmatprep.subr.mxu0 0.0
    %1398 = vmatpush1.msra.mxu0 0.0
    %1399 = vmatprep.subr.mxu0 0.0
    %1400 = vmatpush1.msra.mxu0 0.0
    %1401 = vmatprep.subr.mxu0 0.0
    %1402 = vmatpush1.msra.mxu0 0.0
    %1403 = vmatprep.subr.mxu0 0.0
    %1404 = vmatpush1.msra.mxu0 0.0
    %1405 = vmatprep.subr.mxu0 0.0
    %1406 = vmatpush1.msra.mxu0 0.0
    %1407 = vmatprep.subr.mxu0 0.0
    %1408 = vmatpush1.msra.mxu0 0.0
    %1409 = vmatprep.subr.mxu0 0.0
    %1410 = vmatpush1.msra.mxu0 0.0
    %1411 = vmatprep.subr.mxu0 0.0
    %1412 = vmatpush1.msra.mxu0 0.0
    %1413 = vmatprep.subr.mxu0 %v1390
    %1414 = vmatpush1.msra.mxu0 %v1389
    %1415 = vmatprep.subr.mxu0 %v1388
    %1416 = vmatpush1.msra.mxu0 %v1387
    %1417 = vmatprep.subr.mxu0 %v1386
    %1418 = vmatpush1.msra.mxu0 %v1385
    %1419 = vmatprep.subr.mxu0 %v1384
    %1420 = vmatpush1.msra.mxu0 %v1383
    %1421 = vmatprep.subr.mxu0 %v1382
    %1422 = vmatpush1.msra.mxu0 %v1381
    %1423 = vmatprep.subr.mxu0 %v1380
    %1424 = vmatpush1.msra.mxu0 %v1379
    %1425 = vmatprep.subr.mxu0 %v1378
    %1426 = vmatpush1.msra.mxu0 %v1377
    %1427 = vmatprep.subr.mxu0 %v1376
    %1428 = vmatpush1.msra.mxu0 %v1375
    %1429 = vmatprep.subr.mxu0 0.0
    %1430 = vmatpush2.msra.mxu0 0.0
    %1431 = vmatprep.subr.mxu0 0.0
    %1432 = vmatpush2.msra.mxu0 0.0
    %1433 = vmatprep.subr.mxu0 0.0
    %1434 = vmatpush2.msra.mxu0 0.0
    %1435 = vmatprep.subr.mxu0 0.0
    %1436 = vmatpush2.msra.mxu0 0.0
    %1437 = vmatprep.subr.mxu0 0.0
    %1438 = vmatpush2.msra.mxu0 0.0
    %1439 = vmatprep.subr.mxu0 0.0
    %1440 = vmatpush2.msra.mxu0 0.0
    %1441 = vmatprep.subr.mxu0 0.0
    %1442 = vmatpush2.msra.mxu0 0.0
    %1443 = vmatprep.subr.mxu0 0.0
    %1444 = vmatpush2.msra.mxu0 0.0
    %1445 = vmatprep.subr.mxu0 0.0
    %1446 = vmatpush2.msra.mxu0 0.0
    %1447 = vmatprep.subr.mxu0 0.0
    %1448 = vmatpush2.msra.mxu0 0.0
    %1449 = vmatprep.subr.mxu0 0.0
    %1450 = vmatpush2.msra.mxu0 0.0
    %1451 = vmatprep.subr.mxu0 0.0
    %1452 = vmatpush2.msra.mxu0 0.0
    %1453 = vmatprep.subr.mxu0 0.0
    %1454 = vmatpush2.msra.mxu0 0.0
    %1455 = vmatprep.subr.mxu0 0.0
    %1456 = vmatpush2.msra.mxu0 0.0
    %1457 = vmatprep.subr.mxu0 0.0
    %1458 = vmatpush2.msra.mxu0 0.0
    %1459 = vmatprep.subr.mxu0 0.0
    %1460 = vmatpush2.msra.mxu0 0.0
    %1461 = vmatprep.mubr.f32.mxu0 0.0
    %1462 = vmatmul.mubr.f32.gmra.mxu0 %v1392
    %v1463 = vpop.f32.mrf.mxu0
    %v1464 = vadd.f32 0.0, %v1463
    %v1465 = vpop.f32.mrf.mxu0
    %v1466 = vadd.f32 0.0, %v1465
    %1467 = vmatprep.mubr.f32.mxu0 0.0
    %1468 = vmatmul.mubr.f32.gmra.mxu0 %v1395
    %v1469 = vpop.f32.mrf.mxu0
    %v1470 = vadd.f32 0.0, %v1469
    %v1471 = vpop.f32.mrf.mxu0
    %v1472 = vadd.f32 0.0, %v1471
    %1473 = vdwg.mxu0
    %v1474 = vld [vmem:[%s9] sm:$0x3]
    %v1476 = vlaneseq
    %v1477 = vshrl.u32 %v1476, 7
    %v1478 = vsub.s32 0, %v1477
    %v1479 = vrot.slane %v1474, %v1478
    %v1480 = vlaneseq
    %v1481 = vshrl.u32 %v1480, 7
    %v1482 = vsub.s32 1, %v1481
    %v1483 = vrot.slane %v1474, %v1482
    %1486 = vmatprep.subr.mxu0 0.0
    %1487 = vmatpush1.msra.mxu0 0.0
    %1488 = vmatprep.subr.mxu0 0.0
    %1489 = vmatpush1.msra.mxu0 0.0
    %1490 = vmatprep.subr.mxu0 0.0
    %1491 = vmatpush1.msra.mxu0 0.0
    %1492 = vmatprep.subr.mxu0 0.0
    %1493 = vmatpush1.msra.mxu0 0.0
    %1494 = vmatprep.subr.mxu0 0.0
    %1495 = vmatpush1.msra.mxu0 0.0
    %1496 = vmatprep.subr.mxu0 0.0
    %1497 = vmatpush1.msra.mxu0 0.0
    %1498 = vmatprep.subr.mxu0 0.0
    %1499 = vmatpush1.msra.mxu0 0.0
    %1500 = vmatprep.subr.mxu0 0.0
    %1501 = vmatpush1.msra.mxu0 0.0
    %1502 = vmatprep.subr.mxu0 %v1374
    %1503 = vmatpush1.msra.mxu0 %v1373
    %1504 = vmatprep.subr.mxu0 %v1372
    %1505 = vmatpush1.msra.mxu0 %v1371
    %1506 = vmatprep.subr.mxu0 %v1370
    %1507 = vmatpush1.msra.mxu0 %v1369
    %1508 = vmatprep.subr.mxu0 %v1368
    %1509 = vmatpush1.msra.mxu0 %v1367
    %1510 = vmatprep.subr.mxu0 %v1366
    %1511 = vmatpush1.msra.mxu0 %v1365
    %1512 = vmatprep.subr.mxu0 %v1364
    %1513 = vmatpush1.msra.mxu0 %v1363
    %1514 = vmatprep.subr.mxu0 %v1362
    %1515 = vmatpush1.msra.mxu0 %v1361
    %1516 = vmatprep.subr.mxu0 %v1360
    %1517 = vmatpush1.msra.mxu0 %v1359
    %1518 = vmatprep.subr.mxu0 0.0
    %1519 = vmatpush2.msra.mxu0 0.0
    %1520 = vmatprep.subr.mxu0 0.0
    %1521 = vmatpush2.msra.mxu0 0.0
    %1522 = vmatprep.subr.mxu0 0.0
    %1523 = vmatpush2.msra.mxu0 0.0
    %1524 = vmatprep.subr.mxu0 0.0
    %1525 = vmatpush2.msra.mxu0 0.0
    %1526 = vmatprep.subr.mxu0 0.0
    %1527 = vmatpush2.msra.mxu0 0.0
    %1528 = vmatprep.subr.mxu0 0.0
    %1529 = vmatpush2.msra.mxu0 0.0
    %1530 = vmatprep.subr.mxu0 0.0
    %1531 = vmatpush2.msra.mxu0 0.0
    %1532 = vmatprep.subr.mxu0 0.0
    %1533 = vmatpush2.msra.mxu0 0.0
    %1534 = vmatprep.subr.mxu0 0.0
    %1535 = vmatpush2.msra.mxu0 0.0
    %1536 = vmatprep.subr.mxu0 0.0
    %1537 = vmatpush2.msra.mxu0 0.0
    %1538 = vmatprep.subr.mxu0 0.0
    %1539 = vmatpush2.msra.mxu0 0.0
    %1540 = vmatprep.subr.mxu0 0.0
    %1541 = vmatpush2.msra.mxu0 0.0
    %1542 = vmatprep.subr.mxu0 0.0
    %1543 = vmatpush2.msra.mxu0 0.0
    %1544 = vmatprep.subr.mxu0 0.0
    %1545 = vmatpush2.msra.mxu0 0.0
    %1546 = vmatprep.subr.mxu0 0.0
    %1547 = vmatpush2.msra.mxu0 0.0
    %1548 = vmatprep.subr.mxu0 0.0
    %1549 = vmatpush2.msra.mxu0 0.0
    %1550 = vmatprep.mubr.f32.mxu0 0.0
    %1551 = vmatmul.mubr.f32.gmra.mxu0 %v1392
    %v1552 = vpop.f32.mrf.mxu0
    %v1553 = vadd.f32 %v1479, %v1552
    %v1554 = vpop.f32.mrf.mxu0
    %v1555 = vadd.f32 %v1483, %v1554
    %1556 = vmatprep.mubr.f32.mxu0 0.0
    %1557 = vmatmul.mubr.f32.gmra.mxu0 %v1395
    %v1558 = vpop.f32.mrf.mxu0
    %v1559 = vadd.f32 %v1479, %v1558
    %v1560 = vpop.f32.mrf.mxu0
    %v1561 = vadd.f32 %v1483, %v1560
    %1562 = vdwg.mxu0
    %v1563 = vld [vmem:[#allocation8] sm:$0xff]
    %v1564 = vld [vmem:[#allocation8 + $0x8] sm:$0xff]
    %v1565 = vld [vmem:[#allocation8 + $0x10] sm:$0xff]
    %v1566 = vld [vmem:[#allocation8 + $0x18] sm:$0xff]
    %v1567 = vld [vmem:[#allocation8 + $0x20] sm:$0xff]
    %v1568 = vld [vmem:[#allocation8 + $0x28] sm:$0xff]
    %v1569 = vld [vmem:[#allocation8 + $0x30] sm:$0xff]
    %v1570 = vld [vmem:[#allocation8 + $0x38] sm:$0xff]
    %v1571 = vld [vmem:[#allocation8 + $0x40] sm:$0xff]
    %v1572 = vld [vmem:[#allocation8 + $0x48] sm:$0xff]
    %v1573 = vld [vmem:[#allocation8 + $0x50] sm:$0xff]
    %v1574 = vld [vmem:[#allocation8 + $0x58] sm:$0xff]
    %v1575 = vld [vmem:[#allocation8 + $0x60] sm:$0xff]
    %v1576 = vld [vmem:[#allocation8 + $0x68] sm:$0xff]
    %v1577 = vld [vmem:[#allocation8 + $0x70] sm:$0xff]
    %v1578 = vld [vmem:[#allocation8 + $0x78] sm:$0xff]
    %1579 = vmatprep.subr.mxu0 0.0
    %1580 = vmatpush1.msra.mxu0 0.0
    %1581 = vmatprep.subr.mxu0 0.0
    %1582 = vmatpush1.msra.mxu0 0.0
    %1583 = vmatprep.subr.mxu0 0.0
    %1584 = vmatpush1.msra.mxu0 0.0
    %1585 = vmatprep.subr.mxu0 0.0
    %1586 = vmatpush1.msra.mxu0 0.0
    %1587 = vmatprep.subr.mxu0 0.0
    %1588 = vmatpush1.msra.mxu0 0.0
    %1589 = vmatprep.subr.mxu0 0.0
    %1590 = vmatpush1.msra.mxu0 0.0
    %1591 = vmatprep.subr.mxu0 0.0
    %1592 = vmatpush1.msra.mxu0 0.0
    %1593 = vmatprep.subr.mxu0 0.0
    %1594 = vmatpush1.msra.mxu0 0.0
    %1595 = vmatprep.subr.mxu0 %v1578
    %1596 = vmatpush1.msra.mxu0 %v1577
    %1597 = vmatprep.subr.mxu0 %v1576
    %1598 = vmatpush1.msra.mxu0 %v1575
    %1599 = vmatprep.subr.mxu0 %v1574
    %1600 = vmatpush1.msra.mxu0 %v1573
    %1601 = vmatprep.subr.mxu0 %v1572
    %1602 = vmatpush1.msra.mxu0 %v1571
    %1603 = vmatprep.subr.mxu0 %v1570
    %1604 = vmatpush1.msra.mxu0 %v1569
    %1605 = vmatprep.subr.mxu0 %v1568
    %1606 = vmatpush1.msra.mxu0 %v1567
    %1607 = vmatprep.subr.mxu0 %v1566
    %1608 = vmatpush1.msra.mxu0 %v1565
    %1609 = vmatprep.subr.mxu0 %v1564
    %1610 = vmatpush1.msra.mxu0 %v1563
    %1611 = vmatprep.subr.mxu0 0.0
    %1612 = vmatpush2.msra.mxu0 0.0
    %1613 = vmatprep.subr.mxu0 0.0
    %1614 = vmatpush2.msra.mxu0 0.0
    %1615 = vmatprep.subr.mxu0 0.0
    %1616 = vmatpush2.msra.mxu0 0.0
    %1617 = vmatprep.subr.mxu0 0.0
    %1618 = vmatpush2.msra.mxu0 0.0
    %1619 = vmatprep.subr.mxu0 0.0
    %1620 = vmatpush2.msra.mxu0 0.0
    %1621 = vmatprep.subr.mxu0 0.0
    %1622 = vmatpush2.msra.mxu0 0.0
    %1623 = vmatprep.subr.mxu0 0.0
    %1624 = vmatpush2.msra.mxu0 0.0
    %1625 = vmatprep.subr.mxu0 0.0
    %1626 = vmatpush2.msra.mxu0 0.0
    %1627 = vmatprep.subr.mxu0 0.0
    %1628 = vmatpush2.msra.mxu0 0.0
    %1629 = vmatprep.subr.mxu0 0.0
    %1630 = vmatpush2.msra.mxu0 0.0
    %1631 = vmatprep.subr.mxu0 0.0
    %1632 = vmatpush2.msra.mxu0 0.0
    %1633 = vmatprep.subr.mxu0 0.0
    %1634 = vmatpush2.msra.mxu0 0.0
    %1635 = vmatprep.subr.mxu0 0.0
    %1636 = vmatpush2.msra.mxu0 0.0
    %1637 = vmatprep.subr.mxu0 0.0
    %1638 = vmatpush2.msra.mxu0 0.0
    %1639 = vmatprep.subr.mxu0 0.0
    %1640 = vmatpush2.msra.mxu0 0.0
    %1641 = vmatprep.subr.mxu0 0.0
    %1642 = vmatpush2.msra.mxu0 0.0
    %1643 = vmatprep.mubr.f32.mxu0 0.0
    %1644 = vmatmul.mubr.f32.gmra.mxu0 %v421
    %v1645 = vpop.f32.mrf.mxu0
    %v1646 = vadd.f32 %v1553, %v1645
    %v1647 = vpop.f32.mrf.mxu0
    %v1648 = vadd.f32 %v1555, %v1647
    %1649 = vdwg.mxu0
    %v1652 = vrot.slane %v1470, 6
    %v1653 = vrot.slane %v1472, 6
    %v1656 = vadd.f32 %v1646, %v1652
    %v1657 = vadd.f32 %v1648, %v1653
    %v1658 = vxor.u32 %v1656, 2147483648
    %v1659 = vxor.u32 %v1657, 2147483648
    %v1660 = vmul.f32 %v1658, 1.442695
    %v1661 = vpow.pop %v1660
    %v1662 = vmul.f32 %v1659, 1.442695
    %v1663 = vpow.pop %v1662
    %v1664 = vadd.f32 %v1661, 1.0
    %v1665 = vadd.f32 %v1663, 1.0
    %v1666 = vrcp.pop %v1664
    %v1667 = vmul.f32 1.0, %v1666
    %v1668 = vrcp.pop %v1665
    %v1669 = vmul.f32 1.0, %v1668
    %v1670 = vmul.f32 %v1667, 2.0
    %v1671 = vmul.f32 %v1669, 2.0
    %v1672 = vsub.f32 %v1670, 1.0
    %v1673 = vsub.f32 %v1671, 1.0
    %v1674 = vsel %vm211, %v1672, %v1667
    %v1675 = vsel %vm212, %v1673, %v1669
    %v1676 = vmul.f32 %v1674, 0.0
    %v1677 = vmul.f32 %v1674, %v1675
    %1679 = vrot.lane.b32.xlu0 %v1677, 64
    %v1680 = vpop.permute.xlu0 %1679
    %v1682 = vadd.f32 %v1676, %v1680
    %v1683 = vtanh.pop %v1682
    %v1684 = vmul.f32 %v1675, %v1683
    %1686 = vrot.lane.b32.xlu0 %v1684, 64
    %v1687 = vpop.permute.xlu0 %1686
    %v1690 = vrot.slane %v1553, 2
    %v1691 = vrot.slane %v1555, 2
    %v1694 = vsel %vm419, %v1687, 0
    %1696 = vmatprep.subr.mxu0 0.0
    %1697 = vmatpush1.msra.mxu0 0.0
    %1698 = vmatprep.subr.mxu0 0.0
    %1699 = vmatpush1.msra.mxu0 0.0
    %1700 = vmatprep.subr.mxu0 0.0
    %1701 = vmatpush1.msra.mxu0 0.0
    %1702 = vmatprep.subr.mxu0 0.0
    %1703 = vmatpush1.msra.mxu0 0.0
    %1704 = vmatprep.subr.mxu0 0.0
    %1705 = vmatpush1.msra.mxu0 0.0
    %1706 = vmatprep.subr.mxu0 0.0
    %1707 = vmatpush1.msra.mxu0 0.0
    %1708 = vmatprep.subr.mxu0 0.0
    %1709 = vmatpush1.msra.mxu0 0.0
    %1710 = vmatprep.subr.mxu0 0.0
    %1711 = vmatpush1.msra.mxu0 0.0
    %1712 = vmatprep.subr.mxu0 %v1578
    %1713 = vmatpush1.msra.mxu0 %v1577
    %1714 = vmatprep.subr.mxu0 %v1576
    %1715 = vmatpush1.msra.mxu0 %v1575
    %1716 = vmatprep.subr.mxu0 %v1574
    %1717 = vmatpush1.msra.mxu0 %v1573
    %1718 = vmatprep.subr.mxu0 %v1572
    %1719 = vmatpush1.msra.mxu0 %v1571
    %1720 = vmatprep.subr.mxu0 %v1570
    %1721 = vmatpush1.msra.mxu0 %v1569
    %1722 = vmatprep.subr.mxu0 %v1568
    %1723 = vmatpush1.msra.mxu0 %v1567
    %1724 = vmatprep.subr.mxu0 %v1566
    %1725 = vmatpush1.msra.mxu0 %v1565
    %1726 = vmatprep.subr.mxu0 %v1564
    %1727 = vmatpush1.msra.mxu0 %v1563
    %1728 = vmatprep.subr.mxu0 0.0
    %1729 = vmatpush2.msra.mxu0 0.0
    %1730 = vmatprep.subr.mxu0 0.0
    %1731 = vmatpush2.msra.mxu0 0.0
    %1732 = vmatprep.subr.mxu0 0.0
    %1733 = vmatpush2.msra.mxu0 0.0
    %1734 = vmatprep.subr.mxu0 0.0
    %1735 = vmatpush2.msra.mxu0 0.0
    %1736 = vmatprep.subr.mxu0 0.0
    %1737 = vmatpush2.msra.mxu0 0.0
    %1738 = vmatprep.subr.mxu0 0.0
    %1739 = vmatpush2.msra.mxu0 0.0
    %1740 = vmatprep.subr.mxu0 0.0
    %1741 = vmatpush2.msra.mxu0 0.0
    %1742 = vmatprep.subr.mxu0 0.0
    %1743 = vmatpush2.msra.mxu0 0.0
    %1744 = vmatprep.subr.mxu0 0.0
    %1745 = vmatpush2.msra.mxu0 0.0
    %1746 = vmatprep.subr.mxu0 0.0
    %1747 = vmatpush2.msra.mxu0 0.0
    %1748 = vmatprep.subr.mxu0 0.0
    %1749 = vmatpush2.msra.mxu0 0.0
    %1750 = vmatprep.subr.mxu0 0.0
    %1751 = vmatpush2.msra.mxu0 0.0
    %1752 = vmatprep.subr.mxu0 0.0
    %1753 = vmatpush2.msra.mxu0 0.0
    %1754 = vmatprep.subr.mxu0 0.0
    %1755 = vmatpush2.msra.mxu0 0.0
    %1756 = vmatprep.subr.mxu0 0.0
    %1757 = vmatpush2.msra.mxu0 0.0
    %1758 = vmatprep.subr.mxu0 0.0
    %1759 = vmatpush2.msra.mxu0 0.0
    %1760 = vmatprep.mubr.f32.mxu0 0.0
    %1761 = vmatmul.mubr.f32.gmra.mxu0 %v1694
    %v1762 = vpop.f32.mrf.mxu0
    %v1763 = vadd.f32 %v1690, %v1762
    %v1764 = vpop.f32.mrf.mxu0
    %v1765 = vadd.f32 %v1691, %v1764
    %1766 = vdwg.mxu0
    %v1767 = vrot.slane %v1470, 4
    %v1768 = vrot.slane %v1472, 4
    %v1771 = vadd.f32 %v1763, %v1767
    %v1772 = vadd.f32 %v1765, %v1768
    %v1773 = vxor.u32 %v1771, 2147483648
    %v1774 = vxor.u32 %v1772, 2147483648
    %v1775 = vmul.f32 %v1773, 1.442695
    %v1776 = vpow.pop %v1775
    %v1777 = vmul.f32 %v1774, 1.442695
    %v1778 = vpow.pop %v1777
    %v1779 = vadd.f32 %v1776, 1.0
    %v1780 = vadd.f32 %v1778, 1.0
    %v1781 = vrcp.pop %v1779
    %v1782 = vmul.f32 1.0, %v1781
    %v1783 = vrcp.pop %v1780
    %v1784 = vmul.f32 1.0, %v1783
    %v1785 = vmul.f32 %v1782, 2.0
    %v1786 = vmul.f32 %v1784, 2.0
    %v1787 = vsub.f32 %v1785, 1.0
    %v1788 = vsub.f32 %v1786, 1.0
    %v1789 = vsel %vm211, %v1787, %v1782
    %v1790 = vsel %vm212, %v1788, %v1784
    %v1791 = vmul.f32 %v1789, %v1682
    %v1792 = vmul.f32 %v1789, %v1790
    %1794 = vrot.lane.b32.xlu0 %v1792, 64
    %v1795 = vpop.permute.xlu0 %1794
    %v1797 = vadd.f32 %v1791, %v1795
    %v1798 = vtanh.pop %v1797
    %v1799 = vmul.f32 %v1790, %v1798
    %1801 = vrot.lane.b32.xlu0 %v1799, 64
    %v1802 = vpop.permute.xlu0 %1801
    %v1803 = vrot.slane %v1553, 4
    %v1804 = vrot.slane %v1555, 4
    %v1807 = vsel %vm419, %v1802, 0
    %1809 = vmatprep.subr.mxu0 0.0
    %1810 = vmatpush1.msra.mxu0 0.0
    %1811 = vmatprep.subr.mxu0 0.0
    %1812 = vmatpush1.msra.mxu0 0.0
    %1813 = vmatprep.subr.mxu0 0.0
    %1814 = vmatpush1.msra.mxu0 0.0
    %1815 = vmatprep.subr.mxu0 0.0
    %1816 = vmatpush1.msra.mxu0 0.0
    %1817 = vmatprep.subr.mxu0 0.0
    %1818 = vmatpush1.msra.mxu0 0.0
    %1819 = vmatprep.subr.mxu0 0.0
    %1820 = vmatpush1.msra.mxu0 0.0
    %1821 = vmatprep.subr.mxu0 0.0
    %1822 = vmatpush1.msra.mxu0 0.0
    %1823 = vmatprep.subr.mxu0 0.0
    %1824 = vmatpush1.msra.mxu0 0.0
    %1825 = vmatprep.subr.mxu0 %v1578
    %1826 = vmatpush1.msra.mxu0 %v1577
    %1827 = vmatprep.subr.mxu0 %v1576
    %1828 = vmatpush1.msra.mxu0 %v1575
    %1829 = vmatprep.subr.mxu0 %v1574
    %1830 = vmatpush1.msra.mxu0 %v1573
    %1831 = vmatprep.subr.mxu0 %v1572
    %1832 = vmatpush1.msra.mxu0 %v1571
    %1833 = vmatprep.subr.mxu0 %v1570
    %1834 = vmatpush1.msra.mxu0 %v1569
    %1835 = vmatprep.subr.mxu0 %v1568
    %1836 = vmatpush1.msra.mxu0 %v1567
    %1837 = vmatprep.subr.mxu0 %v1566
    %1838 = vmatpush1.msra.mxu0 %v1565
    %1839 = vmatprep.subr.mxu0 %v1564
    %1840 = vmatpush1.msra.mxu0 %v1563
    %1841 = vmatprep.subr.mxu0 0.0
    %1842 = vmatpush2.msra.mxu0 0.0
    %1843 = vmatprep.subr.mxu0 0.0
    %1844 = vmatpush2.msra.mxu0 0.0
    %1845 = vmatprep.subr.mxu0 0.0
    %1846 = vmatpush2.msra.mxu0 0.0
    %1847 = vmatprep.subr.mxu0 0.0
    %1848 = vmatpush2.msra.mxu0 0.0
    %1849 = vmatprep.subr.mxu0 0.0
    %1850 = vmatpush2.msra.mxu0 0.0
    %1851 = vmatprep.subr.mxu0 0.0
    %1852 = vmatpush2.msra.mxu0 0.0
    %1853 = vmatprep.subr.mxu0 0.0
    %1854 = vmatpush2.msra.mxu0 0.0
    %1855 = vmatprep.subr.mxu0 0.0
    %1856 = vmatpush2.msra.mxu0 0.0
    %1857 = vmatprep.subr.mxu0 0.0
    %1858 = vmatpush2.msra.mxu0 0.0
    %1859 = vmatprep.subr.mxu0 0.0
    %1860 = vmatpush2.msra.mxu0 0.0
    %1861 = vmatprep.subr.mxu0 0.0
    %1862 = vmatpush2.msra.mxu0 0.0
    %1863 = vmatprep.subr.mxu0 0.0
    %1864 = vmatpush2.msra.mxu0 0.0
    %1865 = vmatprep.subr.mxu0 0.0
    %1866 = vmatpush2.msra.mxu0 0.0
    %1867 = vmatprep.subr.mxu0 0.0
    %1868 = vmatpush2.msra.mxu0 0.0
    %1869 = vmatprep.subr.mxu0 0.0
    %1870 = vmatpush2.msra.mxu0 0.0
    %1871 = vmatprep.subr.mxu0 0.0
    %1872 = vmatpush2.msra.mxu0 0.0
    %1873 = vmatprep.mubr.f32.mxu0 0.0
    %1874 = vmatmul.mubr.f32.gmra.mxu0 %v1807
    %v1875 = vpop.f32.mrf.mxu0
    %v1876 = vadd.f32 %v1803, %v1875
    %v1877 = vpop.f32.mrf.mxu0
    %v1878 = vadd.f32 %v1804, %v1877
    %1879 = vdwg.mxu0
    %v1880 = vrot.slane %v1470, 2
    %v1881 = vrot.slane %v1472, 2
    %v1884 = vadd.f32 %v1876, %v1880
    %v1885 = vadd.f32 %v1878, %v1881
    %v1886 = vxor.u32 %v1884, 2147483648
    %v1887 = vxor.u32 %v1885, 2147483648
    %v1888 = vmul.f32 %v1886, 1.442695
    %v1889 = vpow.pop %v1888
    %v1890 = vmul.f32 %v1887, 1.442695
    %v1891 = vpow.pop %v1890
    %v1892 = vadd.f32 %v1889, 1.0
    %v1893 = vadd.f32 %v1891, 1.0
    %v1894 = vrcp.pop %v1892
    %v1895 = vmul.f32 1.0, %v1894
    %v1896 = vrcp.pop %v1893
    %v1897 = vmul.f32 1.0, %v1896
    %v1898 = vmul.f32 %v1895, 2.0
    %v1899 = vmul.f32 %v1897, 2.0
    %v1900 = vsub.f32 %v1898, 1.0
    %v1901 = vsub.f32 %v1899, 1.0
    %v1902 = vsel %vm211, %v1900, %v1895
    %v1903 = vsel %vm212, %v1901, %v1897
    %v1904 = vmul.f32 %v1902, %v1797
    %v1905 = vmul.f32 %v1902, %v1903
    %1907 = vrot.lane.b32.xlu0 %v1905, 64
    %v1908 = vpop.permute.xlu0 %1907
    %v1910 = vadd.f32 %v1904, %v1908
    %v1911 = vtanh.pop %v1910
    %v1912 = vmul.f32 %v1903, %v1911
    %1914 = vrot.lane.b32.xlu0 %v1912, 64
    %v1915 = vpop.permute.xlu0 %1914
    %v1916 = vrot.slane %v1553, 6
    %v1917 = vrot.slane %v1555, 6
    %v1920 = vsel %vm419, %v1915, 0
    %1922 = vmatprep.subr.mxu0 0.0
    %1923 = vmatpush1.msra.mxu0 0.0
    %1924 = vmatprep.subr.mxu0 0.0
    %1925 = vmatpush1.msra.mxu0 0.0
    %1926 = vmatprep.subr.mxu0 0.0
    %1927 = vmatpush1.msra.mxu0 0.0
    %1928 = vmatprep.subr.mxu0 0.0
    %1929 = vmatpush1.msra.mxu0 0.0
    %1930 = vmatprep.subr.mxu0 0.0
    %1931 = vmatpush1.msra.mxu0 0.0
    %1932 = vmatprep.subr.mxu0 0.0
    %1933 = vmatpush1.msra.mxu0 0.0
    %1934 = vmatprep.subr.mxu0 0.0
    %1935 = vmatpush1.msra.mxu0 0.0
    %1936 = vmatprep.subr.mxu0 0.0
    %1937 = vmatpush1.msra.mxu0 0.0
    %1938 = vmatprep.subr.mxu0 %v1578
    %1939 = vmatpush1.msra.mxu0 %v1577
    %1940 = vmatprep.subr.mxu0 %v1576
    %1941 = vmatpush1.msra.mxu0 %v1575
    %1942 = vmatprep.subr.mxu0 %v1574
    %1943 = vmatpush1.msra.mxu0 %v1573
    %1944 = vmatprep.subr.mxu0 %v1572
    %1945 = vmatpush1.msra.mxu0 %v1571
    %1946 = vmatprep.subr.mxu0 %v1570
    %1947 = vmatpush1.msra.mxu0 %v1569
    %1948 = vmatprep.subr.mxu0 %v1568
    %1949 = vmatpush1.msra.mxu0 %v1567
    %1950 = vmatprep.subr.mxu0 %v1566
    %1951 = vmatpush1.msra.mxu0 %v1565
    %1952 = vmatprep.subr.mxu0 %v1564
    %1953 = vmatpush1.msra.mxu0 %v1563
    %1954 = vmatprep.subr.mxu0 0.0
    %1955 = vmatpush2.msra.mxu0 0.0
    %1956 = vmatprep.subr.mxu0 0.0
    %1957 = vmatpush2.msra.mxu0 0.0
    %1958 = vmatprep.subr.mxu0 0.0
    %1959 = vmatpush2.msra.mxu0 0.0
    %1960 = vmatprep.subr.mxu0 0.0
    %1961 = vmatpush2.msra.mxu0 0.0
    %1962 = vmatprep.subr.mxu0 0.0
    %1963 = vmatpush2.msra.mxu0 0.0
    %1964 = vmatprep.subr.mxu0 0.0
    %1965 = vmatpush2.msra.mxu0 0.0
    %1966 = vmatprep.subr.mxu0 0.0
    %1967 = vmatpush2.msra.mxu0 0.0
    %1968 = vmatprep.subr.mxu0 0.0
    %1969 = vmatpush2.msra.mxu0 0.0
    %1970 = vmatprep.subr.mxu0 0.0
    %1971 = vmatpush2.msra.mxu0 0.0
    %1972 = vmatprep.subr.mxu0 0.0
    %1973 = vmatpush2.msra.mxu0 0.0
    %1974 = vmatprep.subr.mxu0 0.0
    %1975 = vmatpush2.msra.mxu0 0.0
    %1976 = vmatprep.subr.mxu0 0.0
    %1977 = vmatpush2.msra.mxu0 0.0
    %1978 = vmatprep.subr.mxu0 0.0
    %1979 = vmatpush2.msra.mxu0 0.0
    %1980 = vmatprep.subr.mxu0 0.0
    %1981 = vmatpush2.msra.mxu0 0.0
    %1982 = vmatprep.subr.mxu0 0.0
    %1983 = vmatpush2.msra.mxu0 0.0
    %1984 = vmatprep.subr.mxu0 0.0
    %1985 = vmatpush2.msra.mxu0 0.0
    %1986 = vmatprep.mubr.f32.mxu0 0.0
    %1987 = vmatmul.mubr.f32.gmra.mxu0 %v1920
    %v1988 = vpop.f32.mrf.mxu0
    %v1989 = vadd.f32 %v1916, %v1988
    %v1990 = vpop.f32.mrf.mxu0
    %v1991 = vadd.f32 %v1917, %v1990
    %1992 = vdwg.mxu0
    %v1993 = vadd.f32 %v1989, %v1470
    %v1994 = vadd.f32 %v1991, %v1472
    %v1995 = vxor.u32 %v1993, 2147483648
    %v1996 = vxor.u32 %v1994, 2147483648
    %v1997 = vmul.f32 %v1995, 1.442695
    %v1998 = vpow.pop %v1997
    %v1999 = vmul.f32 %v1996, 1.442695
    %v2000 = vpow.pop %v1999
    %v2001 = vadd.f32 %v1998, 1.0
    %v2002 = vadd.f32 %v2000, 1.0
    %v2003 = vrcp.pop %v2001
    %v2004 = vmul.f32 1.0, %v2003
    %v2005 = vrcp.pop %v2002
    %v2006 = vmul.f32 1.0, %v2005
    %v2007 = vmul.f32 %v2004, 2.0
    %v2008 = vmul.f32 %v2006, 2.0
    %v2009 = vsub.f32 %v2007, 1.0
    %v2010 = vsub.f32 %v2008, 1.0
    %v2011 = vsel %vm211, %v2009, %v2004
    %v2012 = vsel %vm212, %v2010, %v2006
    %v2013 = vmul.f32 %v2011, %v1910
    %v2014 = vmul.f32 %v2011, %v2012
    %2016 = vrot.lane.b32.xlu0 %v2014, 64
    %v2017 = vpop.permute.xlu0 %2016
    %v2019 = vadd.f32 %v2013, %v2017
    %v2020 = vtanh.pop %v2019
    %v2021 = vmul.f32 %v2012, %v2020
    %2023 = vrot.lane.b32.xlu0 %v2021, 64
    %v2024 = vpop.permute.xlu0 %2023
    %v2025 = vsel %vm419, %v2024, 0
    %2027 = vmatprep.subr.mxu0 0.0
    %2028 = vmatpush1.msra.mxu0 0.0
    %2029 = vmatprep.subr.mxu0 0.0
    %2030 = vmatpush1.msra.mxu0 0.0
    %2031 = vmatprep.subr.mxu0 0.0
    %2032 = vmatpush1.msra.mxu0 0.0
    %2033 = vmatprep.subr.mxu0 0.0
    %2034 = vmatpush1.msra.mxu0 0.0
    %2035 = vmatprep.subr.mxu0 0.0
    %2036 = vmatpush1.msra.mxu0 0.0
    %2037 = vmatprep.subr.mxu0 0.0
    %2038 = vmatpush1.msra.mxu0 0.0
    %2039 = vmatprep.subr.mxu0 0.0
    %2040 = vmatpush1.msra.mxu0 0.0
    %2041 = vmatprep.subr.mxu0 0.0
    %2042 = vmatpush1.msra.mxu0 0.0
    %2043 = vmatprep.subr.mxu0 %v1578
    %2044 = vmatpush1.msra.mxu0 %v1577
    %2045 = vmatprep.subr.mxu0 %v1576
    %2046 = vmatpush1.msra.mxu0 %v1575
    %2047 = vmatprep.subr.mxu0 %v1574
    %2048 = vmatpush1.msra.mxu0 %v1573
    %2049 = vmatprep.subr.mxu0 %v1572
    %2050 = vmatpush1.msra.mxu0 %v1571
    %2051 = vmatprep.subr.mxu0 %v1570
    %2052 = vmatpush1.msra.mxu0 %v1569
    %2053 = vmatprep.subr.mxu0 %v1568
    %2054 = vmatpush1.msra.mxu0 %v1567
    %2055 = vmatprep.subr.mxu0 %v1566
    %2056 = vmatpush1.msra.mxu0 %v1565
    %2057 = vmatprep.subr.mxu0 %v1564
    %2058 = vmatpush1.msra.mxu0 %v1563
    %2059 = vmatprep.subr.mxu0 0.0
    %2060 = vmatpush2.msra.mxu0 0.0
    %2061 = vmatprep.subr.mxu0 0.0
    %2062 = vmatpush2.msra.mxu0 0.0
    %2063 = vmatprep.subr.mxu0 0.0
    %2064 = vmatpush2.msra.mxu0 0.0
    %2065 = vmatprep.subr.mxu0 0.0
    %2066 = vmatpush2.msra.mxu0 0.0
    %2067 = vmatprep.subr.mxu0 0.0
    %2068 = vmatpush2.msra.mxu0 0.0
    %2069 = vmatprep.subr.mxu0 0.0
    %2070 = vmatpush2.msra.mxu0 0.0
    %2071 = vmatprep.subr.mxu0 0.0
    %2072 = vmatpush2.msra.mxu0 0.0
    %2073 = vmatprep.subr.mxu0 0.0
    %2074 = vmatpush2.msra.mxu0 0.0
    %2075 = vmatprep.subr.mxu0 0.0
    %2076 = vmatpush2.msra.mxu0 0.0
    %2077 = vmatprep.subr.mxu0 0.0
    %2078 = vmatpush2.msra.mxu0 0.0
    %2079 = vmatprep.subr.mxu0 0.0
    %2080 = vmatpush2.msra.mxu0 0.0
    %2081 = vmatprep.subr.mxu0 0.0
    %2082 = vmatpush2.msra.mxu0 0.0
    %2083 = vmatprep.subr.mxu0 0.0
    %2084 = vmatpush2.msra.mxu0 0.0
    %2085 = vmatprep.subr.mxu0 0.0
    %2086 = vmatpush2.msra.mxu0 0.0
    %2087 = vmatprep.subr.mxu0 0.0
    %2088 = vmatpush2.msra.mxu0 0.0
    %2089 = vmatprep.subr.mxu0 0.0
    %2090 = vmatpush2.msra.mxu0 0.0
    %2091 = vmatprep.mubr.f32.mxu0 0.0
    %2092 = vmatmul.mubr.f32.gmra.mxu0 %v2025
    %v2093 = vpop.f32.mrf.mxu0
    %v2094 = vadd.f32 %v1559, %v2093
    %v2095 = vpop.f32.mrf.mxu0
    %v2096 = vadd.f32 %v1561, %v2095
    %2097 = vdwg.mxu0
    %v2100 = vrot.slane %v1464, 6
    %v2101 = vrot.slane %v1466, 6
    %v2104 = vadd.f32 %v2094, %v2100
    %v2105 = vadd.f32 %v2096, %v2101
    %v2106 = vxor.u32 %v2104, 2147483648
    %v2107 = vxor.u32 %v2105, 2147483648
    %v2108 = vmul.f32 %v2106, 1.442695
    %v2109 = vpow.pop %v2108
    %v2110 = vmul.f32 %v2107, 1.442695
    %v2111 = vpow.pop %v2110
    %v2112 = vadd.f32 %v2109, 1.0
    %v2113 = vadd.f32 %v2111, 1.0
    %v2114 = vrcp.pop %v2112
    %v2115 = vmul.f32 1.0, %v2114
    %v2116 = vrcp.pop %v2113
    %v2117 = vmul.f32 1.0, %v2116
    %v2118 = vmul.f32 %v2115, 2.0
    %v2119 = vmul.f32 %v2117, 2.0
    %v2120 = vsub.f32 %v2118, 1.0
    %v2121 = vsub.f32 %v2119, 1.0
    %v2122 = vsel %vm211, %v2120, %v2115
    %v2123 = vsel %vm212, %v2121, %v2117
    %v2124 = vmul.f32 %v2122, %v2019
    %v2125 = vmul.f32 %v2122, %v2123
    %2127 = vrot.lane.b32.xlu0 %v2125, 64
    %v2128 = vpop.permute.xlu0 %2127
    %v2130 = vadd.f32 %v2124, %v2128
    %v2131 = vtanh.pop %v2130
    %v2132 = vmul.f32 %v2123, %v2131
    %2134 = vrot.lane.b32.xlu0 %v2132, 64
    %v2135 = vpop.permute.xlu0 %2134
    %v2138 = vrot.slane %v1559, 2
    %v2139 = vrot.slane %v1561, 2
    %v2142 = vsel %vm419, %v2135, 0
    %2144 = vmatprep.subr.mxu0 0.0
    %2145 = vmatpush1.msra.mxu0 0.0
    %2146 = vmatprep.subr.mxu0 0.0
    %2147 = vmatpush1.msra.mxu0 0.0
    %2148 = vmatprep.subr.mxu0 0.0
    %2149 = vmatpush1.msra.mxu0 0.0
    %2150 = vmatprep.subr.mxu0 0.0
    %2151 = vmatpush1.msra.mxu0 0.0
    %2152 = vmatprep.subr.mxu0 0.0
    %2153 = vmatpush1.msra.mxu0 0.0
    %2154 = vmatprep.subr.mxu0 0.0
    %2155 = vmatpush1.msra.mxu0 0.0
    %2156 = vmatprep.subr.mxu0 0.0
    %2157 = vmatpush1.msra.mxu0 0.0
    %2158 = vmatprep.subr.mxu0 0.0
    %2159 = vmatpush1.msra.mxu0 0.0
    %2160 = vmatprep.subr.mxu0 %v1578
    %2161 = vmatpush1.msra.mxu0 %v1577
    %2162 = vmatprep.subr.mxu0 %v1576
    %2163 = vmatpush1.msra.mxu0 %v1575
    %2164 = vmatprep.subr.mxu0 %v1574
    %2165 = vmatpush1.msra.mxu0 %v1573
    %2166 = vmatprep.subr.mxu0 %v1572
    %2167 = vmatpush1.msra.mxu0 %v1571
    %2168 = vmatprep.subr.mxu0 %v1570
    %2169 = vmatpush1.msra.mxu0 %v1569
    %2170 = vmatprep.subr.mxu0 %v1568
    %2171 = vmatpush1.msra.mxu0 %v1567
    %2172 = vmatprep.subr.mxu0 %v1566
    %2173 = vmatpush1.msra.mxu0 %v1565
    %2174 = vmatprep.subr.mxu0 %v1564
    %2175 = vmatpush1.msra.mxu0 %v1563
    %2176 = vmatprep.subr.mxu0 0.0
    %2177 = vmatpush2.msra.mxu0 0.0
    %2178 = vmatprep.subr.mxu0 0.0
    %2179 = vmatpush2.msra.mxu0 0.0
    %2180 = vmatprep.subr.mxu0 0.0
    %2181 = vmatpush2.msra.mxu0 0.0
    %2182 = vmatprep.subr.mxu0 0.0
    %2183 = vmatpush2.msra.mxu0 0.0
    %2184 = vmatprep.subr.mxu0 0.0
    %2185 = vmatpush2.msra.mxu0 0.0
    %2186 = vmatprep.subr.mxu0 0.0
    %2187 = vmatpush2.msra.mxu0 0.0
    %2188 = vmatprep.subr.mxu0 0.0
    %2189 = vmatpush2.msra.mxu0 0.0
    %2190 = vmatprep.subr.mxu0 0.0
    %2191 = vmatpush2.msra.mxu0 0.0
    %2192 = vmatprep.subr.mxu0 0.0
    %2193 = vmatpush2.msra.mxu0 0.0
    %2194 = vmatprep.subr.mxu0 0.0
    %2195 = vmatpush2.msra.mxu0 0.0
    %2196 = vmatprep.subr.mxu0 0.0
    %2197 = vmatpush2.msra.mxu0 0.0
    %2198 = vmatprep.subr.mxu0 0.0
    %2199 = vmatpush2.msra.mxu0 0.0
    %2200 = vmatprep.subr.mxu0 0.0
    %2201 = vmatpush2.msra.mxu0 0.0
    %2202 = vmatprep.subr.mxu0 0.0
    %2203 = vmatpush2.msra.mxu0 0.0
    %2204 = vmatprep.subr.mxu0 0.0
    %2205 = vmatpush2.msra.mxu0 0.0
    %2206 = vmatprep.subr.mxu0 0.0
    %2207 = vmatpush2.msra.mxu0 0.0
    %2208 = vmatprep.mubr.f32.mxu0 0.0
    %2209 = vmatmul.mubr.f32.gmra.mxu0 %v2142
    %v2210 = vpop.f32.mrf.mxu0
    %v2211 = vadd.f32 %v2138, %v2210
    %v2212 = vpop.f32.mrf.mxu0
    %v2213 = vadd.f32 %v2139, %v2212
    %2214 = vdwg.mxu0
    %v2215 = vrot.slane %v1464, 4
    %v2216 = vrot.slane %v1466, 4
    %v2219 = vadd.f32 %v2211, %v2215
    %v2220 = vadd.f32 %v2213, %v2216
    %v2221 = vxor.u32 %v2219, 2147483648
    %v2222 = vxor.u32 %v2220, 2147483648
    %v2223 = vmul.f32 %v2221, 1.442695
    %v2224 = vpow.pop %v2223
    %v2225 = vmul.f32 %v2222, 1.442695
    %v2226 = vpow.pop %v2225
    %v2227 = vadd.f32 %v2224, 1.0
    %v2228 = vadd.f32 %v2226, 1.0
    %v2229 = vrcp.pop %v2227
    %v2230 = vmul.f32 1.0, %v2229
    %v2231 = vrcp.pop %v2228
    %v2232 = vmul.f32 1.0, %v2231
    %v2233 = vmul.f32 %v2230, 2.0
    %v2234 = vmul.f32 %v2232, 2.0
    %v2235 = vsub.f32 %v2233, 1.0
    %v2236 = vsub.f32 %v2234, 1.0
    %v2237 = vsel %vm211, %v2235, %v2230
    %v2238 = vsel %vm212, %v2236, %v2232
    %v2239 = vmul.f32 %v2237, %v2130
    %v2240 = vmul.f32 %v2237, %v2238
    %2242 = vrot.lane.b32.xlu0 %v2240, 64
    %v2243 = vpop.permute.xlu0 %2242
    %v2245 = vadd.f32 %v2239, %v2243
    %v2246 = vtanh.pop %v2245
    %v2247 = vmul.f32 %v2238, %v2246
    %2249 = vrot.lane.b32.xlu0 %v2247, 64
    %v2250 = vpop.permute.xlu0 %2249
    %v2251 = vrot.slane %v1559, 4
    %v2252 = vrot.slane %v1561, 4
    %v2255 = vsel %vm419, %v2250, 0
    %2257 = vmatprep.subr.mxu0 0.0
    %2258 = vmatpush1.msra.mxu0 0.0
    %2259 = vmatprep.subr.mxu0 0.0
    %2260 = vmatpush1.msra.mxu0 0.0
    %2261 = vmatprep.subr.mxu0 0.0
    %2262 = vmatpush1.msra.mxu0 0.0
    %2263 = vmatprep.subr.mxu0 0.0
    %2264 = vmatpush1.msra.mxu0 0.0
    %2265 = vmatprep.subr.mxu0 0.0
    %2266 = vmatpush1.msra.mxu0 0.0
    %2267 = vmatprep.subr.mxu0 0.0
    %2268 = vmatpush1.msra.mxu0 0.0
    %2269 = vmatprep.subr.mxu0 0.0
    %2270 = vmatpush1.msra.mxu0 0.0
    %2271 = vmatprep.subr.mxu0 0.0
    %2272 = vmatpush1.msra.mxu0 0.0
    %2273 = vmatprep.subr.mxu0 %v1578
    %2274 = vmatpush1.msra.mxu0 %v1577
    %2275 = vmatprep.subr.mxu0 %v1576
    %2276 = vmatpush1.msra.mxu0 %v1575
    %2277 = vmatprep.subr.mxu0 %v1574
    %2278 = vmatpush1.msra.mxu0 %v1573
    %2279 = vmatprep.subr.mxu0 %v1572
    %2280 = vmatpush1.msra.mxu0 %v1571
    %2281 = vmatprep.subr.mxu0 %v1570
    %2282 = vmatpush1.msra.mxu0 %v1569
    %2283 = vmatprep.subr.mxu0 %v1568
    %2284 = vmatpush1.msra.mxu0 %v1567
    %2285 = vmatprep.subr.mxu0 %v1566
    %2286 = vmatpush1.msra.mxu0 %v1565
    %2287 = vmatprep.subr.mxu0 %v1564
    %2288 = vmatpush1.msra.mxu0 %v1563
    %2289 = vmatprep.subr.mxu0 0.0
    %2290 = vmatpush2.msra.mxu0 0.0
    %2291 = vmatprep.subr.mxu0 0.0
    %2292 = vmatpush2.msra.mxu0 0.0
    %2293 = vmatprep.subr.mxu0 0.0
    %2294 = vmatpush2.msra.mxu0 0.0
    %2295 = vmatprep.subr.mxu0 0.0
    %2296 = vmatpush2.msra.mxu0 0.0
    %2297 = vmatprep.subr.mxu0 0.0
    %2298 = vmatpush2.msra.mxu0 0.0
    %2299 = vmatprep.subr.mxu0 0.0
    %2300 = vmatpush2.msra.mxu0 0.0
    %2301 = vmatprep.subr.mxu0 0.0
    %2302 = vmatpush2.msra.mxu0 0.0
    %2303 = vmatprep.subr.mxu0 0.0
    %2304 = vmatpush2.msra.mxu0 0.0
    %2305 = vmatprep.subr.mxu0 0.0
    %2306 = vmatpush2.msra.mxu0 0.0
    %2307 = vmatprep.subr.mxu0 0.0
    %2308 = vmatpush2.msra.mxu0 0.0
    %2309 = vmatprep.subr.mxu0 0.0
    %2310 = vmatpush2.msra.mxu0 0.0
    %2311 = vmatprep.subr.mxu0 0.0
    %2312 = vmatpush2.msra.mxu0 0.0
    %2313 = vmatprep.subr.mxu0 0.0
    %2314 = vmatpush2.msra.mxu0 0.0
    %2315 = vmatprep.subr.mxu0 0.0
    %2316 = vmatpush2.msra.mxu0 0.0
    %2317 = vmatprep.subr.mxu0 0.0
    %2318 = vmatpush2.msra.mxu0 0.0
    %2319 = vmatprep.subr.mxu0 0.0
    %2320 = vmatpush2.msra.mxu0 0.0
    %2321 = vmatprep.mubr.f32.mxu0 0.0
    %2322 = vmatmul.mubr.f32.gmra.mxu0 %v2255
    %v2323 = vpop.f32.mrf.mxu0
    %v2324 = vadd.f32 %v2251, %v2323
    %v2325 = vpop.f32.mrf.mxu0
    %v2326 = vadd.f32 %v2252, %v2325
    %2327 = vdwg.mxu0
    %v2328 = vrot.slane %v1464, 2
    %v2329 = vrot.slane %v1466, 2
    %v2332 = vadd.f32 %v2324, %v2328
    %v2333 = vadd.f32 %v2326, %v2329
    %v2334 = vxor.u32 %v2332, 2147483648
    %v2335 = vxor.u32 %v2333, 2147483648
    %v2336 = vmul.f32 %v2334, 1.442695
    %v2337 = vpow.pop %v2336
    %v2338 = vmul.f32 %v2335, 1.442695
    %v2339 = vpow.pop %v2338
    %v2340 = vadd.f32 %v2337, 1.0
    %v2341 = vadd.f32 %v2339, 1.0
    %v2342 = vrcp.pop %v2340
    %v2343 = vmul.f32 1.0, %v2342
    %v2344 = vrcp.pop %v2341
    %v2345 = vmul.f32 1.0, %v2344
    %v2346 = vmul.f32 %v2343, 2.0
    %v2347 = vmul.f32 %v2345, 2.0
    %v2348 = vsub.f32 %v2346, 1.0
    %v2349 = vsub.f32 %v2347, 1.0
    %v2350 = vsel %vm211, %v2348, %v2343
    %v2351 = vsel %vm212, %v2349, %v2345
    %v2352 = vmul.f32 %v2350, %v2245
    %v2353 = vmul.f32 %v2350, %v2351
    %2355 = vrot.lane.b32.xlu0 %v2353, 64
    %v2356 = vpop.permute.xlu0 %2355
    %v2358 = vadd.f32 %v2352, %v2356
    %v2359 = vtanh.pop %v2358
    %v2360 = vmul.f32 %v2351, %v2359
    %2362 = vrot.lane.b32.xlu0 %v2360, 64
    %v2363 = vpop.permute.xlu0 %2362
    %v2364 = vrot.slane %v1559, 6
    %v2365 = vrot.slane %v1561, 6
    %v2368 = vsel %vm419, %v2363, 0
    %2370 = vmatprep.subr.mxu0 0.0
    %2371 = vmatpush1.msra.mxu0 0.0
    %2372 = vmatprep.subr.mxu0 0.0
    %2373 = vmatpush1.msra.mxu0 0.0
    %2374 = vmatprep.subr.mxu0 0.0
    %2375 = vmatpush1.msra.mxu0 0.0
    %2376 = vmatprep.subr.mxu0 0.0
    %2377 = vmatpush1.msra.mxu0 0.0
    %2378 = vmatprep.subr.mxu0 0.0
    %2379 = vmatpush1.msra.mxu0 0.0
    %2380 = vmatprep.subr.mxu0 0.0
    %2381 = vmatpush1.msra.mxu0 0.0
    %2382 = vmatprep.subr.mxu0 0.0
    %2383 = vmatpush1.msra.mxu0 0.0
    %2384 = vmatprep.subr.mxu0 0.0
    %2385 = vmatpush1.msra.mxu0 0.0
    %2386 = vmatprep.subr.mxu0 %v1578
    %2387 = vmatpush1.msra.mxu0 %v1577
    %2388 = vmatprep.subr.mxu0 %v1576
    %2389 = vmatpush1.msra.mxu0 %v1575
    %2390 = vmatprep.subr.mxu0 %v1574
    %2391 = vmatpush1.msra.mxu0 %v1573
    %2392 = vmatprep.subr.mxu0 %v1572
    %2393 = vmatpush1.msra.mxu0 %v1571
    %2394 = vmatprep.subr.mxu0 %v1570
    %2395 = vmatpush1.msra.mxu0 %v1569
    %2396 = vmatprep.subr.mxu0 %v1568
    %2397 = vmatpush1.msra.mxu0 %v1567
    %2398 = vmatprep.subr.mxu0 %v1566
    %2399 = vmatpush1.msra.mxu0 %v1565
    %2400 = vmatprep.subr.mxu0 %v1564
    %2401 = vmatpush1.msra.mxu0 %v1563
    %2402 = vmatprep.subr.mxu0 0.0
    %2403 = vmatpush2.msra.mxu0 0.0
    %2404 = vmatprep.subr.mxu0 0.0
    %2405 = vmatpush2.msra.mxu0 0.0
    %2406 = vmatprep.subr.mxu0 0.0
    %2407 = vmatpush2.msra.mxu0 0.0
    %2408 = vmatprep.subr.mxu0 0.0
    %2409 = vmatpush2.msra.mxu0 0.0
    %2410 = vmatprep.subr.mxu0 0.0
    %2411 = vmatpush2.msra.mxu0 0.0
    %2412 = vmatprep.subr.mxu0 0.0
    %2413 = vmatpush2.msra.mxu0 0.0
    %2414 = vmatprep.subr.mxu0 0.0
    %2415 = vmatpush2.msra.mxu0 0.0
    %2416 = vmatprep.subr.mxu0 0.0
    %2417 = vmatpush2.msra.mxu0 0.0
    %2418 = vmatprep.subr.mxu0 0.0
    %2419 = vmatpush2.msra.mxu0 0.0
    %2420 = vmatprep.subr.mxu0 0.0
    %2421 = vmatpush2.msra.mxu0 0.0
    %2422 = vmatprep.subr.mxu0 0.0
    %2423 = vmatpush2.msra.mxu0 0.0
    %2424 = vmatprep.subr.mxu0 0.0
    %2425 = vmatpush2.msra.mxu0 0.0
    %2426 = vmatprep.subr.mxu0 0.0
    %2427 = vmatpush2.msra.mxu0 0.0
    %2428 = vmatprep.subr.mxu0 0.0
    %2429 = vmatpush2.msra.mxu0 0.0
    %2430 = vmatprep.subr.mxu0 0.0
    %2431 = vmatpush2.msra.mxu0 0.0
    %2432 = vmatprep.subr.mxu0 0.0
    %2433 = vmatpush2.msra.mxu0 0.0
    %2434 = vmatprep.mubr.f32.mxu0 0.0
    %2435 = vmatmul.mubr.f32.gmra.mxu0 %v2368
    %v2436 = vpop.f32.mrf.mxu0
    %v2437 = vadd.f32 %v2364, %v2436
    %v2438 = vpop.f32.mrf.mxu0
    %v2439 = vadd.f32 %v2365, %v2438
    %2440 = vdwg.mxu0
    %v2441 = vadd.f32 %v2437, %v1464
    %v2442 = vadd.f32 %v2439, %v1466
    %v2443 = vxor.u32 %v2441, 2147483648
    %v2444 = vxor.u32 %v2442, 2147483648
    %v2445 = vmul.f32 %v2443, 1.442695
    %v2446 = vpow.pop %v2445
    %v2447 = vmul.f32 %v2444, 1.442695
    %v2448 = vpow.pop %v2447
    %v2449 = vadd.f32 %v2446, 1.0
    %v2450 = vadd.f32 %v2448, 1.0
    %v2451 = vrcp.pop %v2449
    %v2452 = vmul.f32 1.0, %v2451
    %v2453 = vrcp.pop %v2450
    %v2454 = vmul.f32 1.0, %v2453
    %v2455 = vmul.f32 %v2452, 2.0
    %v2456 = vmul.f32 %v2454, 2.0
    %v2457 = vsub.f32 %v2455, 1.0
    %v2458 = vsub.f32 %v2456, 1.0
    %v2459 = vsel %vm211, %v2457, %v2452
    %v2460 = vsel %vm212, %v2458, %v2454
    %v2461 = vmul.f32 %v2459, %v2358
    %v2462 = vmul.f32 %v2459, %v2460
    %2464 = vrot.lane.b32.xlu0 %v2462, 64
    %v2465 = vpop.permute.xlu0 %2464
    %v2467 = vadd.f32 %v2461, %v2465
    %v2468 = vtanh.pop %v2467
    %v2469 = vmul.f32 %v2460, %v2468
    %v2470 = vld [vmem:[%s10] sm:$0xff]
    %v2471 = vld [vmem:[%s10 + $0x8] sm:$0xff]
    %v2472 = vld [vmem:[%s10 + $0x10] sm:$0xff]
    %v2473 = vld [vmem:[%s10 + $0x18] sm:$0xff]
    %v2474 = vld [vmem:[%s10 + $0x20] sm:$0xff]
    %v2475 = vld [vmem:[%s10 + $0x28] sm:$0xff]
    %v2476 = vld [vmem:[%s10 + $0x30] sm:$0xff]
    %v2477 = vld [vmem:[%s10 + $0x38] sm:$0xff]
    %v2478 = vld [vmem:[%s11] sm:$0x1]
    %v2480 = vlaneseq
    %v2481 = vshrl.u32 %v2480, 7
    %v2482 = vsub.s32 0, %v2481
    %v2483 = vrot.slane %v2478, %v2482
    %2486 = vrot.lane.b32.xlu0 %v2469, 64
    %v2487 = vpop.permute.xlu0 %2486
    %v2488 = vsel %vm419, %v2487, 0
    %2490 = vmatprep.subr.mxu0 0.0
    %2491 = vmatpush1.msra.mxu0 0.0
    %2492 = vmatprep.subr.mxu0 0.0
    %2493 = vmatpush1.msra.mxu0 0.0
    %2494 = vmatprep.subr.mxu0 0.0
    %2495 = vmatpush1.msra.mxu0 0.0
    %2496 = vmatprep.subr.mxu0 0.0
    %2497 = vmatpush1.msra.mxu0 0.0
    %2498 = vmatprep.subr.mxu0 0.0
    %2499 = vmatpush1.msra.mxu0 0.0
    %2500 = vmatprep.subr.mxu0 0.0
    %2501 = vmatpush1.msra.mxu0 0.0
    %2502 = vmatprep.subr.mxu0 0.0
    %2503 = vmatpush1.msra.mxu0 0.0
    %2504 = vmatprep.subr.mxu0 0.0
    %2505 = vmatpush1.msra.mxu0 0.0
    %2506 = vmatprep.subr.mxu0 0.0
    %2507 = vmatpush1.msra.mxu0 %v2477
    %2508 = vmatprep.subr.mxu0 0.0
    %2509 = vmatpush1.msra.mxu0 %v2476
    %2510 = vmatprep.subr.mxu0 0.0
    %2511 = vmatpush1.msra.mxu0 %v2475
    %2512 = vmatprep.subr.mxu0 0.0
    %2513 = vmatpush1.msra.mxu0 %v2474
    %2514 = vmatprep.subr.mxu0 0.0
    %2515 = vmatpush1.msra.mxu0 %v2473
    %2516 = vmatprep.subr.mxu0 0.0
    %2517 = vmatpush1.msra.mxu0 %v2472
    %2518 = vmatprep.subr.mxu0 0.0
    %2519 = vmatpush1.msra.mxu0 %v2471
    %2520 = vmatprep.subr.mxu0 0.0
    %2521 = vmatpush1.msra.mxu0 %v2470
    %2522 = vmatprep.subr.mxu0 0.0
    %2523 = vmatpush2.msra.mxu0 0.0
    %2524 = vmatprep.subr.mxu0 0.0
    %2525 = vmatpush2.msra.mxu0 0.0
    %2526 = vmatprep.subr.mxu0 0.0
    %2527 = vmatpush2.msra.mxu0 0.0
    %2528 = vmatprep.subr.mxu0 0.0
    %2529 = vmatpush2.msra.mxu0 0.0
    %2530 = vmatprep.subr.mxu0 0.0
    %2531 = vmatpush2.msra.mxu0 0.0
    %2532 = vmatprep.subr.mxu0 0.0
    %2533 = vmatpush2.msra.mxu0 0.0
    %2534 = vmatprep.subr.mxu0 0.0
    %2535 = vmatpush2.msra.mxu0 0.0
    %2536 = vmatprep.subr.mxu0 0.0
    %2537 = vmatpush2.msra.mxu0 0.0
    %2538 = vmatprep.subr.mxu0 0.0
    %2539 = vmatpush2.msra.mxu0 0.0
    %2540 = vmatprep.subr.mxu0 0.0
    %2541 = vmatpush2.msra.mxu0 0.0
    %2542 = vmatprep.subr.mxu0 0.0
    %2543 = vmatpush2.msra.mxu0 0.0
    %2544 = vmatprep.subr.mxu0 0.0
    %2545 = vmatpush2.msra.mxu0 0.0
    %2546 = vmatprep.subr.mxu0 0.0
    %2547 = vmatpush2.msra.mxu0 0.0
    %2548 = vmatprep.subr.mxu0 0.0
    %2549 = vmatpush2.msra.mxu0 0.0
    %2550 = vmatprep.subr.mxu0 0.0
    %2551 = vmatpush2.msra.mxu0 0.0
    %2552 = vmatprep.subr.mxu0 0.0
    %2553 = vmatpush2.msra.mxu0 0.0
    %2554 = vmatprep.mubr.f32.mxu0 0.0
    %2555 = vmatmul.mubr.f32.gmra.mxu0 %v2488
    %v2556 = vpop.f32.mrf.mxu0
    %v2557 = vadd.f32 %v2483, %v2556
    %v2558 = vpop.f32.mrf.mxu0
    %2559 = vdwg.mxu0
    %vm2560 = vcmask 25600
    %2561 = vst.msk [vmem:[#allocation10] sm:$0x3] %vm2560, %v2557
    // Predicated region
    $region66: #{sentiment_forward.1} parent=1 // pred_check
      _
    $region67: #{sentiment_forward.1} parent=1 // pred_check_branch
      %2563 = sbr.rel (0) target = $region69
    $region68: #{sentiment_forward.1} parent=1 // pred_region
      %s2565 = ssub.s32 32, 32
      %2566 = vsyncadd [#allocation4], %s2565
      %s2568 = sshll.u32 [#allocation10], 4
      %s2569 = int_to_ptr.vmem [resolvable:$true] %s2568
      %2571 = dma.vmem_to_hbm [thread:$0]  %s2569, 32, %s12, [#allocation4]
    $region69: #{sentiment_forward.1} parent=1 // pred_fallthru
      _
    // Predicated region
    $region70: #{sentiment_forward.1} parent=1 // pred_check
      _
    $region71: #{sentiment_forward.1} parent=1 // pred_check_branch
      %2573 = sbr.rel (0) target = $region73
    $region72: #{sentiment_forward.1} parent=1 // pred_region
      %2574 = dma.done [#allocation4], 32
    $region73: #{sentiment_forward.1} parent=1 // pred_fallthru
      _
    %2575 = vsyncpa [#allocation3], 1
    %2576 = vsyncpa [#allocation6], 1
    %2577 = vsyncpa [#allocation9], 1
    %2578 = vsyncpa [#allocation4], 1

</llo_original>
